<compile_context>
chip_gen: v5e
topology: v5e:2x2
jax: 0.10.0
libtpu: 0.0.40
codegen_flags: <defaults>
</compile_context>

<pallas_src>
import functools
import math

import jax
import jax.numpy as jnp
from jax import lax
from jax.experimental import pallas as pl
from jax.experimental.pallas import tpu as pltpu


# ----------------------------------------------------------------------------
# kernel
# ----------------------------------------------------------------------------
def self_attention_kernel(x_ref, gmat_ref, gmatt_ref, gamma_ref, beta_ref,
                          wqkv_ref, wout_ref, bout_ref, kmask_ref,
                          o_ref, q_scr,
                          *, channels, num_groups, eps, q_tile, seq_len,
                          apply_kmask):
    Bt, Sp, Cp = x_ref.shape
    gc = channels // num_groups
    inv_cnt = 1.0 / float(seq_len * gc)          # real element count per group

    # ---- GroupNorm (f32 stats); one stacked group-reduce + one map-back ----
    xf = x_ref[...].astype(jnp.float32)                          # (Bt, Sp, Cp)
    ssum = jnp.sum(xf, axis=1)                                   # (Bt, Cp)
    sqsum = jnp.sum(xf * xf, axis=1)                             # (Bt, Cp)
    stats = jnp.concatenate([ssum, sqsum], axis=0)               # (2*Bt, Cp)
    gstats = jnp.dot(stats, gmat_ref[...],
                     preferred_element_type=jnp.float32) * inv_cnt   # (2*Bt, Gp)
    cstats = jnp.dot(gstats, gmatt_ref[...],
                     preferred_element_type=jnp.float32)             # (2*Bt, Cp)
    cmean = cstats[:Bt]                                          # (Bt, Cp)
    cvar = jnp.maximum(cstats[Bt:] - cmean * cmean, 0.0)         # clamp: no NaN
    crstd = lax.rsqrt(cvar + eps)
    xn = (xf - cmean[:, None, :]) * crstd[:, None, :]
    xn = xn * gamma_ref[...] + beta_ref[...]                     # (Bt, Sp, Cp) f32

    # ---- fused q/k/v projection: one bf16 MXU pass, f32 accumulate ----
    # (1/sqrt(C) is folded into the W_q columns in the wrapper)
    xn16 = xn.astype(jnp.bfloat16).reshape(Bt * Sp, Cp)
    qkv = jnp.dot(xn16, wqkv_ref[...], preferred_element_type=jnp.float32)
    qkv16 = qkv.astype(jnp.bfloat16).reshape(Bt, Sp, 3 * Cp)
    q_scr[...] = qkv16[:, :, :Cp]                 # per-tile q slices via pl.ds
    k16 = qkv16[:, :, Cp:2 * Cp]                  # (Bt, Sp, Cp) loop-invariant
    v16 = qkv16[:, :, 2 * Cp:]                    # (Bt, Sp, Cp) loop-invariant

    wout = wout_ref[...]                          # (Cp, Cp) bf16
    # hoisted broadcasts (JAX does not CSE broadcast_in_dim inside loops)
    bout_b = jnp.broadcast_to(bout_ref[...].reshape(1, 1, Cp), (Bt, q_tile, Cp))
    if apply_kmask:
        km_b = jnp.broadcast_to(kmask_ref[...].reshape(1, 1, Sp),
                                (Bt, q_tile, Sp))

    n_tiles = Sp // q_tile

    # ---- attention, tiled over query rows; never materialize full (Sp, Sp) ----
    def attn_tile(t, carry):
        r0 = pl.multiple_of(t * q_tile, q_tile)
        qt = q_scr[:, pl.ds(r0, q_tile), :]                            # (Bt,TQ,Cp) bf16
        # contract the channel axis of q and k -> no explicit k.T
        s = lax.dot_general(qt, k16, (((2,), (2,)), ((0,), (0,))),
                            preferred_element_type=jnp.float32)        # (Bt,TQ,Sp)
        if apply_kmask:
            s = s + km_b                                               # mask padded keys
        m = jnp.max(s, axis=-1, keepdims=True)
        p = jnp.exp(s - m)
        l = jnp.sum(p, axis=-1, keepdims=True)
        pv = lax.dot_general(p.astype(jnp.bfloat16), v16,
                             (((2,), (1,)), ((0,), (0,))),
                             preferred_element_type=jnp.float32)       # (Bt,TQ,Cp)
        # deferred softmax normalization (EUP reciprocal, ~free slot)
        o_t = pv * pl.reciprocal(l, approx=True)
        proj = jnp.dot(o_t.reshape(Bt * q_tile, Cp).astype(jnp.bfloat16), wout,
                       preferred_element_type=jnp.float32).reshape(Bt, q_tile, Cp)
        res = x_ref[:, pl.ds(r0, q_tile), :].astype(jnp.float32)
        o_ref[:, pl.ds(r0, q_tile), :] = (proj + bout_b + res).astype(o_ref.dtype)
        return carry

    lax.fori_loop(0, n_tiles, attn_tile, 0)


# ----------------------------------------------------------------------------
# wrapper helpers
# ----------------------------------------------------------------------------
def _round_up(x, m):
    return ((x + m - 1) // m) * m


def _vmem_capacity_bytes():
    try:
        return int(pltpu.get_tpu_info().vmem_capacity_bytes)
    except Exception:
        return 64 * 2 ** 20          # conservative fallback (v7x per-core VMEM)


def _estimate_vmem(bt, Sp, Cp, Gp, q_tile):
    """Rough per-grid-step working-set estimate (bytes)."""
    act = bt * Sp * Cp
    io_blocks = 2 * 2 * act * 4                       # in + out f32, double-buffered
    q_scratch = act * 2                               # q bf16 scratch ref
    kv_values = 2 * act * 2                           # k/v bf16 loop-invariant values
    f32_temps = 4 * act * 4                           # xf / xn / qkv peak temporaries
    consts = 2 * (2 * Cp * Gp * 4 + 4 * Cp * Cp * 2 + 6 * Cp * 4 + Sp * 4)
    score = bt * q_tile * (Sp * (4 + 2 + 4) + 3 * Cp * 4)
    return io_blocks + q_scratch + kv_values + f32_temps + consts + score


def _pick_tiles(B, Sp, Cp, Gp, vmem_cap):
    budget = int(0.70 * vmem_cap)
    # q_tile aligned to 128 (MXU rows); prefer 512/256 where they divide Sp
    q_cands = [q for q in (512, 256, 128) if q <= Sp and Sp % q == 0] or [Sp]
    # require >= 2 grid steps when B >= 2 so both v7x TCs get work
    # (costs ~0.35us extra per step on single-TC chips -- negligible)
    bt_cands = [bt for bt in range(B, 0, -1)
                if B % bt == 0 and (B == 1 or B // bt >= 2)]
    for bt in bt_cands:
        for q in q_cands:
            if _estimate_vmem(bt, Sp, Cp, Gp, q) <= budget:
                return bt, q
    return 1, q_cands[-1]


# ----------------------------------------------------------------------------
# wrapper
# ----------------------------------------------------------------------------
def self_attention(x_nchw, params, *, num_groups, n_head=1, eps=1e-5):
    assert n_head == 1  # TODO(synk): multi-head (per-head qkv chunking + sqrt(C/n_head)) not implemented
    B, C, H, W = x_nchw.shape
    assert C % num_groups == 0
    S = H * W
    Cp = _round_up(max(C, 128), 128)                 # lane-dense channel dim
    Gp = _round_up(max(num_groups, 128), 128)        # lane-dense group dim
    Sp = _round_up(max(S, 128), 128)                 # lane-dense key/seq dim
    gc = C // num_groups

    # NCHW -> (B, Sp, Cp), zero-padded seq + channels
    # TODO(synk): keep activations NHWC upstream to avoid this extra HBM round trip.
    x = jnp.transpose(x_nchw, (0, 2, 3, 1)).reshape(B, S, C)
    x_p = jnp.pad(x, ((0, 0), (0, Sp - S), (0, Cp - C)))

    # GroupNorm affine params
    gamma_p = jnp.pad(params["gamma"].reshape(1, C).astype(jnp.float32),
                      ((0, 0), (0, Cp - C)))
    beta_p = jnp.pad(params["beta"].reshape(1, C).astype(jnp.float32),
                     ((0, 0), (0, Cp - C)))

    # channel -> group one-hot (padded channels belong to no group)
    ch = jnp.arange(Cp)
    grp = ch // gc
    valid = ch < C
    gmat = ((grp[:, None] == jnp.arange(Gp)[None, :]) &
            valid[:, None]).astype(jnp.float32)      # (Cp, Gp)
    gmat_t = gmat.T                                  # (Gp, Cp)

    # fused qkv weight: columns [W_q^T / sqrt(C) | W_k^T | W_v^T], bf16
    w_qkv = params["w_qkv"].reshape(3 * C, C)
    scale = 1.0 / math.sqrt(C)                       # module scales by sqrt(channel)

    def pad_w(w):                                    # (C_out, C_in) -> (Cp_in, Cp_out) bf16
        return jnp.pad(w.T, ((0, Cp - C), (0, Cp - C))).astype(jnp.bfloat16)

    wqkv_p = jnp.concatenate([pad_w(w_qkv[0 * C:1 * C] * scale),
                              pad_w(w_qkv[1 * C:2 * C]),
                              pad_w(w_qkv[2 * C:3 * C])], axis=1)     # (Cp, 3*Cp)
    wout_p = pad_w(params["w_out"].reshape(C, C))
    bout_p = jnp.pad(params["b_out"].reshape(1, C).astype(jnp.float32),
                     ((0, 0), (0, Cp - C)))

    # additive key mask: 0 for real keys, -1e30 for padded seq positions
    kmask = jnp.where(jnp.arange(Sp) < S, 0.0, -1e30).astype(jnp.float32).reshape(1, Sp)
    apply_kmask = (Sp != S)

    # generation-aware tile / VMEM sizing
    vmem_cap = _vmem_capacity_bytes()
    Bt, q_tile = _pick_tiles(B, Sp, Cp, Gp, vmem_cap)
    est = _estimate_vmem(Bt, Sp, Cp, Gp, q_tile)
    vmem_limit = int(min(int(vmem_cap * 0.92), max(32 * 2 ** 20, int(est * 1.4))))

    kernel = functools.partial(self_attention_kernel, channels=C,
                               num_groups=num_groups, eps=eps, q_tile=q_tile,
                               seq_len=S, apply_kmask=apply_kmask)

    def run(single_buffer_consts):
        def const_spec(shape):
            idx = lambda b: (0,) * len(shape)
            if single_buffer_consts:
                # grid-invariant operands: no need to double-buffer
                return pl.BlockSpec(shape, idx, pipeline_mode=pl.Buffered(1))
            return pl.BlockSpec(shape, idx)

        grid_spec = pltpu.PrefetchScalarGridSpec(
            num_scalar_prefetch=0,
            grid=(B // Bt,),
            in_specs=[
                pl.BlockSpec((Bt, Sp, Cp), lambda b: (b, 0, 0)),   # x
                const_spec((Cp, Gp)),                              # gmat
                const_spec((Gp, Cp)),                              # gmat^T
                const_spec((1, Cp)),                               # gamma
                const_spec((1, Cp)),                               # beta
                const_spec((Cp, 3 * Cp)),                          # fused W_qkv^T
                const_spec((Cp, Cp)),                              # W_out^T
                const_spec((1, Cp)),                               # b_out
                const_spec((1, Sp)),                               # key mask
            ],
            out_specs=pl.BlockSpec((Bt, Sp, Cp), lambda b: (b, 0, 0)),
            scratch_shapes=[pltpu.VMEM((Bt, Sp, Cp), jnp.bfloat16)],   # q staging
        )
        return pl.pallas_call(
            kernel,
            out_shape=jax.ShapeDtypeStruct((B, Sp, Cp), x_p.dtype),
            grid_spec=grid_spec,
            compiler_params=pltpu.CompilerParams(
                dimension_semantics=("parallel",),
                vmem_limit_bytes=vmem_limit,
            ),
        )(x_p, gmat, gmat_t, gamma_p, beta_p, wqkv_p, wout_p, bout_p, kmask)

    try:
        out = run(True)          # single-buffer the constants
    except Exception:
        out = run(False)         # fallback if pipeline_mode=Buffered(1) unsupported

    out = out[:, :S, :C]
    return jnp.transpose(out.reshape(B, H, W, C), (0, 3, 1, 2))


# ----------------------------------------------------------------------------
# pure-JAX reference (mirrors the PyTorch forward)
# ----------------------------------------------------------------------------
def reference(x_nchw, params, *, num_groups, eps=1e-5):
    B, C, H, W = x_nchw.shape
    xr = x_nchw.reshape(B, num_groups, C // num_groups, H, W)
    mean = jnp.mean(xr, axis=(2, 3, 4), keepdims=True)
    var = jnp.var(xr, axis=(2, 3, 4), keepdims=True)
    xn = ((xr - mean) / jnp.sqrt(var + eps)).reshape(B, C, H, W)
    xn = xn * params["gamma"].reshape(1, C, 1, 1) + params["beta"].reshape(1, C, 1, 1)
    w_qkv = params["w_qkv"].reshape(3 * C, C)
    qkv = jnp.einsum('oc,bchw->bohw', w_qkv, xn)
    q, k, v = qkv[:, :C], qkv[:, C:2 * C], qkv[:, 2 * C:]
    attn = jnp.einsum('bchw,bcyx->bhwyx', q, k) / math.sqrt(C)
    attn = jax.nn.softmax(attn.reshape(B, H, W, H * W), -1).reshape(B, H, W, H, W)
    out = jnp.einsum('bhwyx,bcyx->bchw', attn, v)
    w_out = params["w_out"].reshape(C, C)
    out = jnp.einsum('oc,bchw->bohw', w_out, out) + params["b_out"].reshape(1, C, 1, 1)
    return out + x_nchw


if __name__ == "__main__":
    B, C, H, W = 2, 32, 8, 8
    NUM_GROUPS = 4  # must divide channels

    key = jax.random.PRNGKey(0)
    kx, kq, ko, kb = jax.random.split(key, 4)
    x = jax.random.normal(kx, (B, C, H, W), dtype=jnp.float32)
    params = {
        "gamma": jnp.ones((C,), jnp.float32),                       # GroupNorm weight
        "beta": jnp.zeros((C,), jnp.float32),                       # GroupNorm bias
        "w_qkv": 0.05 * jax.random.normal(kq, (3 * C, C, 1, 1), jnp.float32),
        "w_out": 0.05 * jax.random.normal(ko, (C, C, 1, 1), jnp.float32),
        "b_out": 0.05 * jax.random.normal(kb, (C,), jnp.float32),
    }

    out = self_attention(x, params, num_groups=NUM_GROUPS)
    out = jax.block_until_ready(out)

    ref = reference(x, params, num_groups=NUM_GROUPS)
    assert out.shape == (B, C, H, W)
    # bf16 MXU inputs (f32 accumulation) -> compare at bf16-appropriate tolerance
    assert jnp.allclose(out, ref, rtol=1e-2, atol=1e-2), "mismatch vs reference"
    print("KERNEL_OK")
</pallas_src>

<mosaic_0001>
module attributes {stable_mosaic.version = 11 : i64} {
  func.func @self_attention_kernel(%arg0: i32, %arg1: memref<1x128x128xf32, #tpu.memory_space<vmem>>, %arg2: memref<128x128xf32, #tpu.memory_space<vmem>>, %arg3: memref<128x128xf32, #tpu.memory_space<vmem>>, %arg4: memref<1x128xf32, #tpu.memory_space<vmem>>, %arg5: memref<1x128xf32, #tpu.memory_space<vmem>>, %arg6: memref<128x384xbf16, #tpu.memory_space<vmem>>, %arg7: memref<128x128xbf16, #tpu.memory_space<vmem>>, %arg8: memref<1x128xf32, #tpu.memory_space<vmem>>, %arg9: memref<1x128xf32, #tpu.memory_space<vmem>>, %arg10: memref<1x128x128xf32, #tpu.memory_space<vmem>>, %arg11: memref<1x128x128xbf16, #tpu.memory_space<vmem>>) attributes {dimension_semantics = [#tpu.dimension_semantics<parallel>], iteration_bounds = array<i64: 2>, scalar_prefetch = 0 : i64, scratch_operands = 1 : i64, tpu.core_type = #tpu.core_type<tc>, window_params = [{transform_indices = @transform_0, window_bounds = array<i64: 1, 128, 128>}, {pipeline_mode = #tpu.pipeline_mode<synchronous>, transform_indices = @transform_1, window_bounds = array<i64: 128, 128>}, {pipeline_mode = #tpu.pipeline_mode<synchronous>, transform_indices = @transform_2, window_bounds = array<i64: 128, 128>}, {pipeline_mode = #tpu.pipeline_mode<synchronous>, transform_indices = @transform_3, window_bounds = array<i64: 1, 128>}, {pipeline_mode = #tpu.pipeline_mode<synchronous>, transform_indices = @transform_4, window_bounds = array<i64: 1, 128>}, {pipeline_mode = #tpu.pipeline_mode<synchronous>, transform_indices = @transform_5, window_bounds = array<i64: 128, 384>}, {pipeline_mode = #tpu.pipeline_mode<synchronous>, transform_indices = @transform_6, window_bounds = array<i64: 128, 128>}, {pipeline_mode = #tpu.pipeline_mode<synchronous>, transform_indices = @transform_7, window_bounds = array<i64: 1, 128>}, {pipeline_mode = #tpu.pipeline_mode<synchronous>, transform_indices = @transform_8, window_bounds = array<i64: 1, 128>}, {transform_indices = @transform_9, window_bounds = array<i64: 1, 128, 128>}]} {
    %c0 = arith.constant 0 : index
    %c0_0 = arith.constant 0 : index
    %c0_1 = arith.constant 0 : index
    %0 = vector.load %arg1[%c0, %c0_0, %c0_1] : memref<1x128x128xf32, #tpu.memory_space<vmem>>, vector<1x128x128xf32>
    %cst = arith.constant dense<0.000000e+00> : vector<1x128xf32>
    %1 = vector.multi_reduction <add>, %0, %cst [1] : vector<1x128x128xf32> to vector<1x128xf32>
    %2 = arith.mulf %0, %0 : vector<1x128x128xf32>
    %cst_2 = arith.constant dense<0.000000e+00> : vector<1x128xf32>
    %3 = vector.multi_reduction <add>, %2, %cst_2 [1] : vector<1x128x128xf32> to vector<1x128xf32>
    %4 = tpu.concatenate %1, %3 in 0 : vector<1x128xf32>, vector<1x128xf32> -> vector<2x128xf32>
    %c0_3 = arith.constant 0 : index
    %c0_4 = arith.constant 0 : index
    %5 = vector.load %arg2[%c0_3, %c0_4] : memref<128x128xf32, #tpu.memory_space<vmem>>, vector<128x128xf32>
    %cst_5 = arith.constant dense<0.000000e+00> : vector<2x128xf32>
    %6 = tpu.matmul %4, %5, %cst_5 {dimension_numbers = #tpu.dot_dimension_numbers<[1], [0], [0], [1], [0, 0, 1, 1], [], []>} : vector<2x128xf32>, vector<128x128xf32>, vector<2x128xf32> -> vector<2x128xf32>
    %cst_6 = arith.constant 0.001953125 : f32
    %7 = vector.broadcast %cst_6 : f32 to vector<2x128xf32>
    %8 = arith.mulf %6, %7 : vector<2x128xf32>
    %c0_7 = arith.constant 0 : index
    %c0_8 = arith.constant 0 : index
    %9 = vector.load %arg3[%c0_7, %c0_8] : memref<128x128xf32, #tpu.memory_space<vmem>>, vector<128x128xf32>
    %cst_9 = arith.constant dense<0.000000e+00> : vector<2x128xf32>
    %10 = tpu.matmul %8, %9, %cst_9 {dimension_numbers = #tpu.dot_dimension_numbers<[1], [0], [0], [1], [0, 0, 1, 1], [], []>} : vector<2x128xf32>, vector<128x128xf32>, vector<2x128xf32> -> vector<2x128xf32>
    %11 = vector.extract_strided_slice %10 {offsets = [0, 0], sizes = [1, 128], strides = [1, 1]} : vector<2x128xf32> to vector<1x128xf32>
    %12 = vector.extract_strided_slice %10 {offsets = [1, 0], sizes = [1, 128], strides = [1, 1]} : vector<2x128xf32> to vector<1x128xf32>
    %13 = arith.mulf %11, %11 : vector<1x128xf32>
    %14 = arith.subf %12, %13 : vector<1x128xf32>
    %cst_10 = arith.constant 0.000000e+00 : f32
    %15 = vector.broadcast %cst_10 : f32 to vector<1x128xf32>
    %16 = arith.maximumf %14, %15 : vector<1x128xf32>
    %cst_11 = arith.constant 9.99999974E-6 : f32
    %17 = vector.broadcast %cst_11 : f32 to vector<1x128xf32>
    %18 = arith.addf %16, %17 : vector<1x128xf32>
    %19 = math.rsqrt %18 : vector<1x128xf32>
    %20 = vector.shape_cast %11 : vector<1x128xf32> to vector<1x1x128xf32>
    %21 = vector.broadcast %20 : vector<1x1x128xf32> to vector<1x128x128xf32>
    %22 = arith.subf %0, %21 : vector<1x128x128xf32>
    %23 = vector.shape_cast %19 : vector<1x128xf32> to vector<1x1x128xf32>
    %24 = vector.broadcast %23 : vector<1x1x128xf32> to vector<1x128x128xf32>
    %25 = arith.mulf %22, %24 : vector<1x128x128xf32>
    %c0_12 = arith.constant 0 : index
    %c0_13 = arith.constant 0 : index
    %26 = vector.load %arg4[%c0_12, %c0_13] : memref<1x128xf32, #tpu.memory_space<vmem>>, vector<1x128xf32>
    %27 = vector.shape_cast %26 : vector<1x128xf32> to vector<1x1x128xf32>
    %28 = vector.broadcast %27 : vector<1x1x128xf32> to vector<1x128x128xf32>
    %29 = arith.mulf %25, %28 : vector<1x128x128xf32>
    %c0_14 = arith.constant 0 : index
    %c0_15 = arith.constant 0 : index
    %30 = vector.load %arg5[%c0_14, %c0_15] : memref<1x128xf32, #tpu.memory_space<vmem>>, vector<1x128xf32>
    %31 = vector.shape_cast %30 : vector<1x128xf32> to vector<1x1x128xf32>
    %32 = vector.broadcast %31 : vector<1x1x128xf32> to vector<1x128x128xf32>
    %33 = arith.addf %29, %32 : vector<1x128x128xf32>
    %34 = arith.truncf %33 : vector<1x128x128xf32> to vector<1x128x128xbf16>
    %35 = vector.shape_cast %34 : vector<1x128x128xbf16> to vector<128x128xbf16>
    %c0_16 = arith.constant 0 : index
    %c0_17 = arith.constant 0 : index
    %36 = vector.load %arg6[%c0_16, %c0_17] : memref<128x384xbf16, #tpu.memory_space<vmem>>, vector<128x384xbf16>
    %cst_18 = arith.constant dense<0.000000e+00> : vector<128x384xf32>
    %37 = tpu.matmul %35, %36, %cst_18 {dimension_numbers = #tpu.dot_dimension_numbers<[1], [0], [0], [1], [0, 0, 1, 1], [], []>} : vector<128x128xbf16>, vector<128x384xbf16>, vector<128x384xf32> -> vector<128x384xf32>
    %38 = arith.truncf %37 : vector<128x384xf32> to vector<128x384xbf16>
    %39 = vector.shape_cast %38 : vector<128x384xbf16> to vector<1x128x384xbf16>
    %40 = vector.extract_strided_slice %39 {offsets = [0, 0, 0], sizes = [1, 128, 128], strides = [1, 1, 1]} : vector<1x128x384xbf16> to vector<1x128x128xbf16>
    %c0_19 = arith.constant 0 : index
    %c0_20 = arith.constant 0 : index
    %c0_21 = arith.constant 0 : index
    %41 = vector.load %arg11[%c0_19, %c0_20, %c0_21] : memref<1x128x128xbf16, #tpu.memory_space<vmem>>, vector<1x128x128xbf16>
    tpu.vector_store %arg11[%c0_19, %c0_20, %c0_21], %40 {strides = array<i32>} : memref<1x128x128xbf16, #tpu.memory_space<vmem>>, vector<1x128x128xbf16>,
    %42 = vector.extract_strided_slice %39 {offsets = [0, 0, 128], sizes = [1, 128, 128], strides = [1, 1, 1]} : vector<1x128x384xbf16> to vector<1x128x128xbf16>
    %43 = vector.extract_strided_slice %39 {offsets = [0, 0, 256], sizes = [1, 128, 128], strides = [1, 1, 1]} : vector<1x128x384xbf16> to vector<1x128x128xbf16>
    %c0_22 = arith.constant 0 : index
    %c0_23 = arith.constant 0 : index
    %44 = vector.load %arg7[%c0_22, %c0_23] : memref<128x128xbf16, #tpu.memory_space<vmem>>, vector<128x128xbf16>
    %c0_24 = arith.constant 0 : index
    %c0_25 = arith.constant 0 : index
    %45 = vector.load %arg8[%c0_24, %c0_25] : memref<1x128xf32, #tpu.memory_space<vmem>>, vector<1x128xf32>
    %46 = vector.shape_cast %45 : vector<1x128xf32> to vector<1x1x128xf32>
    %47 = vector.shape_cast %46 : vector<1x1x128xf32> to vector<1x1x128xf32>
    %48 = vector.broadcast %47 : vector<1x1x128xf32> to vector<1x128x128xf32>
    %c0_26 = arith.constant 0 : index
    %c0_27 = arith.constant 0 : index
    %49 = vector.load %arg9[%c0_26, %c0_27] : memref<1x128xf32, #tpu.memory_space<vmem>>, vector<1x128xf32>
    %50 = vector.shape_cast %49 : vector<1x128xf32> to vector<1x1x128xf32>
    %51 = vector.shape_cast %50 : vector<1x1x128xf32> to vector<1x1x128xf32>
    %52 = vector.broadcast %51 : vector<1x1x128xf32> to vector<1x128x128xf32>
    %c0_i32 = arith.constant 0 : i32
    %c128_i32 = arith.constant 128 : i32
    %53 = arith.muli %c0_i32, %c128_i32 : i32
    %54 = tpu.assume_multiple %53, 128 : i32
    %c0_28 = arith.constant 0 : index
    %55 = arith.index_cast %54 : i32 to index
    %c0_29 = arith.constant 0 : index
    %56 = vector.load %arg11[%c0_28, %55, %c0_29] : memref<1x128x128xbf16, #tpu.memory_space<vmem>>, vector<1x128x128xbf16>
    %cst_30 = arith.constant dense<0.000000e+00> : vector<1x128x128xf32>
    %57 = tpu.matmul %56, %42, %cst_30 {dimension_numbers = #tpu.dot_dimension_numbers<[2], [2], [1], [1], [0, 0, 0, 1, 1, 1], [0], [0]>} : vector<1x128x128xbf16>, vector<1x128x128xbf16>, vector<1x128x128xf32> -> vector<1x128x128xf32>
    %58 = arith.addf %57, %52 : vector<1x128x128xf32>
    %cst_31 = arith.constant dense<0xFF800000> : vector<1x128xf32>
    %59 = vector.multi_reduction <maximumf>, %58, %cst_31 [2] : vector<1x128x128xf32> to vector<1x128xf32>
    %60 = vector.shape_cast %59 : vector<1x128xf32> to vector<1x128x1xf32>
    %61 = vector.broadcast %60 : vector<1x128x1xf32> to vector<1x128x128xf32>
    %62 = arith.subf %58, %61 : vector<1x128x128xf32>
    %63 = math.exp %62 : vector<1x128x128xf32>
    %cst_32 = arith.constant dense<0.000000e+00> : vector<1x128xf32>
    %64 = vector.multi_reduction <add>, %63, %cst_32 [2] : vector<1x128x128xf32> to vector<1x128xf32>
    %65 = vector.shape_cast %64 : vector<1x128xf32> to vector<1x128x1xf32>
    %66 = arith.truncf %63 : vector<1x128x128xf32> to vector<1x128x128xbf16>
    %cst_33 = arith.constant dense<0.000000e+00> : vector<1x128x128xf32>
    %67 = tpu.matmul %66, %43, %cst_33 {dimension_numbers = #tpu.dot_dimension_numbers<[2], [1], [1], [2], [0, 0, 0, 1, 1, 2], [0], [0]>} : vector<1x128x128xbf16>, vector<1x128x128xbf16>, vector<1x128x128xf32> -> vector<1x128x128xf32>
    %68 = tpu.reciprocal %65 {approx = true} : vector<1x128x1xf32> -> vector<1x128x1xf32>
    %69 = vector.broadcast %68 : vector<1x128x1xf32> to vector<1x128x128xf32>
    %70 = arith.mulf %67, %69 : vector<1x128x128xf32>
    %71 = vector.shape_cast %70 : vector<1x128x128xf32> to vector<128x128xf32>
    %72 = arith.truncf %71 : vector<128x128xf32> to vector<128x128xbf16>
    %cst_34 = arith.constant dense<0.000000e+00> : vector<128x128xf32>
    %73 = tpu.matmul %72, %44, %cst_34 {dimension_numbers = #tpu.dot_dimension_numbers<[1], [0], [0], [1], [0, 0, 1, 1], [], []>} : vector<128x128xbf16>, vector<128x128xbf16>, vector<128x128xf32> -> vector<128x128xf32>
    %74 = vector.shape_cast %73 : vector<128x128xf32> to vector<1x128x128xf32>
    %c0_35 = arith.constant 0 : index
    %75 = arith.index_cast %54 : i32 to index
    %c0_36 = arith.constant 0 : index
    %76 = vector.load %arg1[%c0_35, %75, %c0_36] : memref<1x128x128xf32, #tpu.memory_space<vmem>>, vector<1x128x128xf32>
    %77 = arith.addf %74, %48 : vector<1x128x128xf32>
    %78 = arith.addf %77, %76 : vector<1x128x128xf32>
    %c0_37 = arith.constant 0 : index
    %79 = arith.index_cast %54 : i32 to index
    %c0_38 = arith.constant 0 : index
    %80 = vector.load %arg10[%c0_37, %79, %c0_38] : memref<1x128x128xf32, #tpu.memory_space<vmem>>, vector<1x128x128xf32>
    tpu.vector_store %arg10[%c0_37, %79, %c0_38], %78 {strides = array<i32>} : memref<1x128x128xf32, #tpu.memory_space<vmem>>, vector<1x128x128xf32>,
    %c1_i32 = arith.constant 1 : i32
    return
  }
  func.func @transform_0(%arg0: i32) -> (i32, i32, i32) {
    %c0_i32 = arith.constant 0 : i32
    %c0_i32_0 = arith.constant 0 : i32
    %c0_i32_1 = arith.constant 0 : i32
    return %arg0, %c0_i32, %c0_i32_0 : i32, i32, i32
  }
  func.func @transform_1(%arg0: i32) -> (i32, i32) {
    %c0_i32 = arith.constant 0 : i32
    %c0_i32_0 = arith.constant 0 : i32
    %c0_i32_1 = arith.constant 0 : i32
    return %c0_i32, %c0_i32_0 : i32, i32
  }
  func.func @transform_2(%arg0: i32) -> (i32, i32) {
    %c0_i32 = arith.constant 0 : i32
    %c0_i32_0 = arith.constant 0 : i32
    %c0_i32_1 = arith.constant 0 : i32
    return %c0_i32, %c0_i32_0 : i32, i32
  }
  func.func @transform_3(%arg0: i32) -> (i32, i32) {
    %c0_i32 = arith.constant 0 : i32
    %c0_i32_0 = arith.constant 0 : i32
    %c0_i32_1 = arith.constant 0 : i32
    return %c0_i32, %c0_i32_0 : i32, i32
  }
  func.func @transform_4(%arg0: i32) -> (i32, i32) {
    %c0_i32 = arith.constant 0 : i32
    %c0_i32_0 = arith.constant 0 : i32
    %c0_i32_1 = arith.constant 0 : i32
    return %c0_i32, %c0_i32_0 : i32, i32
  }
  func.func @transform_5(%arg0: i32) -> (i32, i32) {
    %c0_i32 = arith.constant 0 : i32
    %c0_i32_0 = arith.constant 0 : i32
    %c0_i32_1 = arith.constant 0 : i32
    return %c0_i32, %c0_i32_0 : i32, i32
  }
  func.func @transform_6(%arg0: i32) -> (i32, i32) {
    %c0_i32 = arith.constant 0 : i32
    %c0_i32_0 = arith.constant 0 : i32
    %c0_i32_1 = arith.constant 0 : i32
    return %c0_i32, %c0_i32_0 : i32, i32
  }
  func.func @transform_7(%arg0: i32) -> (i32, i32) {
    %c0_i32 = arith.constant 0 : i32
    %c0_i32_0 = arith.constant 0 : i32
    %c0_i32_1 = arith.constant 0 : i32
    return %c0_i32, %c0_i32_0 : i32, i32
  }
  func.func @transform_8(%arg0: i32) -> (i32, i32) {
    %c0_i32 = arith.constant 0 : i32
    %c0_i32_0 = arith.constant 0 : i32
    %c0_i32_1 = arith.constant 0 : i32
    return %c0_i32, %c0_i32_0 : i32, i32
  }
  func.func @transform_9(%arg0: i32) -> (i32, i32, i32) {
    %c0_i32 = arith.constant 0 : i32
    %c0_i32_0 = arith.constant 0 : i32
    %c0_i32_1 = arith.constant 0 : i32
    return %arg0, %c0_i32, %c0_i32_0 : i32, i32, i32
  }
}

module attributes {stable_mosaic.version = 11 : i64} {
  func.func @self_attention_kernel(%arg0: i32, %arg1: memref<1x128x128xf32, #tpu.memory_space<vmem>>, %arg2: memref<128x128xf32, #tpu.memory_space<vmem>>, %arg3: memref<128x128xf32, #tpu.memory_space<vmem>>, %arg4: memref<1x128xf32, #tpu.memory_space<vmem>>, %arg5: memref<1x128xf32, #tpu.memory_space<vmem>>, %arg6: memref<128x384xbf16, #tpu.memory_space<vmem>>, %arg7: memref<128x128xbf16, #tpu.memory_space<vmem>>, %arg8: memref<1x128xf32, #tpu.memory_space<vmem>>, %arg9: memref<1x128xf32, #tpu.memory_space<vmem>>, %arg10: memref<1x128x128xf32, #tpu.memory_space<vmem>>, %arg11: memref<1x128x128xbf16, #tpu.memory_space<vmem>>) attributes {dimension_semantics = [#tpu.dimension_semantics<parallel>], iteration_bounds = array<i64: 2>, scalar_prefetch = 0 : i64, scratch_operands = 1 : i64, tpu.core_type = #tpu.core_type<tc>, window_params = [{transform_indices = @transform_0, window_bounds = array<i64: 1, 128, 128>}, {pipeline_mode = #tpu.pipeline_mode<synchronous>, transform_indices = @transform_1, window_bounds = array<i64: 128, 128>}, {pipeline_mode = #tpu.pipeline_mode<synchronous>, transform_indices = @transform_2, window_bounds = array<i64: 128, 128>}, {pipeline_mode = #tpu.pipeline_mode<synchronous>, transform_indices = @transform_3, window_bounds = array<i64: 1, 128>}, {pipeline_mode = #tpu.pipeline_mode<synchronous>, transform_indices = @transform_4, window_bounds = array<i64: 1, 128>}, {pipeline_mode = #tpu.pipeline_mode<synchronous>, transform_indices = @transform_5, window_bounds = array<i64: 128, 384>}, {pipeline_mode = #tpu.pipeline_mode<synchronous>, transform_indices = @transform_6, window_bounds = array<i64: 128, 128>}, {pipeline_mode = #tpu.pipeline_mode<synchronous>, transform_indices = @transform_7, window_bounds = array<i64: 1, 128>}, {pipeline_mode = #tpu.pipeline_mode<synchronous>, transform_indices = @transform_8, window_bounds = array<i64: 1, 128>}, {transform_indices = @transform_9, window_bounds = array<i64: 1, 128, 128>}]} {
    %c0 = arith.constant 0 : index
    %c0_0 = arith.constant 0 : index
    %c0_1 = arith.constant 0 : index
    %0 = vector.load %arg1[%c0, %c0_0, %c0_1] : memref<1x128x128xf32, #tpu.memory_space<vmem>>, vector<1x128x128xf32>
    %cst = arith.constant dense<0.000000e+00> : vector<1x128xf32>
    %1 = vector.multi_reduction <add>, %0, %cst [1] : vector<1x128x128xf32> to vector<1x128xf32>
    %2 = arith.mulf %0, %0 : vector<1x128x128xf32>
    %cst_2 = arith.constant dense<0.000000e+00> : vector<1x128xf32>
    %3 = vector.multi_reduction <add>, %2, %cst_2 [1] : vector<1x128x128xf32> to vector<1x128xf32>
    %4 = tpu.concatenate %1, %3 in 0 : vector<1x128xf32>, vector<1x128xf32> -> vector<2x128xf32>
    %c0_3 = arith.constant 0 : index
    %c0_4 = arith.constant 0 : index
    %5 = vector.load %arg2[%c0_3, %c0_4] : memref<128x128xf32, #tpu.memory_space<vmem>>, vector<128x128xf32>
    %cst_5 = arith.constant dense<0.000000e+00> : vector<2x128xf32>
    %6 = tpu.matmul %4, %5, %cst_5 {dimension_numbers = #tpu.dot_dimension_numbers<[1], [0], [0], [1], [0, 0, 1, 1], [], []>} : vector<2x128xf32>, vector<128x128xf32>, vector<2x128xf32> -> vector<2x128xf32>
    %cst_6 = arith.constant 0.001953125 : f32
    %7 = vector.broadcast %cst_6 : f32 to vector<2x128xf32>
    %8 = arith.mulf %6, %7 : vector<2x128xf32>
    %c0_7 = arith.constant 0 : index
    %c0_8 = arith.constant 0 : index
    %9 = vector.load %arg3[%c0_7, %c0_8] : memref<128x128xf32, #tpu.memory_space<vmem>>, vector<128x128xf32>
    %cst_9 = arith.constant dense<0.000000e+00> : vector<2x128xf32>
    %10 = tpu.matmul %8, %9, %cst_9 {dimension_numbers = #tpu.dot_dimension_numbers<[1], [0], [0], [1], [0, 0, 1, 1], [], []>} : vector<2x128xf32>, vector<128x128xf32>, vector<2x128xf32> -> vector<2x128xf32>
    %11 = vector.extract_strided_slice %10 {offsets = [0, 0], sizes = [1, 128], strides = [1, 1]} : vector<2x128xf32> to vector<1x128xf32>
    %12 = vector.extract_strided_slice %10 {offsets = [1, 0], sizes = [1, 128], strides = [1, 1]} : vector<2x128xf32> to vector<1x128xf32>
    %13 = arith.mulf %11, %11 : vector<1x128xf32>
    %14 = arith.subf %12, %13 : vector<1x128xf32>
    %cst_10 = arith.constant 0.000000e+00 : f32
    %15 = vector.broadcast %cst_10 : f32 to vector<1x128xf32>
    %16 = arith.maximumf %14, %15 : vector<1x128xf32>
    %cst_11 = arith.constant 9.99999974E-6 : f32
    %17 = vector.broadcast %cst_11 : f32 to vector<1x128xf32>
    %18 = arith.addf %16, %17 : vector<1x128xf32>
    %19 = math.rsqrt %18 : vector<1x128xf32>
    %20 = vector.shape_cast %11 : vector<1x128xf32> to vector<1x1x128xf32>
    %21 = vector.broadcast %20 : vector<1x1x128xf32> to vector<1x128x128xf32>
    %22 = arith.subf %0, %21 : vector<1x128x128xf32>
    %23 = vector.shape_cast %19 : vector<1x128xf32> to vector<1x1x128xf32>
    %24 = vector.broadcast %23 : vector<1x1x128xf32> to vector<1x128x128xf32>
    %25 = arith.mulf %22, %24 : vector<1x128x128xf32>
    %c0_12 = arith.constant 0 : index
    %c0_13 = arith.constant 0 : index
    %26 = vector.load %arg4[%c0_12, %c0_13] : memref<1x128xf32, #tpu.memory_space<vmem>>, vector<1x128xf32>
    %27 = vector.shape_cast %26 : vector<1x128xf32> to vector<1x1x128xf32>
    %28 = vector.broadcast %27 : vector<1x1x128xf32> to vector<1x128x128xf32>
    %29 = arith.mulf %25, %28 : vector<1x128x128xf32>
    %c0_14 = arith.constant 0 : index
    %c0_15 = arith.constant 0 : index
    %30 = vector.load %arg5[%c0_14, %c0_15] : memref<1x128xf32, #tpu.memory_space<vmem>>, vector<1x128xf32>
    %31 = vector.shape_cast %30 : vector<1x128xf32> to vector<1x1x128xf32>
    %32 = vector.broadcast %31 : vector<1x1x128xf32> to vector<1x128x128xf32>
    %33 = arith.addf %29, %32 : vector<1x128x128xf32>
    %34 = arith.truncf %33 : vector<1x128x128xf32> to vector<1x128x128xbf16>
    %35 = vector.shape_cast %34 : vector<1x128x128xbf16> to vector<128x128xbf16>
    %c0_16 = arith.constant 0 : index
    %c0_17 = arith.constant 0 : index
    %36 = vector.load %arg6[%c0_16, %c0_17] : memref<128x384xbf16, #tpu.memory_space<vmem>>, vector<128x384xbf16>
    %cst_18 = arith.constant dense<0.000000e+00> : vector<128x384xf32>
    %37 = tpu.matmul %35, %36, %cst_18 {dimension_numbers = #tpu.dot_dimension_numbers<[1], [0], [0], [1], [0, 0, 1, 1], [], []>} : vector<128x128xbf16>, vector<128x384xbf16>, vector<128x384xf32> -> vector<128x384xf32>
    %38 = arith.truncf %37 : vector<128x384xf32> to vector<128x384xbf16>
    %39 = vector.shape_cast %38 : vector<128x384xbf16> to vector<1x128x384xbf16>
    %40 = vector.extract_strided_slice %39 {offsets = [0, 0, 0], sizes = [1, 128, 128], strides = [1, 1, 1]} : vector<1x128x384xbf16> to vector<1x128x128xbf16>
    %c0_19 = arith.constant 0 : index
    %c0_20 = arith.constant 0 : index
    %c0_21 = arith.constant 0 : index
    %41 = vector.load %arg11[%c0_19, %c0_20, %c0_21] : memref<1x128x128xbf16, #tpu.memory_space<vmem>>, vector<1x128x128xbf16>
    tpu.vector_store %arg11[%c0_19, %c0_20, %c0_21], %40 {strides = array<i32>} : memref<1x128x128xbf16, #tpu.memory_space<vmem>>, vector<1x128x128xbf16>,
    %42 = vector.extract_strided_slice %39 {offsets = [0, 0, 128], sizes = [1, 128, 128], strides = [1, 1, 1]} : vector<1x128x384xbf16> to vector<1x128x128xbf16>
    %43 = vector.extract_strided_slice %39 {offsets = [0, 0, 256], sizes = [1, 128, 128], strides = [1, 1, 1]} : vector<1x128x384xbf16> to vector<1x128x128xbf16>
    %c0_22 = arith.constant 0 : index
    %c0_23 = arith.constant 0 : index
    %44 = vector.load %arg7[%c0_22, %c0_23] : memref<128x128xbf16, #tpu.memory_space<vmem>>, vector<128x128xbf16>
    %c0_24 = arith.constant 0 : index
    %c0_25 = arith.constant 0 : index
    %45 = vector.load %arg8[%c0_24, %c0_25] : memref<1x128xf32, #tpu.memory_space<vmem>>, vector<1x128xf32>
    %46 = vector.shape_cast %45 : vector<1x128xf32> to vector<1x1x128xf32>
    %47 = vector.shape_cast %46 : vector<1x1x128xf32> to vector<1x1x128xf32>
    %48 = vector.broadcast %47 : vector<1x1x128xf32> to vector<1x128x128xf32>
    %c0_26 = arith.constant 0 : index
    %c0_27 = arith.constant 0 : index
    %49 = vector.load %arg9[%c0_26, %c0_27] : memref<1x128xf32, #tpu.memory_space<vmem>>, vector<1x128xf32>
    %50 = vector.shape_cast %49 : vector<1x128xf32> to vector<1x1x128xf32>
    %51 = vector.shape_cast %50 : vector<1x1x128xf32> to vector<1x1x128xf32>
    %52 = vector.broadcast %51 : vector<1x1x128xf32> to vector<1x128x128xf32>
    %c0_i32 = arith.constant 0 : i32
    %c128_i32 = arith.constant 128 : i32
    %53 = arith.muli %c0_i32, %c128_i32 : i32
    %54 = tpu.assume_multiple %53, 128 : i32
    %c0_28 = arith.constant 0 : index
    %55 = arith.index_cast %54 : i32 to index
    %c0_29 = arith.constant 0 : index
    %56 = vector.load %arg11[%c0_28, %55, %c0_29] : memref<1x128x128xbf16, #tpu.memory_space<vmem>>, vector<1x128x128xbf16>
    %cst_30 = arith.constant dense<0.000000e+00> : vector<1x128x128xf32>
    %57 = tpu.matmul %56, %42, %cst_30 {dimension_numbers = #tpu.dot_dimension_numbers<[2], [2], [1], [1], [0, 0, 0, 1, 1, 1], [0], [0]>} : vector<1x128x128xbf16>, vector<1x128x128xbf16>, vector<1x128x128xf32> -> vector<1x128x128xf32>
    %58 = arith.addf %57, %52 : vector<1x128x128xf32>
    %cst_31 = arith.constant dense<0xFF800000> : vector<1x128xf32>
    %59 = vector.multi_reduction <maximumf>, %58, %cst_31 [2] : vector<1x128x128xf32> to vector<1x128xf32>
    %60 = vector.shape_cast %59 : vector<1x128xf32> to vector<1x128x1xf32>
    %61 = vector.broadcast %60 : vector<1x128x1xf32> to vector<1x128x128xf32>
    %62 = arith.subf %58, %61 : vector<1x128x128xf32>
    %63 = math.exp %62 : vector<1x128x128xf32>
    %cst_32 = arith.constant dense<0.000000e+00> : vector<1x128xf32>
    %64 = vector.multi_reduction <add>, %63, %cst_32 [2] : vector<1x128x128xf32> to vector<1x128xf32>
    %65 = vector.shape_cast %64 : vector<1x128xf32> to vector<1x128x1xf32>
    %66 = arith.truncf %63 : vector<1x128x128xf32> to vector<1x128x128xbf16>
    %cst_33 = arith.constant dense<0.000000e+00> : vector<1x128x128xf32>
    %67 = tpu.matmul %66, %43, %cst_33 {dimension_numbers = #tpu.dot_dimension_numbers<[2], [1], [1], [2], [0, 0, 0, 1, 1, 2], [0], [0]>} : vector<1x128x128xbf16>, vector<1x128x128xbf16>, vector<1x128x128xf32> -> vector<1x128x128xf32>
    %68 = tpu.reciprocal %65 {approx = true} : vector<1x128x1xf32> -> vector<1x128x1xf32>
    %69 = vector.broadcast %68 : vector<1x128x1xf32> to vector<1x128x128xf32>
    %70 = arith.mulf %67, %69 : vector<1x128x128xf32>
    %71 = vector.shape_cast %70 : vector<1x128x128xf32> to vector<128x128xf32>
    %72 = arith.truncf %71 : vector<128x128xf32> to vector<128x128xbf16>
    %cst_34 = arith.constant dense<0.000000e+00> : vector<128x128xf32>
    %73 = tpu.matmul %72, %44, %cst_34 {dimension_numbers = #tpu.dot_dimension_numbers<[1], [0], [0], [1], [0, 0, 1, 1], [], []>} : vector<128x128xbf16>, vector<128x128xbf16>, vector<128x128xf32> -> vector<128x128xf32>
    %74 = vector.shape_cast %73 : vector<128x128xf32> to vector<1x128x128xf32>
    %c0_35 = arith.constant 0 : index
    %75 = arith.index_cast %54 : i32 to index
    %c0_36 = arith.constant 0 : index
    %76 = vector.load %arg1[%c0_35, %75, %c0_36] : memref<1x128x128xf32, #tpu.memory_space<vmem>>, vector<1x128x128xf32>
    %77 = arith.addf %74, %48 : vector<1x128x128xf32>
    %78 = arith.addf %77, %76 : vector<1x128x128xf32>
    %c0_37 = arith.constant 0 : index
    %79 = arith.index_cast %54 : i32 to index
    %c0_38 = arith.constant 0 : index
    %80 = vector.load %arg10[%c0_37, %79, %c0_38] : memref<1x128x128xf32, #tpu.memory_space<vmem>>, vector<1x128x128xf32>
    tpu.vector_store %arg10[%c0_37, %79, %c0_38], %78 {strides = array<i32>} : memref<1x128x128xf32, #tpu.memory_space<vmem>>, vector<1x128x128xf32>,
    %c1_i32 = arith.constant 1 : i32
    return
  }
  func.func @transform_0(%arg0: i32) -> (i32, i32, i32) {
    %c0_i32 = arith.constant 0 : i32
    %c0_i32_0 = arith.constant 0 : i32
    %c0_i32_1 = arith.constant 0 : i32
    return %arg0, %c0_i32, %c0_i32_0 : i32, i32, i32
  }
  func.func @transform_1(%arg0: i32) -> (i32, i32) {
    %c0_i32 = arith.constant 0 : i32
    %c0_i32_0 = arith.constant 0 : i32
    %c0_i32_1 = arith.constant 0 : i32
    return %c0_i32, %c0_i32_0 : i32, i32
  }
  func.func @transform_2(%arg0: i32) -> (i32, i32) {
    %c0_i32 = arith.constant 0 : i32
    %c0_i32_0 = arith.constant 0 : i32
    %c0_i32_1 = arith.constant 0 : i32
    return %c0_i32, %c0_i32_0 : i32, i32
  }
  func.func @transform_3(%arg0: i32) -> (i32, i32) {
    %c0_i32 = arith.constant 0 : i32
    %c0_i32_0 = arith.constant 0 : i32
    %c0_i32_1 = arith.constant 0 : i32
    return %c0_i32, %c0_i32_0 : i32, i32
  }
  func.func @transform_4(%arg0: i32) -> (i32, i32) {
    %c0_i32 = arith.constant 0 : i32
    %c0_i32_0 = arith.constant 0 : i32
    %c0_i32_1 = arith.constant 0 : i32
    return %c0_i32, %c0_i32_0 : i32, i32
  }
  func.func @transform_5(%arg0: i32) -> (i32, i32) {
    %c0_i32 = arith.constant 0 : i32
    %c0_i32_0 = arith.constant 0 : i32
    %c0_i32_1 = arith.constant 0 : i32
    return %c0_i32, %c0_i32_0 : i32, i32
  }
  func.func @transform_6(%arg0: i32) -> (i32, i32) {
    %c0_i32 = arith.constant 0 : i32
    %c0_i32_0 = arith.constant 0 : i32
    %c0_i32_1 = arith.constant 0 : i32
    return %c0_i32, %c0_i32_0 : i32, i32
  }
  func.func @transform_7(%arg0: i32) -> (i32, i32) {
    %c0_i32 = arith.constant 0 : i32
    %c0_i32_0 = arith.constant 0 : i32
    %c0_i32_1 = arith.constant 0 : i32
    return %c0_i32, %c0_i32_0 : i32, i32
  }
  func.func @transform_8(%arg0: i32) -> (i32, i32) {
    %c0_i32 = arith.constant 0 : i32
    %c0_i32_0 = arith.constant 0 : i32
    %c0_i32_1 = arith.constant 0 : i32
    return %c0_i32, %c0_i32_0 : i32, i32
  }
  func.func @transform_9(%arg0: i32) -> (i32, i32, i32) {
    %c0_i32 = arith.constant 0 : i32
    %c0_i32_0 = arith.constant 0 : i32
    %c0_i32_1 = arith.constant 0 : i32
    return %arg0, %c0_i32, %c0_i32_0 : i32, i32, i32
  }
}

</mosaic_0001>

<llo_original>
// kernel: tpu_custom_call.1
$region0: #{tpu_custom_call.1}
  #allocation0 [shape = 'u32[]', space=smem, size = 0x4, offset = 0x4, fixed_abs, tag = 'smem constant byte address 0x4 - core index']
  #allocation1 [shape = 'u32[72,128]{1,0:T(1,128)}', space=vmem, size = 0x9000, scoped, tag = 'internal scratch']
  #allocation2 [shape = 'bf16[1,128,128]{2,1,0:T(8,128)(2,1)}', space=vmem, size = 0x8000, scoped, tag = 'scratch operand']
  %s0 = inlined_call_operand.hbm [shape: f32[2,128,128], index: 0, kind: input, shape index: {}]
  %s1 = inlined_call_operand.hbm [shape: f32[128,128], index: 1, kind: input, shape index: {}]
  %s2 = inlined_call_operand.hbm [shape: f32[128,128], index: 2, kind: input, shape index: {}]
  %s3 = inlined_call_operand.vmem [shape: f32[1,128], index: 3, kind: input, shape index: {}]
  %s4 = inlined_call_operand.vmem [shape: f32[1,128], index: 4, kind: input, shape index: {}]
  %s5 = inlined_call_operand.hbm [shape: bf16[128,384], index: 5, kind: input, shape index: {}]
  %s6 = inlined_call_operand.hbm [shape: bf16[128,128], index: 6, kind: input, shape index: {}]
  %s7 = inlined_call_operand.vmem [shape: f32[1,128], index: 7, kind: input, shape index: {}]
  %s8 = inlined_call_operand.vmem [shape: f32[1,128], index: 8, kind: input, shape index: {}]
  %s9 = inlined_call_operand.hbm [shape: f32[2,128,128], index: 9, kind: output, shape index: {}]
  %s10 = sld [smem:[#allocation0]]
  $region89: #{tpu_custom_call.1} parent=0
    _
  %s12 = ssub.s32 1, %s10
  %s13 = scalar_select 0, %s12, %s10
  $region1: #{tpu_custom_call.1} parent=0
    #allocation3 [shape = 'u8[131072]{0}', space=vmem, size = 0x20000, scoped, tag = 'input window, operand 0']
    #allocation4 [shape = 's32[2]{0}', space=sflag, size = 0x8, scoped, tag = 'scoped memory for tpu_custom_call.1']
    #allocation5 [shape = 's32[2]{0}', space=sflag, size = 0x8, scoped, tag = 'scoped memory for tpu_custom_call.1']
    #allocation6 [shape = 'u8[65536]{0}', space=vmem, size = 0x10000, scoped, tag = 'input window, operand 1, single buffered']
    #allocation7 [shape = 's32[1]{0}', space=sflag, size = 0x4, scoped, tag = 'scoped memory for tpu_custom_call.1']
    #allocation8 [shape = 'u8[65536]{0}', space=vmem, size = 0x10000, scoped, tag = 'input window, operand 2, single buffered']
    #allocation9 [shape = 'u8[98304]{0}', space=vmem, size = 0x18000, scoped, tag = 'input window, operand 5, single buffered']
    #allocation10 [shape = 's32[1]{0}', space=sflag, size = 0x4, scoped, tag = 'scoped memory for tpu_custom_call.1']
    #allocation11 [shape = 'u8[32768]{0}', space=vmem, size = 0x8000, scoped, tag = 'input window, operand 6, single buffered']
    #allocation12 [shape = 'u8[131072]{0}', space=vmem, size = 0x20000, scoped, tag = 'output window, operand 0']
    %14 = vsyncpa [#allocation4], 0
    %s15 = scalar_lea.sflag [#allocation4], 1
    %16 = vsyncpa %s15, 0
    %17 = vsyncpa [#allocation7], 0
    %18 = vsyncpa [#allocation10], 0
    %19 = vsyncpa [#allocation5], 0
    %s20 = scalar_lea.sflag [#allocation5], 1
    %21 = vsyncpa %s20, 0
    loop: start=0, step=1, limit=4
    $region2: #{tpu_custom_call.1} parent=1 // loop_pre_header
      _
    $region3: #{tpu_custom_call.1} parent=1 // loop_header
      %s23 = sphi 0, %s27
      %p24 = scmp.ge.s32.totalorder %s23, 4
      %s33 = sphi 0, %s35
      %s36 = sphi 0, %s33
      %s37 = sphi 0, %s36
      %s53 = sphi 0, %s37
      %s57 = sphi 0, %s57
      %s59 = sphi 0, %s57
      %s60 = sphi 0, %s59
      %s74 = sphi 0, %s60
      %s78 = sphi 0, %s78
      %s80 = sphi 0, %s78
      %s81 = sphi 0, %s80
      %s95 = sphi 0, %s81
      %s99 = sphi 0, %s99
      %s101 = sphi 0, %s99
      %s102 = sphi 0, %s101
      %s116 = sphi 0, %s102
      %s120 = sphi 0, %s120
      %s122 = sphi 0, %s120
      %s123 = sphi 0, %s122
      %s137 = sphi 0, %s123
      %s141 = sphi 0, %s141
      %s143 = sphi 0, %s141
      %s144 = sphi 0, %s143
      %s158 = sphi 0, %s144
      %s162 = sphi 0, %s162
      %s164 = sphi 0, %s162
      %s165 = sphi 0, %s164
      %s179 = sphi 0, %s165
      %s183 = sphi 0, %s183
      %s185 = sphi 0, %s183
      %s186 = sphi 0, %s185
      %s200 = sphi 0, %s186
      %s204 = sphi 0, %s204
      %s206 = sphi 0, %s204
      %s207 = sphi 0, %s206
      %s221 = sphi 0, %s207
      %s227 = sphi 0, %s229
      %s230 = sphi 0, %s227
      %s231 = sphi 0, %s230
      %s247 = sphi 0, %s231
    $region4: #{tpu_custom_call.1} parent=1 // loop_header_branch
      %26 = sbr.rel (%p24) target = $region8
    $region5: #{tpu_custom_call.1} parent=1 // loop_body
      %s28 = ssub.s32 %s23, 1
      %s29 = ssub.s32 %s23, 2
      %s30 = sadd.s32 %s23, 1
      %s31 = ssub.s32 %s23, %s30
      %p32 = scmp.eq.s32.totalorder %s31, 0
      %s34 = sadd.s32 %s33, 1
      %s35 = scalar_select %p32, %s33, %s34
      %p38 = pneg %p32
      %p39 = scmp.eq.s32.totalorder %s23, 1
      %p40 = por %p38, %p39
      %p41 = scmp.ne.s32.totalorder %s33, %s36
      %p42 = scmp.eq.s32.totalorder %s23, 0
      %p43 = por %p41, %p42
      %p44 = scmp.ne.s32.totalorder %s33, %s36
      %p45 = scmp.eq.s32.totalorder %s28, 1
      %p46 = por %p44, %p45
      %p47 = scmp.ne.s32.totalorder %s36, %s37
      %p48 = scmp.eq.s32.totalorder %s28, 0
      %p49 = por %p47, %p48
      %p50 = scmp.ne.s32.totalorder %s36, %s37
      %p51 = scmp.eq.s32.totalorder %s29, 1
      %p52 = por %p50, %p51
      %p54 = scmp.ne.s32.totalorder %s37, %s53
      %p55 = scmp.eq.s32.totalorder %s29, 0
      %p56 = por %p54, %p55
      %s58 = sadd.s32 %s57, 1
      %p61 = scmp.eq.s32.totalorder %s23, 1
      %p62 = scmp.ne.s32.totalorder %s57, %s59
      %p63 = scmp.eq.s32.totalorder %s23, 0
      %p64 = por %p62, %p63
      %p65 = scmp.ne.s32.totalorder %s57, %s59
      %p66 = scmp.eq.s32.totalorder %s28, 1
      %p67 = por %p65, %p66
      %p68 = scmp.ne.s32.totalorder %s59, %s60
      %p69 = scmp.eq.s32.totalorder %s28, 0
      %p70 = por %p68, %p69
      %p71 = scmp.ne.s32.totalorder %s59, %s60
      %p72 = scmp.eq.s32.totalorder %s29, 1
      %p73 = por %p71, %p72
      %p75 = scmp.ne.s32.totalorder %s60, %s74
      %p76 = scmp.eq.s32.totalorder %s29, 0
      %p77 = por %p75, %p76
      %s79 = sadd.s32 %s78, 1
      %p82 = scmp.eq.s32.totalorder %s23, 1
      %p83 = scmp.ne.s32.totalorder %s78, %s80
      %p84 = scmp.eq.s32.totalorder %s23, 0
      %p85 = por %p83, %p84
      %p86 = scmp.ne.s32.totalorder %s78, %s80
      %p87 = scmp.eq.s32.totalorder %s28, 1
      %p88 = por %p86, %p87
      %p89 = scmp.ne.s32.totalorder %s80, %s81
      %p90 = scmp.eq.s32.totalorder %s28, 0
      %p91 = por %p89, %p90
      %p92 = scmp.ne.s32.totalorder %s80, %s81
      %p93 = scmp.eq.s32.totalorder %s29, 1
      %p94 = por %p92, %p93
      %p96 = scmp.ne.s32.totalorder %s81, %s95
      %p97 = scmp.eq.s32.totalorder %s29, 0
      %p98 = por %p96, %p97
      %s100 = sadd.s32 %s99, 1
      %p103 = scmp.eq.s32.totalorder %s23, 1
      %p104 = scmp.ne.s32.totalorder %s99, %s101
      %p105 = scmp.eq.s32.totalorder %s23, 0
      %p106 = por %p104, %p105
      %p107 = scmp.ne.s32.totalorder %s99, %s101
      %p108 = scmp.eq.s32.totalorder %s28, 1
      %p109 = por %p107, %p108
      %p110 = scmp.ne.s32.totalorder %s101, %s102
      %p111 = scmp.eq.s32.totalorder %s28, 0
      %p112 = por %p110, %p111
      %p113 = scmp.ne.s32.totalorder %s101, %s102
      %p114 = scmp.eq.s32.totalorder %s29, 1
      %p115 = por %p113, %p114
      %p117 = scmp.ne.s32.totalorder %s102, %s116
      %p118 = scmp.eq.s32.totalorder %s29, 0
      %p119 = por %p117, %p118
      %s121 = sadd.s32 %s120, 1
      %p124 = scmp.eq.s32.totalorder %s23, 1
      %p125 = scmp.ne.s32.totalorder %s120, %s122
      %p126 = scmp.eq.s32.totalorder %s23, 0
      %p127 = por %p125, %p126
      %p128 = scmp.ne.s32.totalorder %s120, %s122
      %p129 = scmp.eq.s32.totalorder %s28, 1
      %p130 = por %p128, %p129
      %p131 = scmp.ne.s32.totalorder %s122, %s123
      %p132 = scmp.eq.s32.totalorder %s28, 0
      %p133 = por %p131, %p132
      %p134 = scmp.ne.s32.totalorder %s122, %s123
      %p135 = scmp.eq.s32.totalorder %s29, 1
      %p136 = por %p134, %p135
      %p138 = scmp.ne.s32.totalorder %s123, %s137
      %p139 = scmp.eq.s32.totalorder %s29, 0
      %p140 = por %p138, %p139
      %s142 = sadd.s32 %s141, 1
      %p145 = scmp.eq.s32.totalorder %s23, 1
      %p146 = scmp.ne.s32.totalorder %s141, %s143
      %p147 = scmp.eq.s32.totalorder %s23, 0
      %p148 = por %p146, %p147
      %p149 = scmp.ne.s32.totalorder %s141, %s143
      %p150 = scmp.eq.s32.totalorder %s28, 1
      %p151 = por %p149, %p150
      %p152 = scmp.ne.s32.totalorder %s143, %s144
      %p153 = scmp.eq.s32.totalorder %s28, 0
      %p154 = por %p152, %p153
      %p155 = scmp.ne.s32.totalorder %s143, %s144
      %p156 = scmp.eq.s32.totalorder %s29, 1
      %p157 = por %p155, %p156
      %p159 = scmp.ne.s32.totalorder %s144, %s158
      %p160 = scmp.eq.s32.totalorder %s29, 0
      %p161 = por %p159, %p160
      %s163 = sadd.s32 %s162, 1
      %p166 = scmp.eq.s32.totalorder %s23, 1
      %p167 = scmp.ne.s32.totalorder %s162, %s164
      %p168 = scmp.eq.s32.totalorder %s23, 0
      %p169 = por %p167, %p168
      %p170 = scmp.ne.s32.totalorder %s162, %s164
      %p171 = scmp.eq.s32.totalorder %s28, 1
      %p172 = por %p170, %p171
      %p173 = scmp.ne.s32.totalorder %s164, %s165
      %p174 = scmp.eq.s32.totalorder %s28, 0
      %p175 = por %p173, %p174
      %p176 = scmp.ne.s32.totalorder %s164, %s165
      %p177 = scmp.eq.s32.totalorder %s29, 1
      %p178 = por %p176, %p177
      %p180 = scmp.ne.s32.totalorder %s165, %s179
      %p181 = scmp.eq.s32.totalorder %s29, 0
      %p182 = por %p180, %p181
      %s184 = sadd.s32 %s183, 1
      %p187 = scmp.eq.s32.totalorder %s23, 1
      %p188 = scmp.ne.s32.totalorder %s183, %s185
      %p189 = scmp.eq.s32.totalorder %s23, 0
      %p190 = por %p188, %p189
      %p191 = scmp.ne.s32.totalorder %s183, %s185
      %p192 = scmp.eq.s32.totalorder %s28, 1
      %p193 = por %p191, %p192
      %p194 = scmp.ne.s32.totalorder %s185, %s186
      %p195 = scmp.eq.s32.totalorder %s28, 0
      %p196 = por %p194, %p195
      %p197 = scmp.ne.s32.totalorder %s185, %s186
      %p198 = scmp.eq.s32.totalorder %s29, 1
      %p199 = por %p197, %p198
      %p201 = scmp.ne.s32.totalorder %s186, %s200
      %p202 = scmp.eq.s32.totalorder %s29, 0
      %p203 = por %p201, %p202
      %s205 = sadd.s32 %s204, 1
      %p208 = scmp.eq.s32.totalorder %s23, 1
      %p209 = scmp.ne.s32.totalorder %s204, %s206
      %p210 = scmp.eq.s32.totalorder %s23, 0
      %p211 = por %p209, %p210
      %p212 = scmp.ne.s32.totalorder %s204, %s206
      %p213 = scmp.eq.s32.totalorder %s28, 1
      %p214 = por %p212, %p213
      %p215 = scmp.ne.s32.totalorder %s206, %s207
      %p216 = scmp.eq.s32.totalorder %s28, 0
      %p217 = por %p215, %p216
      %p218 = scmp.ne.s32.totalorder %s206, %s207
      %p219 = scmp.eq.s32.totalorder %s29, 1
      %p220 = por %p218, %p219
      %p222 = scmp.ne.s32.totalorder %s207, %s221
      %p223 = scmp.eq.s32.totalorder %s29, 0
      %p224 = por %p222, %p223
      %s225 = ssub.s32 %s23, %s30
      %p226 = scmp.eq.s32.totalorder %s225, 0
      %s228 = sadd.s32 %s227, 1
      %s229 = scalar_select %p226, %s227, %s228
      %p232 = pneg %p226
      %p233 = scmp.eq.s32.totalorder %s23, 1
      %p234 = por %p232, %p233
      %p235 = scmp.ne.s32.totalorder %s227, %s230
      %p236 = scmp.eq.s32.totalorder %s23, 0
      %p237 = por %p235, %p236
      %p238 = scmp.ne.s32.totalorder %s227, %s230
      %p239 = scmp.eq.s32.totalorder %s28, 1
      %p240 = por %p238, %p239
      %p241 = scmp.ne.s32.totalorder %s230, %s231
      %p242 = scmp.eq.s32.totalorder %s28, 0
      %p243 = por %p241, %p242
      %p244 = scmp.ne.s32.totalorder %s230, %s231
      %p245 = scmp.eq.s32.totalorder %s29, 1
      %p246 = por %p244, %p245
      %p248 = scmp.ne.s32.totalorder %s231, %s247
      %p249 = scmp.eq.s32.totalorder %s29, 0
      %p250 = por %p248, %p249
      %p251 = scmp.le.s32.totalorder 1, %s23
      %p252 = scmp.lt.s32.totalorder %s23, 3
      %p253 = pnand %p251, %p252
      %p254 = pneg %p253
      // Predicated region
      $region9: #{tpu_custom_call.1} parent=5 // pred_check
        _
      $region10: #{tpu_custom_call.1} parent=5 // pred_check_branch
        %256 = sbr.rel (%p253) target = $region12
      $region11: #{tpu_custom_call.1} parent=5 // pred_region
        %s257 = ssub.s32 %s23, 1
        // Predicated region
        $region13: #{tpu_custom_call.1} parent=11 // pred_check
          %p258 = pneg %p70
        $region14: #{tpu_custom_call.1} parent=11 // pred_check_branch
          %260 = sbr.rel (%p258) target = $region16
        $region15: #{tpu_custom_call.1} parent=11 // pred_region
          %262 = vsyncadd [#allocation7], 0
          %s263 = sshll.u32 %s1, 4
          %s264 = int_to_ptr.hbm [resolvable:$true] %s263
          %s265 = sshll.u32 [#allocation6], 4
          %s266 = int_to_ptr.vmem [resolvable:$true] %s265
          %271 = dma.hbm_to_vmem [thread:$0]  %s264, 2048, %s266, [#allocation7], 128, 128, 8
        $region16: #{tpu_custom_call.1} parent=11 // pred_fallthru
          _
        // Predicated region
        $region17: #{tpu_custom_call.1} parent=11 // pred_check
          %p272 = pneg %p91
        $region18: #{tpu_custom_call.1} parent=11 // pred_check_branch
          %274 = sbr.rel (%p272) target = $region20
        $region19: #{tpu_custom_call.1} parent=11 // pred_region
          %276 = vsyncadd [#allocation7], 0
          %s277 = sshll.u32 %s2, 4
          %s278 = int_to_ptr.hbm [resolvable:$true] %s277
          %s279 = sshll.u32 [#allocation8], 4
          %s280 = int_to_ptr.vmem [resolvable:$true] %s279
          %285 = dma.hbm_to_vmem [thread:$0]  %s278, 2048, %s280, [#allocation7], 128, 128, 8
        $region20: #{tpu_custom_call.1} parent=11 // pred_fallthru
          _
        // Predicated region
        $region21: #{tpu_custom_call.1} parent=11 // pred_check
          %p286 = pneg %p112
        $region22: #{tpu_custom_call.1} parent=11 // pred_check_branch
          %288 = sbr.rel (%p286) target = $region24
        $region23: #{tpu_custom_call.1} parent=11 // pred_region
          _
        $region24: #{tpu_custom_call.1} parent=11 // pred_fallthru
          _
        // Predicated region
        $region25: #{tpu_custom_call.1} parent=11 // pred_check
          %p289 = pneg %p133
        $region26: #{tpu_custom_call.1} parent=11 // pred_check_branch
          %291 = sbr.rel (%p289) target = $region28
        $region27: #{tpu_custom_call.1} parent=11 // pred_region
          _
        $region28: #{tpu_custom_call.1} parent=11 // pred_fallthru
          _
        // Predicated region
        $region29: #{tpu_custom_call.1} parent=11 // pred_check
          %p292 = pneg %p154
        $region30: #{tpu_custom_call.1} parent=11 // pred_check_branch
          %294 = sbr.rel (%p292) target = $region32
        $region31: #{tpu_custom_call.1} parent=11 // pred_region
          %296 = vsyncadd [#allocation10], 0
          %s297 = sshll.u32 %s5, 4
          %s298 = int_to_ptr.hbm [resolvable:$true] %s297
          %s299 = sshll.u32 [#allocation9], 4
          %s300 = int_to_ptr.vmem [resolvable:$true] %s299
          %305 = dma.hbm_to_vmem [thread:$0]  %s298, 3072, %s300, [#allocation10], 192, 192, 12
        $region32: #{tpu_custom_call.1} parent=11 // pred_fallthru
          _
        // Predicated region
        $region33: #{tpu_custom_call.1} parent=11 // pred_check
          %p306 = pneg %p175
        $region34: #{tpu_custom_call.1} parent=11 // pred_check_branch
          %308 = sbr.rel (%p306) target = $region36
        $region35: #{tpu_custom_call.1} parent=11 // pred_region
          %310 = vsyncadd [#allocation10], 0
          %s311 = sshll.u32 %s6, 4
          %s312 = int_to_ptr.hbm [resolvable:$true] %s311
          %s313 = sshll.u32 [#allocation11], 4
          %s314 = int_to_ptr.vmem [resolvable:$true] %s313
          %319 = dma.hbm_to_vmem [thread:$0]  %s312, 1024, %s314, [#allocation10], 64, 64, 4
        $region36: #{tpu_custom_call.1} parent=11 // pred_fallthru
          _
        // Predicated region
        $region37: #{tpu_custom_call.1} parent=11 // pred_check
          %p320 = pneg %p196
        $region38: #{tpu_custom_call.1} parent=11 // pred_check_branch
          %322 = sbr.rel (%p320) target = $region40
        $region39: #{tpu_custom_call.1} parent=11 // pred_region
          _
        $region40: #{tpu_custom_call.1} parent=11 // pred_fallthru
          _
        // Predicated region
        $region41: #{tpu_custom_call.1} parent=11 // pred_check
          %p323 = pneg %p217
        $region42: #{tpu_custom_call.1} parent=11 // pred_check_branch
          %325 = sbr.rel (%p323) target = $region44
        $region43: #{tpu_custom_call.1} parent=11 // pred_region
          _
        $region44: #{tpu_custom_call.1} parent=11 // pred_fallthru
          _
      $region12: #{tpu_custom_call.1} parent=5 // pred_fallthru
        _
      %p326 = scmp.lt.s32.totalorder %s23, 2
      // Predicated region
      $region45: #{tpu_custom_call.1} parent=5 // pred_check
        %p327 = pneg %p326
      $region46: #{tpu_custom_call.1} parent=5 // pred_check_branch
        %329 = sbr.rel (%p327) target = $region48
      $region47: #{tpu_custom_call.1} parent=5 // pred_region
        // Predicated region
        $region49: #{tpu_custom_call.1} parent=47 // pred_check
          %p330 = pneg %p43
        $region50: #{tpu_custom_call.1} parent=47 // pred_check_branch
          %332 = sbr.rel (%p330) target = $region52
        $region51: #{tpu_custom_call.1} parent=47 // pred_region
          %s333 = sand.u32 %s33, 1
          %s334 = scalar_lea.sflag [#allocation4], %s333
          %s335 = sand.u32 %s33, 1
          %s336 = smul.addr %s335, 128
          %s337 = scalar_lea.vmem [#allocation3], %s336
          %339 = vsyncadd %s334, 0
          %s340 = smul.addr %s23, 16
          %s341 = smul.addr %s340, 8
          %s342 = scalar_lea.hbm %s0, %s341
          %s343 = sshll.u32 %s342, 4
          %s344 = int_to_ptr.hbm [resolvable:$true] %s343
          %s345 = sshll.u32 %s337, 4
          %s346 = int_to_ptr.vmem [resolvable:$true] %s345
          %351 = dma.hbm_to_vmem [thread:$0]  %s344, 2048, %s346, %s334, 128, 128, 8
        $region52: #{tpu_custom_call.1} parent=47 // pred_fallthru
          _
      $region48: #{tpu_custom_call.1} parent=5 // pred_fallthru
        _
      %p352 = scmp.le.s32.totalorder 1, %s23
      %p353 = scmp.lt.s32.totalorder %s23, 3
      %p354 = pnand %p352, %p353
      %p355 = pneg %p354
      // Predicated region
      $region53: #{tpu_custom_call.1} parent=5 // pred_check
        _
      $region54: #{tpu_custom_call.1} parent=5 // pred_check_branch
        %357 = sbr.rel (%p354) target = $region56
      $region55: #{tpu_custom_call.1} parent=5 // pred_region
        %s358 = ssub.s32 %s23, 1
        %s359 = sand.u32 %s36, 1
        %s360 = scalar_lea.sflag [#allocation4], %s359
        %s361 = sand.u32 %s36, 1
        %s362 = smul.addr %s361, 128
        %s363 = scalar_lea.vmem [#allocation3], %s362
        // Predicated region
        $region57: #{tpu_custom_call.1} parent=55 // pred_check
          %p364 = pneg %p49
        $region58: #{tpu_custom_call.1} parent=55 // pred_check_branch
          %366 = sbr.rel (%p364) target = $region60
        $region59: #{tpu_custom_call.1} parent=55 // pred_region
          %368 = dma.done %s360, 2048
        $region60: #{tpu_custom_call.1} parent=55 // pred_fallthru
          _
        // Predicated region
        $region61: #{tpu_custom_call.1} parent=55 // pred_check
          %p369 = pneg %p70
        $region62: #{tpu_custom_call.1} parent=55 // pred_check_branch
          %371 = sbr.rel (%p369) target = $region64
        $region63: #{tpu_custom_call.1} parent=55 // pred_region
          %373 = dma.done [#allocation7], 2048
        $region64: #{tpu_custom_call.1} parent=55 // pred_fallthru
          _
        // Predicated region
        $region65: #{tpu_custom_call.1} parent=55 // pred_check
          %p374 = pneg %p91
        $region66: #{tpu_custom_call.1} parent=55 // pred_check_branch
          %376 = sbr.rel (%p374) target = $region68
        $region67: #{tpu_custom_call.1} parent=55 // pred_region
          %378 = dma.done [#allocation7], 2048
        $region68: #{tpu_custom_call.1} parent=55 // pred_fallthru
          _
        // Predicated region
        $region69: #{tpu_custom_call.1} parent=55 // pred_check
          %p379 = pneg %p154
        $region70: #{tpu_custom_call.1} parent=55 // pred_check_branch
          %381 = sbr.rel (%p379) target = $region72
        $region71: #{tpu_custom_call.1} parent=55 // pred_region
          %383 = dma.done [#allocation10], 3072
        $region72: #{tpu_custom_call.1} parent=55 // pred_fallthru
          _
        // Predicated region
        $region73: #{tpu_custom_call.1} parent=55 // pred_check
          %p384 = pneg %p175
        $region74: #{tpu_custom_call.1} parent=55 // pred_check_branch
          %386 = sbr.rel (%p384) target = $region76
        $region75: #{tpu_custom_call.1} parent=55 // pred_region
          %388 = dma.done [#allocation10], 1024
        $region76: #{tpu_custom_call.1} parent=55 // pred_fallthru
          _
        %s389 = sand.u32 %s36, 1
        %s390 = scalar_lea.sflag [#allocation4], %s389
        %s391 = sand.u32 %s36, 1
        %s392 = smul.addr %s391, 128
        %s393 = scalar_lea.vmem [#allocation3], %s392
        %p394 = pneg %p49
        %p395 = pneg %p46
        %p396 = pneg %p70
        %p397 = pneg %p67
        %p398 = pneg %p91
        %p399 = pneg %p88
        %p400 = pneg %p112
        %p401 = pneg %p109
        %p402 = pneg %p133
        %p403 = pneg %p130
        %p404 = pneg %p154
        %p405 = pneg %p151
        %p406 = pneg %p175
        %p407 = pneg %p172
        %p408 = pneg %p196
        %p409 = pneg %p193
        %p410 = pneg %p217
        %p411 = pneg %p214
        %p412 = pneg %p243
        %p413 = pneg %p240
        %s414 = sand.u32 %s230, 1
        %s415 = scalar_lea.sflag [#allocation5], %s414
        %s416 = sand.u32 %s230, 1
        %s417 = smul.addr %s416, 128
        %s418 = scalar_lea.vmem [#allocation12], %s417
        %v419 = vld [vmem:[%s363] sm:$0xff]
        %v420 = vld [vmem:[%s363 + $0x8] sm:$0xff]
        %v421 = vld [vmem:[%s363 + $0x10] sm:$0xff]
        %v422 = vld [vmem:[%s363 + $0x18] sm:$0xff]
        %v423 = vld [vmem:[%s363 + $0x20] sm:$0xff]
        %v424 = vld [vmem:[%s363 + $0x28] sm:$0xff]
        %v425 = vld [vmem:[%s363 + $0x30] sm:$0xff]
        %v426 = vld [vmem:[%s363 + $0x38] sm:$0xff]
        %v427 = vld [vmem:[%s363 + $0x40] sm:$0xff]
        %v428 = vld [vmem:[%s363 + $0x48] sm:$0xff]
        %v429 = vld [vmem:[%s363 + $0x50] sm:$0xff]
        %v430 = vld [vmem:[%s363 + $0x58] sm:$0xff]
        %v431 = vld [vmem:[%s363 + $0x60] sm:$0xff]
        %v432 = vld [vmem:[%s363 + $0x68] sm:$0xff]
        %v433 = vld [vmem:[%s363 + $0x70] sm:$0xff]
        %v434 = vld [vmem:[%s363 + $0x78] sm:$0xff]
        %v435 = vadd.f32 %v419, %v420
        %v436 = vadd.f32 %v435, %v421
        %v437 = vadd.f32 %v436, %v422
        %v438 = vadd.f32 %v437, %v423
        %v439 = vadd.f32 %v438, %v424
        %v440 = vadd.f32 %v439, %v425
        %v441 = vadd.f32 %v440, %v426
        %v442 = vadd.f32 %v441, %v427
        %v443 = vadd.f32 %v442, %v428
        %v444 = vadd.f32 %v443, %v429
        %v445 = vadd.f32 %v444, %v430
        %v446 = vadd.f32 %v445, %v431
        %v447 = vadd.f32 %v446, %v432
        %v448 = vadd.f32 %v447, %v433
        %v449 = vadd.f32 %v448, %v434
        %v450 = vrot.slane %v449, 4
        %v451 = vadd.f32 %v449, %v450
        %v452 = vrot.slane %v451, 2
        %v453 = vadd.f32 %v451, %v452
        %v454 = vrot.slane %v453, 1
        %v455 = vadd.f32 %v453, %v454
        %v456 = vmul.f32 %v419, %v419
        %v457 = vmul.f32 %v420, %v420
        %v458 = vmul.f32 %v421, %v421
        %v459 = vmul.f32 %v422, %v422
        %v460 = vmul.f32 %v423, %v423
        %v461 = vmul.f32 %v424, %v424
        %v462 = vmul.f32 %v425, %v425
        %v463 = vmul.f32 %v426, %v426
        %v464 = vmul.f32 %v427, %v427
        %v465 = vmul.f32 %v428, %v428
        %v466 = vmul.f32 %v429, %v429
        %v467 = vmul.f32 %v430, %v430
        %v468 = vmul.f32 %v431, %v431
        %v469 = vmul.f32 %v432, %v432
        %v470 = vmul.f32 %v433, %v433
        %v471 = vmul.f32 %v434, %v434
        %v472 = vadd.f32 %v456, %v457
        %v473 = vadd.f32 %v472, %v458
        %v474 = vadd.f32 %v473, %v459
        %v475 = vadd.f32 %v474, %v460
        %v476 = vadd.f32 %v475, %v461
        %v477 = vadd.f32 %v476, %v462
        %v478 = vadd.f32 %v477, %v463
        %v479 = vadd.f32 %v478, %v464
        %v480 = vadd.f32 %v479, %v465
        %v481 = vadd.f32 %v480, %v466
        %v482 = vadd.f32 %v481, %v467
        %v483 = vadd.f32 %v482, %v468
        %v484 = vadd.f32 %v483, %v469
        %v485 = vadd.f32 %v484, %v470
        %v486 = vadd.f32 %v485, %v471
        %v487 = vrot.slane %v486, 4
        %v488 = vadd.f32 %v486, %v487
        %v489 = vrot.slane %v488, 2
        %v490 = vadd.f32 %v488, %v489
        %v491 = vrot.slane %v490, 1
        %v492 = vadd.f32 %v490, %v491
        %vm493 = vcmask 1040384
        %v494 = vsel %vm493, %v455, %v492
        %v495 = vld [vmem:[#allocation6] sm:$0xff]
        %v496 = vld [vmem:[#allocation6 + $0x8] sm:$0xff]
        %v497 = vld [vmem:[#allocation6 + $0x10] sm:$0xff]
        %v498 = vld [vmem:[#allocation6 + $0x18] sm:$0xff]
        %v499 = vld [vmem:[#allocation6 + $0x20] sm:$0xff]
        %v500 = vld [vmem:[#allocation6 + $0x28] sm:$0xff]
        %v501 = vld [vmem:[#allocation6 + $0x30] sm:$0xff]
        %v502 = vld [vmem:[#allocation6 + $0x38] sm:$0xff]
        %v503 = vld [vmem:[#allocation6 + $0x40] sm:$0xff]
        %v504 = vld [vmem:[#allocation6 + $0x48] sm:$0xff]
        %v505 = vld [vmem:[#allocation6 + $0x50] sm:$0xff]
        %v506 = vld [vmem:[#allocation6 + $0x58] sm:$0xff]
        %v507 = vld [vmem:[#allocation6 + $0x60] sm:$0xff]
        %v508 = vld [vmem:[#allocation6 + $0x68] sm:$0xff]
        %v509 = vld [vmem:[#allocation6 + $0x70] sm:$0xff]
        %v510 = vld [vmem:[#allocation6 + $0x78] sm:$0xff]
        %511 = vmatpush.msra.mxu0 %v510
        %512 = vmatpush.msra.mxu0 %v509
        %513 = vmatpush.msra.mxu0 %v508
        %514 = vmatpush.msra.mxu0 %v507
        %515 = vmatpush.msra.mxu0 %v506
        %516 = vmatpush.msra.mxu0 %v505
        %517 = vmatpush.msra.mxu0 %v504
        %518 = vmatpush.msra.mxu0 %v503
        %519 = vmatpush.msra.mxu0 %v502
        %520 = vmatpush.msra.mxu0 %v501
        %521 = vmatpush.msra.mxu0 %v500
        %522 = vmatpush.msra.mxu0 %v499
        %523 = vmatpush.msra.mxu0 %v498
        %524 = vmatpush.msra.mxu0 %v497
        %525 = vmatpush.msra.mxu0 %v496
        %526 = vmatpush.msra.mxu0 %v495
        %527 = vmatmul.f32.gmra.mxu0 %v494
        %v528 = vpop.f32.mrf.mxu0
        %v529 = vadd.f32 0.0, %v528
        %530 = vdwg.mxu0
        %v531 = vmul.f32 %v529, 0.001953125
        %v532 = vld [vmem:[#allocation8] sm:$0xff]
        %v533 = vld [vmem:[#allocation8 + $0x8] sm:$0xff]
        %v534 = vld [vmem:[#allocation8 + $0x10] sm:$0xff]
        %v535 = vld [vmem:[#allocation8 + $0x18] sm:$0xff]
        %v536 = vld [vmem:[#allocation8 + $0x20] sm:$0xff]
        %v537 = vld [vmem:[#allocation8 + $0x28] sm:$0xff]
        %v538 = vld [vmem:[#allocation8 + $0x30] sm:$0xff]
        %v539 = vld [vmem:[#allocation8 + $0x38] sm:$0xff]
        %v540 = vld [vmem:[#allocation8 + $0x40] sm:$0xff]
        %v541 = vld [vmem:[#allocation8 + $0x48] sm:$0xff]
        %v542 = vld [vmem:[#allocation8 + $0x50] sm:$0xff]
        %v543 = vld [vmem:[#allocation8 + $0x58] sm:$0xff]
        %v544 = vld [vmem:[#allocation8 + $0x60] sm:$0xff]
        %v545 = vld [vmem:[#allocation8 + $0x68] sm:$0xff]
        %v546 = vld [vmem:[#allocation8 + $0x70] sm:$0xff]
        %v547 = vld [vmem:[#allocation8 + $0x78] sm:$0xff]
        %548 = vmatpush.msra.mxu0 %v547
        %549 = vmatpush.msra.mxu0 %v546
        %550 = vmatpush.msra.mxu0 %v545
        %551 = vmatpush.msra.mxu0 %v544
        %552 = vmatpush.msra.mxu0 %v543
        %553 = vmatpush.msra.mxu0 %v542
        %554 = vmatpush.msra.mxu0 %v541
        %555 = vmatpush.msra.mxu0 %v540
        %556 = vmatpush.msra.mxu0 %v539
        %557 = vmatpush.msra.mxu0 %v538
        %558 = vmatpush.msra.mxu0 %v537
        %559 = vmatpush.msra.mxu0 %v536
        %560 = vmatpush.msra.mxu0 %v535
        %561 = vmatpush.msra.mxu0 %v534
        %562 = vmatpush.msra.mxu0 %v533
        %563 = vmatpush.msra.mxu0 %v532
        %564 = vmatmul.f32.gmra.mxu0 %v531
        %v565 = vpop.f32.mrf.mxu0
        %v566 = vadd.f32 0.0, %v565
        %567 = vdwg.mxu0
        %v568 = vmul.f32 %v566, %v566
        %v570 = vrot.slane %v568, 7
        %v572 = vsub.f32 %v566, %v570
        %v573 = vmax.f32 %v572, 0.0
        %v574 = vadd.f32 %v573, 1e-05
        %v575 = vrsqrt.pop %v574
        %v576 = vmul.f32 %v575, %v574
        %v577 = vmul.f32 %v576, %v575
        %v578 = vmul.f32 0.5, %v577
        %v579 = vsub.f32 1.5, %v578
        %v580 = vmul.f32 %v575, %v579
        %vm581 = vweird.f32 %v574
        %vm582 = vweird.f32 %v575
        %vm583 = vmor %vm581, %vm582
        %v584 = vsel %vm583, %v575, %v580
        %v585 = vperm.slane %v566, 0
        %v586 = vsub.f32 %v419, %v585
        %v587 = vsub.f32 %v420, %v585
        %v588 = vsub.f32 %v421, %v585
        %v589 = vsub.f32 %v422, %v585
        %v590 = vsub.f32 %v423, %v585
        %v591 = vsub.f32 %v424, %v585
        %v592 = vsub.f32 %v425, %v585
        %v593 = vsub.f32 %v426, %v585
        %v594 = vsub.f32 %v427, %v585
        %v595 = vsub.f32 %v428, %v585
        %v596 = vsub.f32 %v429, %v585
        %v597 = vsub.f32 %v430, %v585
        %v598 = vsub.f32 %v431, %v585
        %v599 = vsub.f32 %v432, %v585
        %v600 = vsub.f32 %v433, %v585
        %v601 = vsub.f32 %v434, %v585
        %v602 = vperm.slane %v584, 1
        %v603 = vmul.f32 %v586, %v602
        %v604 = vmul.f32 %v587, %v602
        %v605 = vmul.f32 %v588, %v602
        %v606 = vmul.f32 %v589, %v602
        %v607 = vmul.f32 %v590, %v602
        %v608 = vmul.f32 %v591, %v602
        %v609 = vmul.f32 %v592, %v602
        %v610 = vmul.f32 %v593, %v602
        %v611 = vmul.f32 %v594, %v602
        %v612 = vmul.f32 %v595, %v602
        %v613 = vmul.f32 %v596, %v602
        %v614 = vmul.f32 %v597, %v602
        %v615 = vmul.f32 %v598, %v602
        %v616 = vmul.f32 %v599, %v602
        %v617 = vmul.f32 %v600, %v602
        %v618 = vmul.f32 %v601, %v602
        %v619 = vld [vmem:[%s3] sm:$0x1]
        %v621 = vperm.slane %v619, 0
        %v623 = vmul.f32 %v603, %v621
        %v624 = vmul.f32 %v604, %v621
        %v625 = vmul.f32 %v605, %v621
        %v626 = vmul.f32 %v606, %v621
        %v627 = vmul.f32 %v607, %v621
        %v628 = vmul.f32 %v608, %v621
        %v629 = vmul.f32 %v609, %v621
        %v630 = vmul.f32 %v610, %v621
        %v631 = vmul.f32 %v611, %v621
        %v632 = vmul.f32 %v612, %v621
        %v633 = vmul.f32 %v613, %v621
        %v634 = vmul.f32 %v614, %v621
        %v635 = vmul.f32 %v615, %v621
        %v636 = vmul.f32 %v616, %v621
        %v637 = vmul.f32 %v617, %v621
        %v638 = vmul.f32 %v618, %v621
        %v639 = vld [vmem:[%s4] sm:$0x1]
        %v641 = vperm.slane %v639, 0
        %v643 = vadd.f32 %v623, %v641
        %v644 = vadd.f32 %v624, %v641
        %v645 = vadd.f32 %v625, %v641
        %v646 = vadd.f32 %v626, %v641
        %v647 = vadd.f32 %v627, %v641
        %v648 = vadd.f32 %v628, %v641
        %v649 = vadd.f32 %v629, %v641
        %v650 = vadd.f32 %v630, %v641
        %v651 = vadd.f32 %v631, %v641
        %v652 = vadd.f32 %v632, %v641
        %v653 = vadd.f32 %v633, %v641
        %v654 = vadd.f32 %v634, %v641
        %v655 = vadd.f32 %v635, %v641
        %v656 = vadd.f32 %v636, %v641
        %v657 = vadd.f32 %v637, %v641
        %v658 = vadd.f32 %v638, %v641
        %v659 = vpack.c.bf16 %v643, %v643
        %v660 = vpack.c.bf16 %v644, %v644
        %v661 = vpack.c.bf16 %v645, %v645
        %v662 = vpack.c.bf16 %v646, %v646
        %v663 = vpack.c.bf16 %v647, %v647
        %v664 = vpack.c.bf16 %v648, %v648
        %v665 = vpack.c.bf16 %v649, %v649
        %v666 = vpack.c.bf16 %v650, %v650
        %v667 = vpack.c.bf16 %v651, %v651
        %v668 = vpack.c.bf16 %v652, %v652
        %v669 = vpack.c.bf16 %v653, %v653
        %v670 = vpack.c.bf16 %v654, %v654
        %v671 = vpack.c.bf16 %v655, %v655
        %v672 = vpack.c.bf16 %v656, %v656
        %v673 = vpack.c.bf16 %v657, %v657
        %v674 = vpack.c.bf16 %v658, %v658
        %v675 = vld [vmem:[#allocation9] sm:$0xff]
        %v676 = vld [vmem:[#allocation9 + $0x8] sm:$0xf]
        %v677 = vld [vmem:[#allocation9 + $0xc] sm:$0xff]
        %v678 = vld [vmem:[#allocation9 + $0x14] sm:$0xf]
        %v679 = vld [vmem:[#allocation9 + $0x18] sm:$0xff]
        %v680 = vld [vmem:[#allocation9 + $0x20] sm:$0xf]
        %v681 = vld [vmem:[#allocation9 + $0x24] sm:$0xff]
        %v682 = vld [vmem:[#allocation9 + $0x2c] sm:$0xf]
        %v683 = vld [vmem:[#allocation9 + $0x30] sm:$0xff]
        %v684 = vld [vmem:[#allocation9 + $0x38] sm:$0xf]
        %v685 = vld [vmem:[#allocation9 + $0x3c] sm:$0xff]
        %v686 = vld [vmem:[#allocation9 + $0x44] sm:$0xf]
        %v687 = vld [vmem:[#allocation9 + $0x48] sm:$0xff]
        %v688 = vld [vmem:[#allocation9 + $0x50] sm:$0xf]
        %v689 = vld [vmem:[#allocation9 + $0x54] sm:$0xff]
        %v690 = vld [vmem:[#allocation9 + $0x5c] sm:$0xf]
        %v691 = vld [vmem:[#allocation9 + $0x60] sm:$0xff]
        %v692 = vld [vmem:[#allocation9 + $0x68] sm:$0xf]
        %v693 = vld [vmem:[#allocation9 + $0x6c] sm:$0xff]
        %v694 = vld [vmem:[#allocation9 + $0x74] sm:$0xf]
        %v695 = vld [vmem:[#allocation9 + $0x78] sm:$0xff]
        %v696 = vld [vmem:[#allocation9 + $0x80] sm:$0xf]
        %v697 = vld [vmem:[#allocation9 + $0x84] sm:$0xff]
        %v698 = vld [vmem:[#allocation9 + $0x8c] sm:$0xf]
        %v699 = vld [vmem:[#allocation9 + $0x90] sm:$0xff]
        %v700 = vld [vmem:[#allocation9 + $0x98] sm:$0xf]
        %v701 = vld [vmem:[#allocation9 + $0x9c] sm:$0xff]
        %v702 = vld [vmem:[#allocation9 + $0xa4] sm:$0xf]
        %v703 = vld [vmem:[#allocation9 + $0xa8] sm:$0xff]
        %v704 = vld [vmem:[#allocation9 + $0xb0] sm:$0xf]
        %v705 = vld [vmem:[#allocation9 + $0xb4] sm:$0xff]
        %v706 = vld [vmem:[#allocation9 + $0xbc] sm:$0xf]
        %v723 = vunpack.c.l.b16 %v659
        %v724 = vunpack.c.l.b16 %v660
        %v725 = vunpack.c.l.b16 %v661
        %v726 = vunpack.c.l.b16 %v662
        %v727 = vunpack.c.l.b16 %v663
        %v728 = vunpack.c.l.b16 %v664
        %v729 = vunpack.c.l.b16 %v665
        %v730 = vunpack.c.l.b16 %v666
        %v731 = vunpack.c.l.b16 %v667
        %v732 = vunpack.c.l.b16 %v668
        %v733 = vunpack.c.l.b16 %v669
        %v734 = vunpack.c.l.b16 %v670
        %v735 = vunpack.c.l.b16 %v671
        %v736 = vunpack.c.l.b16 %v672
        %v737 = vunpack.c.l.b16 %v673
        %v738 = vunpack.c.l.b16 %v674
        %v739 = vpack.c.b16 %v724, %v723
        %v740 = vpack.c.b16 %v726, %v725
        %v741 = vpack.c.b16 %v728, %v727
        %v742 = vpack.c.b16 %v730, %v729
        %v743 = vpack.c.b16 %v732, %v731
        %v744 = vpack.c.b16 %v734, %v733
        %v745 = vpack.c.b16 %v736, %v735
        %v746 = vpack.c.b16 %v738, %v737
        %v787 = vunpack.c.l.b16 %v675
        %v788 = vunpack.c.h.b16 %v675
        %v789 = vunpack.c.l.b16 %v676
        %v790 = vunpack.c.l.b16 %v677
        %v791 = vunpack.c.h.b16 %v677
        %v792 = vunpack.c.l.b16 %v678
        %v793 = vunpack.c.l.b16 %v679
        %v794 = vunpack.c.h.b16 %v679
        %v795 = vunpack.c.l.b16 %v680
        %v796 = vunpack.c.l.b16 %v681
        %v797 = vunpack.c.h.b16 %v681
        %v798 = vunpack.c.l.b16 %v682
        %v799 = vunpack.c.l.b16 %v683
        %v800 = vunpack.c.h.b16 %v683
        %v801 = vunpack.c.l.b16 %v684
        %v802 = vunpack.c.l.b16 %v685
        %v803 = vunpack.c.h.b16 %v685
        %v804 = vunpack.c.l.b16 %v686
        %v805 = vunpack.c.l.b16 %v687
        %v806 = vunpack.c.h.b16 %v687
        %v807 = vunpack.c.l.b16 %v688
        %v808 = vunpack.c.l.b16 %v689
        %v809 = vunpack.c.h.b16 %v689
        %v810 = vunpack.c.l.b16 %v690
        %v811 = vunpack.c.l.b16 %v691
        %v812 = vunpack.c.h.b16 %v691
        %v813 = vunpack.c.l.b16 %v692
        %v814 = vunpack.c.l.b16 %v693
        %v815 = vunpack.c.h.b16 %v693
        %v816 = vunpack.c.l.b16 %v694
        %v817 = vunpack.c.l.b16 %v695
        %v818 = vunpack.c.h.b16 %v695
        %v819 = vunpack.c.l.b16 %v696
        %v820 = vunpack.c.l.b16 %v697
        %v821 = vunpack.c.h.b16 %v697
        %v822 = vunpack.c.l.b16 %v698
        %v823 = vunpack.c.l.b16 %v699
        %v824 = vunpack.c.h.b16 %v699
        %v825 = vunpack.c.l.b16 %v700
        %v826 = vunpack.c.l.b16 %v701
        %v827 = vunpack.c.h.b16 %v701
        %v828 = vunpack.c.l.b16 %v702
        %v829 = vunpack.c.l.b16 %v703
        %v830 = vunpack.c.h.b16 %v703
        %v831 = vunpack.c.l.b16 %v704
        %v832 = vunpack.c.l.b16 %v705
        %v833 = vunpack.c.h.b16 %v705
        %v834 = vunpack.c.l.b16 %v706
        %v835 = vpack.c.b16 %v790, %v787
        %v836 = vpack.c.b16 %v791, %v788
        %v837 = vpack.c.b16 %v792, %v789
        %v838 = vpack.c.b16 %v796, %v793
        %v839 = vpack.c.b16 %v797, %v794
        %v840 = vpack.c.b16 %v798, %v795
        %v841 = vpack.c.b16 %v802, %v799
        %v842 = vpack.c.b16 %v803, %v800
        %v843 = vpack.c.b16 %v804, %v801
        %v844 = vpack.c.b16 %v808, %v805
        %v845 = vpack.c.b16 %v809, %v806
        %v846 = vpack.c.b16 %v810, %v807
        %v847 = vpack.c.b16 %v814, %v811
        %v848 = vpack.c.b16 %v815, %v812
        %v849 = vpack.c.b16 %v816, %v813
        %v850 = vpack.c.b16 %v820, %v817
        %v851 = vpack.c.b16 %v821, %v818
        %v852 = vpack.c.b16 %v822, %v819
        %v853 = vpack.c.b16 %v826, %v823
        %v854 = vpack.c.b16 %v827, %v824
        %v855 = vpack.c.b16 %v828, %v825
        %v856 = vpack.c.b16 %v832, %v829
        %v857 = vpack.c.b16 %v833, %v830
        %v858 = vpack.c.b16 %v834, %v831
        %883 = vmatpush.bf16.msra.mxu0 %v856
        %884 = vmatpush.bf16.msra.mxu0 %v853
        %885 = vmatpush.bf16.msra.mxu0 %v850
        %886 = vmatpush.bf16.msra.mxu0 %v847
        %887 = vmatpush.bf16.msra.mxu0 %v844
        %888 = vmatpush.bf16.msra.mxu0 %v841
        %889 = vmatpush.bf16.msra.mxu0 %v838
        %890 = vmatpush.bf16.msra.mxu0 %v835
        %891 = vmatmul.bf16.gmra.mxu0 %v739
        %v892 = vpop.f32.mrf.mxu0
        %v893 = vadd.f32 0.0, %v892
        %v894 = vpop.f32.mrf.mxu0
        %v895 = vadd.f32 0.0, %v894
        %896 = vmatmul.bf16.gmra.mxu0 %v740
        %v897 = vpop.f32.mrf.mxu0
        %v898 = vadd.f32 0.0, %v897
        %v899 = vpop.f32.mrf.mxu0
        %v900 = vadd.f32 0.0, %v899
        %901 = vmatmul.bf16.gmra.mxu0 %v741
        %v902 = vpop.f32.mrf.mxu0
        %v903 = vadd.f32 0.0, %v902
        %v904 = vpop.f32.mrf.mxu0
        %v905 = vadd.f32 0.0, %v904
        %906 = vmatmul.bf16.gmra.mxu0 %v742
        %v907 = vpop.f32.mrf.mxu0
        %v908 = vadd.f32 0.0, %v907
        %v909 = vpop.f32.mrf.mxu0
        %v910 = vadd.f32 0.0, %v909
        %911 = vmatmul.bf16.gmra.mxu0 %v743
        %v912 = vpop.f32.mrf.mxu0
        %v913 = vadd.f32 0.0, %v912
        %v914 = vpop.f32.mrf.mxu0
        %v915 = vadd.f32 0.0, %v914
        %916 = vmatmul.bf16.gmra.mxu0 %v744
        %v917 = vpop.f32.mrf.mxu0
        %v918 = vadd.f32 0.0, %v917
        %v919 = vpop.f32.mrf.mxu0
        %v920 = vadd.f32 0.0, %v919
        %921 = vmatmul.bf16.gmra.mxu0 %v745
        %v922 = vpop.f32.mrf.mxu0
        %v923 = vadd.f32 0.0, %v922
        %v924 = vpop.f32.mrf.mxu0
        %v925 = vadd.f32 0.0, %v924
        %926 = vmatmul.bf16.gmra.mxu0 %v746
        %v927 = vpop.f32.mrf.mxu0
        %v928 = vadd.f32 0.0, %v927
        %v929 = vpop.f32.mrf.mxu0
        %v930 = vadd.f32 0.0, %v929
        %931 = vdwg.mxu0
        %932 = vmatpush.bf16.msra.mxu0 %v857
        %933 = vmatpush.bf16.msra.mxu0 %v854
        %934 = vmatpush.bf16.msra.mxu0 %v851
        %935 = vmatpush.bf16.msra.mxu0 %v848
        %936 = vmatpush.bf16.msra.mxu0 %v845
        %937 = vmatpush.bf16.msra.mxu0 %v842
        %938 = vmatpush.bf16.msra.mxu0 %v839
        %939 = vmatpush.bf16.msra.mxu0 %v836
        %940 = vmatmul.bf16.gmra.mxu0 %v739
        %v941 = vpop.f32.mrf.mxu0
        %v942 = vadd.f32 0.0, %v941
        %v943 = vpop.f32.mrf.mxu0
        %v944 = vadd.f32 0.0, %v943
        %945 = vmatmul.bf16.gmra.mxu0 %v740
        %v946 = vpop.f32.mrf.mxu0
        %v947 = vadd.f32 0.0, %v946
        %v948 = vpop.f32.mrf.mxu0
        %v949 = vadd.f32 0.0, %v948
        %950 = vmatmul.bf16.gmra.mxu0 %v741
        %v951 = vpop.f32.mrf.mxu0
        %v952 = vadd.f32 0.0, %v951
        %v953 = vpop.f32.mrf.mxu0
        %v954 = vadd.f32 0.0, %v953
        %955 = vmatmul.bf16.gmra.mxu0 %v742
        %v956 = vpop.f32.mrf.mxu0
        %v957 = vadd.f32 0.0, %v956
        %v958 = vpop.f32.mrf.mxu0
        %v959 = vadd.f32 0.0, %v958
        %960 = vmatmul.bf16.gmra.mxu0 %v743
        %v961 = vpop.f32.mrf.mxu0
        %v962 = vadd.f32 0.0, %v961
        %v963 = vpop.f32.mrf.mxu0
        %v964 = vadd.f32 0.0, %v963
        %965 = vmatmul.bf16.gmra.mxu0 %v744
        %v966 = vpop.f32.mrf.mxu0
        %v967 = vadd.f32 0.0, %v966
        %v968 = vpop.f32.mrf.mxu0
        %v969 = vadd.f32 0.0, %v968
        %970 = vmatmul.bf16.gmra.mxu0 %v745
        %v971 = vpop.f32.mrf.mxu0
        %v972 = vadd.f32 0.0, %v971
        %v973 = vpop.f32.mrf.mxu0
        %v974 = vadd.f32 0.0, %v973
        %975 = vmatmul.bf16.gmra.mxu0 %v746
        %v976 = vpop.f32.mrf.mxu0
        %v977 = vadd.f32 0.0, %v976
        %v978 = vpop.f32.mrf.mxu0
        %v979 = vadd.f32 0.0, %v978
        %980 = vdwg.mxu0
        %981 = vmatpush.bf16.msra.mxu0 %v858
        %982 = vmatpush.bf16.msra.mxu0 %v855
        %983 = vmatpush.bf16.msra.mxu0 %v852
        %984 = vmatpush.bf16.msra.mxu0 %v849
        %985 = vmatpush.bf16.msra.mxu0 %v846
        %986 = vmatpush.bf16.msra.mxu0 %v843
        %987 = vmatpush.bf16.msra.mxu0 %v840
        %988 = vmatpush.bf16.msra.mxu0 %v837
        %989 = vmatmul.bf16.gmra.mxu0 %v739
        %v990 = vpop.f32.mrf.mxu0
        %v991 = vadd.f32 0.0, %v990
        %v992 = vpop.f32.mrf.mxu0
        %v993 = vadd.f32 0.0, %v992
        %994 = vmatmul.bf16.gmra.mxu0 %v740
        %v995 = vpop.f32.mrf.mxu0
        %v996 = vadd.f32 0.0, %v995
        %v997 = vpop.f32.mrf.mxu0
        %v998 = vadd.f32 0.0, %v997
        %999 = vmatmul.bf16.gmra.mxu0 %v741
        %v1000 = vpop.f32.mrf.mxu0
        %v1001 = vadd.f32 0.0, %v1000
        %v1002 = vpop.f32.mrf.mxu0
        %v1003 = vadd.f32 0.0, %v1002
        %1004 = vmatmul.bf16.gmra.mxu0 %v742
        %v1005 = vpop.f32.mrf.mxu0
        %v1006 = vadd.f32 0.0, %v1005
        %v1007 = vpop.f32.mrf.mxu0
        %v1008 = vadd.f32 0.0, %v1007
        %1009 = vmatmul.bf16.gmra.mxu0 %v743
        %v1010 = vpop.f32.mrf.mxu0
        %v1011 = vadd.f32 0.0, %v1010
        %v1012 = vpop.f32.mrf.mxu0
        %v1013 = vadd.f32 0.0, %v1012
        %1014 = vmatmul.bf16.gmra.mxu0 %v744
        %v1015 = vpop.f32.mrf.mxu0
        %v1016 = vadd.f32 0.0, %v1015
        %v1017 = vpop.f32.mrf.mxu0
        %v1018 = vadd.f32 0.0, %v1017
        %1019 = vmatmul.bf16.gmra.mxu0 %v745
        %v1020 = vpop.f32.mrf.mxu0
        %v1021 = vadd.f32 0.0, %v1020
        %v1022 = vpop.f32.mrf.mxu0
        %v1023 = vadd.f32 0.0, %v1022
        %1024 = vmatmul.bf16.gmra.mxu0 %v746
        %v1025 = vpop.f32.mrf.mxu0
        %v1026 = vadd.f32 0.0, %v1025
        %v1027 = vpop.f32.mrf.mxu0
        %v1028 = vadd.f32 0.0, %v1027
        %1029 = vdwg.mxu0
        %v1030 = vpack.c.bf16 %v942, %v893
        %v1031 = vpack.c.bf16 %v991, %v991
        %v1032 = vpack.c.bf16 %v944, %v895
        %v1033 = vpack.c.bf16 %v993, %v993
        %v1034 = vpack.c.bf16 %v947, %v898
        %v1035 = vpack.c.bf16 %v996, %v996
        %v1036 = vpack.c.bf16 %v949, %v900
        %v1037 = vpack.c.bf16 %v998, %v998
        %v1038 = vpack.c.bf16 %v952, %v903
        %v1039 = vpack.c.bf16 %v1001, %v1001
        %v1040 = vpack.c.bf16 %v954, %v905
        %v1041 = vpack.c.bf16 %v1003, %v1003
        %v1042 = vpack.c.bf16 %v957, %v908
        %v1043 = vpack.c.bf16 %v1006, %v1006
        %v1044 = vpack.c.bf16 %v959, %v910
        %v1045 = vpack.c.bf16 %v1008, %v1008
        %v1046 = vpack.c.bf16 %v962, %v913
        %v1047 = vpack.c.bf16 %v1011, %v1011
        %v1048 = vpack.c.bf16 %v964, %v915
        %v1049 = vpack.c.bf16 %v1013, %v1013
        %v1050 = vpack.c.bf16 %v967, %v918
        %v1051 = vpack.c.bf16 %v1016, %v1016
        %v1052 = vpack.c.bf16 %v969, %v920
        %v1053 = vpack.c.bf16 %v1018, %v1018
        %v1054 = vpack.c.bf16 %v972, %v923
        %v1055 = vpack.c.bf16 %v1021, %v1021
        %v1056 = vpack.c.bf16 %v974, %v925
        %v1057 = vpack.c.bf16 %v1023, %v1023
        %v1058 = vpack.c.bf16 %v977, %v928
        %v1059 = vpack.c.bf16 %v1026, %v1026
        %v1060 = vpack.c.bf16 %v979, %v930
        %v1061 = vpack.c.bf16 %v1028, %v1028
        %1062 = vst [vmem:[#allocation2] sm:$0xf] %v1030
        %1063 = vst [vmem:[#allocation2 + $0x4] sm:$0xf] %v1032
        %1064 = vst [vmem:[#allocation2 + $0x8] sm:$0xf] %v1034
        %1065 = vst [vmem:[#allocation2 + $0xc] sm:$0xf] %v1036
        %1066 = vst [vmem:[#allocation2 + $0x10] sm:$0xf] %v1038
        %1067 = vst [vmem:[#allocation2 + $0x14] sm:$0xf] %v1040
        %1068 = vst [vmem:[#allocation2 + $0x18] sm:$0xf] %v1042
        %1069 = vst [vmem:[#allocation2 + $0x1c] sm:$0xf] %v1044
        %1070 = vst [vmem:[#allocation2 + $0x20] sm:$0xf] %v1046
        %1071 = vst [vmem:[#allocation2 + $0x24] sm:$0xf] %v1048
        %1072 = vst [vmem:[#allocation2 + $0x28] sm:$0xf] %v1050
        %1073 = vst [vmem:[#allocation2 + $0x2c] sm:$0xf] %v1052
        %1074 = vst [vmem:[#allocation2 + $0x30] sm:$0xf] %v1054
        %1075 = vst [vmem:[#allocation2 + $0x34] sm:$0xf] %v1056
        %1076 = vst [vmem:[#allocation2 + $0x38] sm:$0xf] %v1058
        %1077 = vst [vmem:[#allocation2 + $0x3c] sm:$0xf] %v1060
        %v1078 = vld [vmem:[#allocation11] sm:$0xf]
        %v1079 = vld [vmem:[#allocation11 + $0x4] sm:$0xf]
        %v1080 = vld [vmem:[#allocation11 + $0x8] sm:$0xf]
        %v1081 = vld [vmem:[#allocation11 + $0xc] sm:$0xf]
        %v1082 = vld [vmem:[#allocation11 + $0x10] sm:$0xf]
        %v1083 = vld [vmem:[#allocation11 + $0x14] sm:$0xf]
        %v1084 = vld [vmem:[#allocation11 + $0x18] sm:$0xf]
        %v1085 = vld [vmem:[#allocation11 + $0x1c] sm:$0xf]
        %v1086 = vld [vmem:[#allocation11 + $0x20] sm:$0xf]
        %v1087 = vld [vmem:[#allocation11 + $0x24] sm:$0xf]
        %v1088 = vld [vmem:[#allocation11 + $0x28] sm:$0xf]
        %v1089 = vld [vmem:[#allocation11 + $0x2c] sm:$0xf]
        %v1090 = vld [vmem:[#allocation11 + $0x30] sm:$0xf]
        %v1091 = vld [vmem:[#allocation11 + $0x34] sm:$0xf]
        %v1092 = vld [vmem:[#allocation11 + $0x38] sm:$0xf]
        %v1093 = vld [vmem:[#allocation11 + $0x3c] sm:$0xf]
        %v1094 = vld [vmem:[%s7] sm:$0x1]
        %v1096 = vperm.slane %v1094, 0
        %v1098 = vld [vmem:[%s8] sm:$0x1]
        %v1100 = vperm.slane %v1098, 0
        %v1102 = vld [vmem:[#allocation2] sm:$0xf]
        %v1103 = vld [vmem:[#allocation2 + $0x4] sm:$0xf]
        %v1104 = vld [vmem:[#allocation2 + $0x8] sm:$0xf]
        %v1105 = vld [vmem:[#allocation2 + $0xc] sm:$0xf]
        %v1106 = vld [vmem:[#allocation2 + $0x10] sm:$0xf]
        %v1107 = vld [vmem:[#allocation2 + $0x14] sm:$0xf]
        %v1108 = vld [vmem:[#allocation2 + $0x18] sm:$0xf]
        %v1109 = vld [vmem:[#allocation2 + $0x1c] sm:$0xf]
        %v1110 = vld [vmem:[#allocation2 + $0x20] sm:$0xf]
        %v1111 = vld [vmem:[#allocation2 + $0x24] sm:$0xf]
        %v1112 = vld [vmem:[#allocation2 + $0x28] sm:$0xf]
        %v1113 = vld [vmem:[#allocation2 + $0x2c] sm:$0xf]
        %v1114 = vld [vmem:[#allocation2 + $0x30] sm:$0xf]
        %v1115 = vld [vmem:[#allocation2 + $0x34] sm:$0xf]
        %v1116 = vld [vmem:[#allocation2 + $0x38] sm:$0xf]
        %v1117 = vld [vmem:[#allocation2 + $0x3c] sm:$0xf]
        %v1134 = vrot.slane %v1030, 4
        %v1135 = vrot.slane %v1032, 4
        %v1136 = vrot.slane %v1034, 4
        %v1137 = vrot.slane %v1036, 4
        %v1138 = vrot.slane %v1038, 4
        %v1139 = vrot.slane %v1040, 4
        %v1140 = vrot.slane %v1042, 4
        %v1141 = vrot.slane %v1044, 4
        %v1142 = vrot.slane %v1046, 4
        %v1143 = vrot.slane %v1048, 4
        %v1144 = vrot.slane %v1050, 4
        %v1145 = vrot.slane %v1052, 4
        %v1146 = vrot.slane %v1054, 4
        %v1147 = vrot.slane %v1056, 4
        %v1148 = vrot.slane %v1058, 4
        %v1149 = vrot.slane %v1060, 4
        %v1166 = vunpack.c.l.b16 %v1102
        %v1167 = vunpack.c.l.b16 %v1103
        %v1168 = vunpack.c.l.b16 %v1104
        %v1169 = vunpack.c.l.b16 %v1105
        %v1170 = vunpack.c.l.b16 %v1106
        %v1171 = vunpack.c.l.b16 %v1107
        %v1172 = vunpack.c.l.b16 %v1108
        %v1173 = vunpack.c.l.b16 %v1109
        %v1174 = vunpack.c.l.b16 %v1110
        %v1175 = vunpack.c.l.b16 %v1111
        %v1176 = vunpack.c.l.b16 %v1112
        %v1177 = vunpack.c.l.b16 %v1113
        %v1178 = vunpack.c.l.b16 %v1114
        %v1179 = vunpack.c.l.b16 %v1115
        %v1180 = vunpack.c.l.b16 %v1116
        %v1181 = vunpack.c.l.b16 %v1117
        %v1182 = vpack.c.b16 %v1167, %v1166
        %v1183 = vpack.c.b16 %v1169, %v1168
        %v1184 = vpack.c.b16 %v1171, %v1170
        %v1185 = vpack.c.b16 %v1173, %v1172
        %v1186 = vpack.c.b16 %v1175, %v1174
        %v1187 = vpack.c.b16 %v1177, %v1176
        %v1188 = vpack.c.b16 %v1179, %v1178
        %v1189 = vpack.c.b16 %v1181, %v1180
        %v1198 = vunpack.c.l.b16 %v1134
        %v1199 = vunpack.c.l.b16 %v1135
        %v1200 = vunpack.c.l.b16 %v1136
        %v1201 = vunpack.c.l.b16 %v1137
        %v1202 = vunpack.c.l.b16 %v1138
        %v1203 = vunpack.c.l.b16 %v1139
        %v1204 = vunpack.c.l.b16 %v1140
        %v1205 = vunpack.c.l.b16 %v1141
        %v1206 = vunpack.c.l.b16 %v1142
        %v1207 = vunpack.c.l.b16 %v1143
        %v1208 = vunpack.c.l.b16 %v1144
        %v1209 = vunpack.c.l.b16 %v1145
        %v1210 = vunpack.c.l.b16 %v1146
        %v1211 = vunpack.c.l.b16 %v1147
        %v1212 = vunpack.c.l.b16 %v1148
        %v1213 = vunpack.c.l.b16 %v1149
        %v1214 = vpack.c.b16 %v1199, %v1198
        %v1215 = vpack.c.b16 %v1201, %v1200
        %v1216 = vpack.c.b16 %v1203, %v1202
        %v1217 = vpack.c.b16 %v1205, %v1204
        %v1218 = vpack.c.b16 %v1207, %v1206
        %v1219 = vpack.c.b16 %v1209, %v1208
        %v1220 = vpack.c.b16 %v1211, %v1210
        %v1221 = vpack.c.b16 %v1213, %v1212
        %1230 = vmatpush.bf16.xpose.msra.mxu0 %v1221
        %1231 = vmatpush.bf16.xpose.msra.mxu0 %v1220
        %1232 = vmatpush.bf16.xpose.msra.mxu0 %v1219
        %1233 = vmatpush.bf16.xpose.msra.mxu0 %v1218
        %1234 = vmatpush.bf16.xpose.msra.mxu0 %v1217
        %1235 = vmatpush.bf16.xpose.msra.mxu0 %v1216
        %1236 = vmatpush.bf16.xpose.msra.mxu0 %v1215
        %1237 = vmatpush.bf16.xpose.msra.mxu0 %v1214
        %1238 = vmatmul.bf16.gmra.mxu0 %v1182
        %v1239 = vpop.f32.mrf.mxu0
        %v1240 = vadd.f32 %v1100, %v1239
        %v1241 = vpop.f32.mrf.mxu0
        %v1242 = vadd.f32 %v1100, %v1241
        %1243 = vmatmul.bf16.gmra.mxu0 %v1183
        %v1244 = vpop.f32.mrf.mxu0
        %v1245 = vadd.f32 %v1100, %v1244
        %v1246 = vpop.f32.mrf.mxu0
        %v1247 = vadd.f32 %v1100, %v1246
        %1248 = vmatmul.bf16.gmra.mxu0 %v1184
        %v1249 = vpop.f32.mrf.mxu0
        %v1250 = vadd.f32 %v1100, %v1249
        %v1251 = vpop.f32.mrf.mxu0
        %v1252 = vadd.f32 %v1100, %v1251
        %1253 = vmatmul.bf16.gmra.mxu0 %v1185
        %v1254 = vpop.f32.mrf.mxu0
        %v1255 = vadd.f32 %v1100, %v1254
        %v1256 = vpop.f32.mrf.mxu0
        %v1257 = vadd.f32 %v1100, %v1256
        %1258 = vmatmul.bf16.gmra.mxu0 %v1186
        %v1259 = vpop.f32.mrf.mxu0
        %v1260 = vadd.f32 %v1100, %v1259
        %v1261 = vpop.f32.mrf.mxu0
        %v1262 = vadd.f32 %v1100, %v1261
        %1263 = vmatmul.bf16.gmra.mxu0 %v1187
        %v1264 = vpop.f32.mrf.mxu0
        %v1265 = vadd.f32 %v1100, %v1264
        %v1266 = vpop.f32.mrf.mxu0
        %v1267 = vadd.f32 %v1100, %v1266
        %1268 = vmatmul.bf16.gmra.mxu0 %v1188
        %v1269 = vpop.f32.mrf.mxu0
        %v1270 = vadd.f32 %v1100, %v1269
        %v1271 = vpop.f32.mrf.mxu0
        %v1272 = vadd.f32 %v1100, %v1271
        %1273 = vmatmul.bf16.gmra.mxu0 %v1189
        %v1274 = vpop.f32.mrf.mxu0
        %v1275 = vadd.f32 %v1100, %v1274
        %v1276 = vpop.f32.mrf.mxu0
        %v1277 = vadd.f32 %v1100, %v1276
        %1278 = vdwg.mxu0
        %1279 = vmax.xlane.f32.xlu0 %v1240
        %v1280 = vpop.xlane.xlu0 %1279
        %1281 = vmax.xlane.f32.xlu0 %v1242
        %v1282 = vpop.xlane.xlu0 %1281
        %1283 = vmax.xlane.f32.xlu0 %v1245
        %v1284 = vpop.xlane.xlu0 %1283
        %1285 = vmax.xlane.f32.xlu0 %v1247
        %v1286 = vpop.xlane.xlu0 %1285
        %1287 = vmax.xlane.f32.xlu0 %v1250
        %v1288 = vpop.xlane.xlu0 %1287
        %1289 = vmax.xlane.f32.xlu0 %v1252
        %v1290 = vpop.xlane.xlu0 %1289
        %1291 = vmax.xlane.f32.xlu0 %v1255
        %v1292 = vpop.xlane.xlu0 %1291
        %1293 = vmax.xlane.f32.xlu0 %v1257
        %v1294 = vpop.xlane.xlu0 %1293
        %1295 = vmax.xlane.f32.xlu0 %v1260
        %v1296 = vpop.xlane.xlu0 %1295
        %1297 = vmax.xlane.f32.xlu0 %v1262
        %v1298 = vpop.xlane.xlu0 %1297
        %1299 = vmax.xlane.f32.xlu0 %v1265
        %v1300 = vpop.xlane.xlu0 %1299
        %1301 = vmax.xlane.f32.xlu0 %v1267
        %v1302 = vpop.xlane.xlu0 %1301
        %1303 = vmax.xlane.f32.xlu0 %v1270
        %v1304 = vpop.xlane.xlu0 %1303
        %1305 = vmax.xlane.f32.xlu0 %v1272
        %v1306 = vpop.xlane.xlu0 %1305
        %1307 = vmax.xlane.f32.xlu0 %v1275
        %v1308 = vpop.xlane.xlu0 %1307
        %1309 = vmax.xlane.f32.xlu0 %v1277
        %v1310 = vpop.xlane.xlu0 %1309
        %v1311 = vsub.f32 %v1240, %v1280
        %v1312 = vsub.f32 %v1242, %v1282
        %v1313 = vsub.f32 %v1245, %v1284
        %v1314 = vsub.f32 %v1247, %v1286
        %v1315 = vsub.f32 %v1250, %v1288
        %v1316 = vsub.f32 %v1252, %v1290
        %v1317 = vsub.f32 %v1255, %v1292
        %v1318 = vsub.f32 %v1257, %v1294
        %v1319 = vsub.f32 %v1260, %v1296
        %v1320 = vsub.f32 %v1262, %v1298
        %v1321 = vsub.f32 %v1265, %v1300
        %v1322 = vsub.f32 %v1267, %v1302
        %v1323 = vsub.f32 %v1270, %v1304
        %v1324 = vsub.f32 %v1272, %v1306
        %v1325 = vsub.f32 %v1275, %v1308
        %v1326 = vsub.f32 %v1277, %v1310
        %v1327 = vmul.f32 %v1311, 1.442695
        %v1328 = vpow.pop %v1327
        %v1329 = vmul.f32 %v1312, 1.442695
        %v1330 = vpow.pop %v1329
        %v1331 = vmul.f32 %v1313, 1.442695
        %v1332 = vpow.pop %v1331
        %v1333 = vmul.f32 %v1314, 1.442695
        %v1334 = vpow.pop %v1333
        %v1335 = vmul.f32 %v1315, 1.442695
        %v1336 = vpow.pop %v1335
        %v1337 = vmul.f32 %v1316, 1.442695
        %v1338 = vpow.pop %v1337
        %v1339 = vmul.f32 %v1317, 1.442695
        %v1340 = vpow.pop %v1339
        %v1341 = vmul.f32 %v1318, 1.442695
        %v1342 = vpow.pop %v1341
        %v1343 = vmul.f32 %v1319, 1.442695
        %v1344 = vpow.pop %v1343
        %v1345 = vmul.f32 %v1320, 1.442695
        %v1346 = vpow.pop %v1345
        %v1347 = vmul.f32 %v1321, 1.442695
        %v1348 = vpow.pop %v1347
        %v1349 = vmul.f32 %v1322, 1.442695
        %v1350 = vpow.pop %v1349
        %v1351 = vmul.f32 %v1323, 1.442695
        %v1352 = vpow.pop %v1351
        %v1353 = vmul.f32 %v1324, 1.442695
        %v1354 = vpow.pop %v1353
        %v1355 = vmul.f32 %v1325, 1.442695
        %v1356 = vpow.pop %v1355
        %v1357 = vmul.f32 %v1326, 1.442695
        %v1358 = vpow.pop %v1357
        %1359 = vadd.xlane.f32.xlu0 %v1328
        %v1360 = vpop.xlane.xlu0 %1359
        %1361 = vadd.xlane.f32.xlu0 %v1330
        %v1362 = vpop.xlane.xlu0 %1361
        %1363 = vadd.xlane.f32.xlu0 %v1332
        %v1364 = vpop.xlane.xlu0 %1363
        %1365 = vadd.xlane.f32.xlu0 %v1334
        %v1366 = vpop.xlane.xlu0 %1365
        %1367 = vadd.xlane.f32.xlu0 %v1336
        %v1368 = vpop.xlane.xlu0 %1367
        %1369 = vadd.xlane.f32.xlu0 %v1338
        %v1370 = vpop.xlane.xlu0 %1369
        %1371 = vadd.xlane.f32.xlu0 %v1340
        %v1372 = vpop.xlane.xlu0 %1371
        %1373 = vadd.xlane.f32.xlu0 %v1342
        %v1374 = vpop.xlane.xlu0 %1373
        %1375 = vadd.xlane.f32.xlu0 %v1344
        %v1376 = vpop.xlane.xlu0 %1375
        %1377 = vadd.xlane.f32.xlu0 %v1346
        %v1378 = vpop.xlane.xlu0 %1377
        %1379 = vadd.xlane.f32.xlu0 %v1348
        %v1380 = vpop.xlane.xlu0 %1379
        %1381 = vadd.xlane.f32.xlu0 %v1350
        %v1382 = vpop.xlane.xlu0 %1381
        %1383 = vadd.xlane.f32.xlu0 %v1352
        %v1384 = vpop.xlane.xlu0 %1383
        %1385 = vadd.xlane.f32.xlu0 %v1354
        %v1386 = vpop.xlane.xlu0 %1385
        %1387 = vadd.xlane.f32.xlu0 %v1356
        %v1388 = vpop.xlane.xlu0 %1387
        %1389 = vadd.xlane.f32.xlu0 %v1358
        %v1390 = vpop.xlane.xlu0 %1389
        %v1391 = vpack.c.bf16 %v1328, %v1328
        %v1392 = vpack.c.bf16 %v1330, %v1330
        %v1393 = vpack.c.bf16 %v1332, %v1332
        %v1394 = vpack.c.bf16 %v1334, %v1334
        %v1395 = vpack.c.bf16 %v1336, %v1336
        %v1396 = vpack.c.bf16 %v1338, %v1338
        %v1397 = vpack.c.bf16 %v1340, %v1340
        %v1398 = vpack.c.bf16 %v1342, %v1342
        %v1399 = vpack.c.bf16 %v1344, %v1344
        %v1400 = vpack.c.bf16 %v1346, %v1346
        %v1401 = vpack.c.bf16 %v1348, %v1348
        %v1402 = vpack.c.bf16 %v1350, %v1350
        %v1403 = vpack.c.bf16 %v1352, %v1352
        %v1404 = vpack.c.bf16 %v1354, %v1354
        %v1405 = vpack.c.bf16 %v1356, %v1356
        %v1406 = vpack.c.bf16 %v1358, %v1358
        %v1423 = vunpack.c.l.b16 %v1391
        %v1424 = vunpack.c.l.b16 %v1392
        %v1425 = vunpack.c.l.b16 %v1393
        %v1426 = vunpack.c.l.b16 %v1394
        %v1427 = vunpack.c.l.b16 %v1395
        %v1428 = vunpack.c.l.b16 %v1396
        %v1429 = vunpack.c.l.b16 %v1397
        %v1430 = vunpack.c.l.b16 %v1398
        %v1431 = vunpack.c.l.b16 %v1399
        %v1432 = vunpack.c.l.b16 %v1400
        %v1433 = vunpack.c.l.b16 %v1401
        %v1434 = vunpack.c.l.b16 %v1402
        %v1435 = vunpack.c.l.b16 %v1403
        %v1436 = vunpack.c.l.b16 %v1404
        %v1437 = vunpack.c.l.b16 %v1405
        %v1438 = vunpack.c.l.b16 %v1406
        %v1439 = vpack.c.b16 %v1424, %v1423
        %v1440 = vpack.c.b16 %v1426, %v1425
        %v1441 = vpack.c.b16 %v1428, %v1427
        %v1442 = vpack.c.b16 %v1430, %v1429
        %v1443 = vpack.c.b16 %v1432, %v1431
        %v1444 = vpack.c.b16 %v1434, %v1433
        %v1445 = vpack.c.b16 %v1436, %v1435
        %v1446 = vpack.c.b16 %v1438, %v1437
        %v1471 = vunpack.c.l.b16 %v1031
        %v1472 = vunpack.c.l.b16 %v1033
        %v1473 = vunpack.c.l.b16 %v1035
        %v1474 = vunpack.c.l.b16 %v1037
        %v1475 = vunpack.c.l.b16 %v1039
        %v1476 = vunpack.c.l.b16 %v1041
        %v1477 = vunpack.c.l.b16 %v1043
        %v1478 = vunpack.c.l.b16 %v1045
        %v1479 = vunpack.c.l.b16 %v1047
        %v1480 = vunpack.c.l.b16 %v1049
        %v1481 = vunpack.c.l.b16 %v1051
        %v1482 = vunpack.c.l.b16 %v1053
        %v1483 = vunpack.c.l.b16 %v1055
        %v1484 = vunpack.c.l.b16 %v1057
        %v1485 = vunpack.c.l.b16 %v1059
        %v1486 = vunpack.c.l.b16 %v1061
        %v1487 = vpack.c.b16 %v1472, %v1471
        %v1488 = vpack.c.b16 %v1474, %v1473
        %v1489 = vpack.c.b16 %v1476, %v1475
        %v1490 = vpack.c.b16 %v1478, %v1477
        %v1491 = vpack.c.b16 %v1480, %v1479
        %v1492 = vpack.c.b16 %v1482, %v1481
        %v1493 = vpack.c.b16 %v1484, %v1483
        %v1494 = vpack.c.b16 %v1486, %v1485
        %1503 = vmatpush.bf16.msra.mxu0 %v1494
        %1504 = vmatpush.bf16.msra.mxu0 %v1493
        %1505 = vmatpush.bf16.msra.mxu0 %v1492
        %1506 = vmatpush.bf16.msra.mxu0 %v1491
        %1507 = vmatpush.bf16.msra.mxu0 %v1490
        %1508 = vmatpush.bf16.msra.mxu0 %v1489
        %1509 = vmatpush.bf16.msra.mxu0 %v1488
        %1510 = vmatpush.bf16.msra.mxu0 %v1487
        %1511 = vmatmul.bf16.gmra.mxu0 %v1439
        %v1512 = vpop.f32.mrf.mxu0
        %v1513 = vadd.f32 0.0, %v1512
        %v1514 = vpop.f32.mrf.mxu0
        %v1515 = vadd.f32 0.0, %v1514
        %1516 = vmatmul.bf16.gmra.mxu0 %v1440
        %v1517 = vpop.f32.mrf.mxu0
        %v1518 = vadd.f32 0.0, %v1517
        %v1519 = vpop.f32.mrf.mxu0
        %v1520 = vadd.f32 0.0, %v1519
        %1521 = vmatmul.bf16.gmra.mxu0 %v1441
        %v1522 = vpop.f32.mrf.mxu0
        %v1523 = vadd.f32 0.0, %v1522
        %v1524 = vpop.f32.mrf.mxu0
        %v1525 = vadd.f32 0.0, %v1524
        %1526 = vmatmul.bf16.gmra.mxu0 %v1442
        %v1527 = vpop.f32.mrf.mxu0
        %v1528 = vadd.f32 0.0, %v1527
        %v1529 = vpop.f32.mrf.mxu0
        %v1530 = vadd.f32 0.0, %v1529
        %1531 = vmatmul.bf16.gmra.mxu0 %v1443
        %v1532 = vpop.f32.mrf.mxu0
        %v1533 = vadd.f32 0.0, %v1532
        %v1534 = vpop.f32.mrf.mxu0
        %v1535 = vadd.f32 0.0, %v1534
        %1536 = vmatmul.bf16.gmra.mxu0 %v1444
        %v1537 = vpop.f32.mrf.mxu0
        %v1538 = vadd.f32 0.0, %v1537
        %v1539 = vpop.f32.mrf.mxu0
        %v1540 = vadd.f32 0.0, %v1539
        %1541 = vmatmul.bf16.gmra.mxu0 %v1445
        %v1542 = vpop.f32.mrf.mxu0
        %v1543 = vadd.f32 0.0, %v1542
        %v1544 = vpop.f32.mrf.mxu0
        %v1545 = vadd.f32 0.0, %v1544
        %1546 = vmatmul.bf16.gmra.mxu0 %v1446
        %v1547 = vpop.f32.mrf.mxu0
        %v1548 = vadd.f32 0.0, %v1547
        %v1549 = vpop.f32.mrf.mxu0
        %v1550 = vadd.f32 0.0, %v1549
        %1551 = vdwg.mxu0
        %v1552 = vrcp.pop %v1360
        %v1553 = vrcp.pop %v1362
        %v1554 = vrcp.pop %v1364
        %v1555 = vrcp.pop %v1366
        %v1556 = vrcp.pop %v1368
        %v1557 = vrcp.pop %v1370
        %v1558 = vrcp.pop %v1372
        %v1559 = vrcp.pop %v1374
        %v1560 = vrcp.pop %v1376
        %v1561 = vrcp.pop %v1378
        %v1562 = vrcp.pop %v1380
        %v1563 = vrcp.pop %v1382
        %v1564 = vrcp.pop %v1384
        %v1565 = vrcp.pop %v1386
        %v1566 = vrcp.pop %v1388
        %v1567 = vrcp.pop %v1390
        %v1568 = vmul.f32 %v1513, %v1552
        %v1569 = vmul.f32 %v1515, %v1553
        %v1570 = vmul.f32 %v1518, %v1554
        %v1571 = vmul.f32 %v1520, %v1555
        %v1572 = vmul.f32 %v1523, %v1556
        %v1573 = vmul.f32 %v1525, %v1557
        %v1574 = vmul.f32 %v1528, %v1558
        %v1575 = vmul.f32 %v1530, %v1559
        %v1576 = vmul.f32 %v1533, %v1560
        %v1577 = vmul.f32 %v1535, %v1561
        %v1578 = vmul.f32 %v1538, %v1562
        %v1579 = vmul.f32 %v1540, %v1563
        %v1580 = vmul.f32 %v1543, %v1564
        %v1581 = vmul.f32 %v1545, %v1565
        %v1582 = vmul.f32 %v1548, %v1566
        %v1583 = vmul.f32 %v1550, %v1567
        %v1584 = vpack.c.bf16 %v1569, %v1568
        %v1585 = vpack.c.bf16 %v1571, %v1570
        %v1586 = vpack.c.bf16 %v1573, %v1572
        %v1587 = vpack.c.bf16 %v1575, %v1574
        %v1588 = vpack.c.bf16 %v1577, %v1576
        %v1589 = vpack.c.bf16 %v1579, %v1578
        %v1590 = vpack.c.bf16 %v1581, %v1580
        %v1591 = vpack.c.bf16 %v1583, %v1582
        %v1608 = vunpack.c.l.b16 %v1078
        %v1609 = vunpack.c.l.b16 %v1079
        %v1610 = vunpack.c.l.b16 %v1080
        %v1611 = vunpack.c.l.b16 %v1081
        %v1612 = vunpack.c.l.b16 %v1082
        %v1613 = vunpack.c.l.b16 %v1083
        %v1614 = vunpack.c.l.b16 %v1084
        %v1615 = vunpack.c.l.b16 %v1085
        %v1616 = vunpack.c.l.b16 %v1086
        %v1617 = vunpack.c.l.b16 %v1087
        %v1618 = vunpack.c.l.b16 %v1088
        %v1619 = vunpack.c.l.b16 %v1089
        %v1620 = vunpack.c.l.b16 %v1090
        %v1621 = vunpack.c.l.b16 %v1091
        %v1622 = vunpack.c.l.b16 %v1092
        %v1623 = vunpack.c.l.b16 %v1093
        %v1624 = vpack.c.b16 %v1609, %v1608
        %v1625 = vpack.c.b16 %v1611, %v1610
        %v1626 = vpack.c.b16 %v1613, %v1612
        %v1627 = vpack.c.b16 %v1615, %v1614
        %v1628 = vpack.c.b16 %v1617, %v1616
        %v1629 = vpack.c.b16 %v1619, %v1618
        %v1630 = vpack.c.b16 %v1621, %v1620
        %v1631 = vpack.c.b16 %v1623, %v1622
        %1640 = vmatpush.bf16.msra.mxu0 %v1631
        %1641 = vmatpush.bf16.msra.mxu0 %v1630
        %1642 = vmatpush.bf16.msra.mxu0 %v1629
        %1643 = vmatpush.bf16.msra.mxu0 %v1628
        %1644 = vmatpush.bf16.msra.mxu0 %v1627
        %1645 = vmatpush.bf16.msra.mxu0 %v1626
        %1646 = vmatpush.bf16.msra.mxu0 %v1625
        %1647 = vmatpush.bf16.msra.mxu0 %v1624
        %1648 = vmatmul.bf16.gmra.mxu0 %v1584
        %v1649 = vpop.f32.mrf.mxu0
        %v1650 = vadd.f32 0.0, %v1649
        %v1651 = vpop.f32.mrf.mxu0
        %v1652 = vadd.f32 0.0, %v1651
        %1653 = vmatmul.bf16.gmra.mxu0 %v1585
        %v1654 = vpop.f32.mrf.mxu0
        %v1655 = vadd.f32 0.0, %v1654
        %v1656 = vpop.f32.mrf.mxu0
        %v1657 = vadd.f32 0.0, %v1656
        %1658 = vmatmul.bf16.gmra.mxu0 %v1586
        %v1659 = vpop.f32.mrf.mxu0
        %v1660 = vadd.f32 0.0, %v1659
        %v1661 = vpop.f32.mrf.mxu0
        %v1662 = vadd.f32 0.0, %v1661
        %1663 = vmatmul.bf16.gmra.mxu0 %v1587
        %v1664 = vpop.f32.mrf.mxu0
        %v1665 = vadd.f32 0.0, %v1664
        %v1666 = vpop.f32.mrf.mxu0
        %v1667 = vadd.f32 0.0, %v1666
        %1668 = vmatmul.bf16.gmra.mxu0 %v1588
        %v1669 = vpop.f32.mrf.mxu0
        %v1670 = vadd.f32 0.0, %v1669
        %v1671 = vpop.f32.mrf.mxu0
        %v1672 = vadd.f32 0.0, %v1671
        %1673 = vmatmul.bf16.gmra.mxu0 %v1589
        %v1674 = vpop.f32.mrf.mxu0
        %v1675 = vadd.f32 0.0, %v1674
        %v1676 = vpop.f32.mrf.mxu0
        %v1677 = vadd.f32 0.0, %v1676
        %1678 = vmatmul.bf16.gmra.mxu0 %v1590
        %v1679 = vpop.f32.mrf.mxu0
        %v1680 = vadd.f32 0.0, %v1679
        %v1681 = vpop.f32.mrf.mxu0
        %v1682 = vadd.f32 0.0, %v1681
        %1683 = vmatmul.bf16.gmra.mxu0 %v1591
        %v1684 = vpop.f32.mrf.mxu0
        %v1685 = vadd.f32 0.0, %v1684
        %v1686 = vpop.f32.mrf.mxu0
        %v1687 = vadd.f32 0.0, %v1686
        %1688 = vdwg.mxu0
        %v1689 = vld [vmem:[%s363] sm:$0xff]
        %v1690 = vld [vmem:[%s363 + $0x8] sm:$0xff]
        %v1691 = vld [vmem:[%s363 + $0x10] sm:$0xff]
        %v1692 = vld [vmem:[%s363 + $0x18] sm:$0xff]
        %v1693 = vld [vmem:[%s363 + $0x20] sm:$0xff]
        %v1694 = vld [vmem:[%s363 + $0x28] sm:$0xff]
        %v1695 = vld [vmem:[%s363 + $0x30] sm:$0xff]
        %v1696 = vld [vmem:[%s363 + $0x38] sm:$0xff]
        %v1697 = vld [vmem:[%s363 + $0x40] sm:$0xff]
        %v1698 = vld [vmem:[%s363 + $0x48] sm:$0xff]
        %v1699 = vld [vmem:[%s363 + $0x50] sm:$0xff]
        %v1700 = vld [vmem:[%s363 + $0x58] sm:$0xff]
        %v1701 = vld [vmem:[%s363 + $0x60] sm:$0xff]
        %v1702 = vld [vmem:[%s363 + $0x68] sm:$0xff]
        %v1703 = vld [vmem:[%s363 + $0x70] sm:$0xff]
        %v1704 = vld [vmem:[%s363 + $0x78] sm:$0xff]
        %v1705 = vadd.f32 %v1650, %v1096
        %v1706 = vadd.f32 %v1652, %v1096
        %v1707 = vadd.f32 %v1655, %v1096
        %v1708 = vadd.f32 %v1657, %v1096
        %v1709 = vadd.f32 %v1660, %v1096
        %v1710 = vadd.f32 %v1662, %v1096
        %v1711 = vadd.f32 %v1665, %v1096
        %v1712 = vadd.f32 %v1667, %v1096
        %v1713 = vadd.f32 %v1670, %v1096
        %v1714 = vadd.f32 %v1672, %v1096
        %v1715 = vadd.f32 %v1675, %v1096
        %v1716 = vadd.f32 %v1677, %v1096
        %v1717 = vadd.f32 %v1680, %v1096
        %v1718 = vadd.f32 %v1682, %v1096
        %v1719 = vadd.f32 %v1685, %v1096
        %v1720 = vadd.f32 %v1687, %v1096
        %v1721 = vadd.f32 %v1705, %v1689
        %v1722 = vadd.f32 %v1706, %v1690
        %v1723 = vadd.f32 %v1707, %v1691
        %v1724 = vadd.f32 %v1708, %v1692
        %v1725 = vadd.f32 %v1709, %v1693
        %v1726 = vadd.f32 %v1710, %v1694
        %v1727 = vadd.f32 %v1711, %v1695
        %v1728 = vadd.f32 %v1712, %v1696
        %v1729 = vadd.f32 %v1713, %v1697
        %v1730 = vadd.f32 %v1714, %v1698
        %v1731 = vadd.f32 %v1715, %v1699
        %v1732 = vadd.f32 %v1716, %v1700
        %v1733 = vadd.f32 %v1717, %v1701
        %v1734 = vadd.f32 %v1718, %v1702
        %v1735 = vadd.f32 %v1719, %v1703
        %v1736 = vadd.f32 %v1720, %v1704
        %1737 = vst [vmem:[%s418] sm:$0xff] %v1721
        %1738 = vst [vmem:[%s418 + $0x8] sm:$0xff] %v1722
        %1739 = vst [vmem:[%s418 + $0x10] sm:$0xff] %v1723
        %1740 = vst [vmem:[%s418 + $0x18] sm:$0xff] %v1724
        %1741 = vst [vmem:[%s418 + $0x20] sm:$0xff] %v1725
        %1742 = vst [vmem:[%s418 + $0x28] sm:$0xff] %v1726
        %1743 = vst [vmem:[%s418 + $0x30] sm:$0xff] %v1727
        %1744 = vst [vmem:[%s418 + $0x38] sm:$0xff] %v1728
        %1745 = vst [vmem:[%s418 + $0x40] sm:$0xff] %v1729
        %1746 = vst [vmem:[%s418 + $0x48] sm:$0xff] %v1730
        %1747 = vst [vmem:[%s418 + $0x50] sm:$0xff] %v1731
        %1748 = vst [vmem:[%s418 + $0x58] sm:$0xff] %v1732
        %1749 = vst [vmem:[%s418 + $0x60] sm:$0xff] %v1733
        %1750 = vst [vmem:[%s418 + $0x68] sm:$0xff] %v1734
        %1751 = vst [vmem:[%s418 + $0x70] sm:$0xff] %v1735
        %1752 = vst [vmem:[%s418 + $0x78] sm:$0xff] %v1736
        %s1753 = sand.u32 %s230, 1
        %s1754 = scalar_lea.sflag [#allocation5], %s1753
        %s1755 = sand.u32 %s230, 1
        %s1756 = smul.addr %s1755, 128
        %s1757 = scalar_lea.vmem [#allocation12], %s1756
        // Predicated region
        $region77: #{tpu_custom_call.1} parent=55 // pred_check
          %p1758 = pneg %p240
        $region78: #{tpu_custom_call.1} parent=55 // pred_check_branch
          %1760 = sbr.rel (%p1758) target = $region80
        $region79: #{tpu_custom_call.1} parent=55 // pred_region
          %1762 = vsyncadd %s1754, 0
          %s1763 = smul.addr %s28, 16
          %s1764 = smul.addr %s1763, 8
          %s1765 = scalar_lea.hbm %s9, %s1764
          %s1766 = sshll.u32 %s1757, 4
          %s1767 = int_to_ptr.vmem [resolvable:$true] %s1766
          %s1768 = sshll.u32 %s1765, 4
          %s1769 = int_to_ptr.hbm [resolvable:$true] %s1768
          %1774 = dma.vmem_to_hbm [thread:$0]  %s1767, 2048, %s1769, %s1754, 128, 128, 8
        $region80: #{tpu_custom_call.1} parent=55 // pred_fallthru
          _
      $region56: #{tpu_custom_call.1} parent=5 // pred_fallthru
        _
      %p1775 = scmp.le.s32.totalorder 2, %s23
      // Predicated region
      $region81: #{tpu_custom_call.1} parent=5 // pred_check
        %p1776 = pneg %p1775
      $region82: #{tpu_custom_call.1} parent=5 // pred_check_branch
        %1778 = sbr.rel (%p1776) target = $region84
      $region83: #{tpu_custom_call.1} parent=5 // pred_region
        %s1779 = ssub.s32 %s23, 2
        // Predicated region
        $region85: #{tpu_custom_call.1} parent=83 // pred_check
          %p1780 = pneg %p246
        $region86: #{tpu_custom_call.1} parent=83 // pred_check_branch
          %1782 = sbr.rel (%p1780) target = $region88
        $region87: #{tpu_custom_call.1} parent=83 // pred_region
          %s1783 = sand.u32 %s231, 1
          %s1784 = scalar_lea.sflag [#allocation5], %s1783
          %s1785 = sand.u32 %s231, 1
          %s1786 = smul.addr %s1785, 128
          %s1787 = scalar_lea.vmem [#allocation12], %s1786
          %1789 = dma.done %s1784, 2048
        $region88: #{tpu_custom_call.1} parent=83 // pred_fallthru
          _
      $region84: #{tpu_custom_call.1} parent=5 // pred_fallthru
        _
    $region6: #{tpu_custom_call.1} parent=1 // loop_footer
      %s27 = sadd.s32 1, %s23
    $region7: #{tpu_custom_call.1} parent=1 // loop_footer_branch
      %22 = sbr.rel target = $region3
    $region8: #{tpu_custom_call.1} parent=1 // loop_exit
      _
    %1790 = vsyncpa [#allocation4], 1
    %s1791 = scalar_lea.sflag [#allocation4], 1
    %1792 = vsyncpa %s1791, 1
    %1793 = vsyncpa [#allocation7], 1
    %1794 = vsyncpa [#allocation10], 1
    %1795 = vsyncpa [#allocation5], 1
    %s1796 = scalar_lea.sflag [#allocation5], 1
    %1797 = vsyncpa %s1796, 1

// kernel: tpu_custom_call.1
$region0: #{tpu_custom_call.1}
  #allocation0 [shape = 'u32[]', space=smem, size = 0x4, offset = 0x4, fixed_abs, tag = 'smem constant byte address 0x4 - core index']
  #allocation1 [shape = 'u32[72,128]{1,0:T(1,128)}', space=vmem, size = 0x9000, scoped, tag = 'internal scratch']
  #allocation2 [shape = 'bf16[1,128,128]{2,1,0:T(8,128)(2,1)}', space=vmem, size = 0x8000, scoped, tag = 'scratch operand']
  %s0 = inlined_call_operand.hbm [shape: f32[2,128,128], index: 0, kind: input, shape index: {}]
  %s1 = inlined_call_operand.hbm [shape: f32[128,128], index: 1, kind: input, shape index: {}]
  %s2 = inlined_call_operand.hbm [shape: f32[128,128], index: 2, kind: input, shape index: {}]
  %s3 = inlined_call_operand.vmem [shape: f32[1,128], index: 3, kind: input, shape index: {}]
  %s4 = inlined_call_operand.vmem [shape: f32[1,128], index: 4, kind: input, shape index: {}]
  %s5 = inlined_call_operand.hbm [shape: bf16[128,384], index: 5, kind: input, shape index: {}]
  %s6 = inlined_call_operand.hbm [shape: bf16[128,128], index: 6, kind: input, shape index: {}]
  %s7 = inlined_call_operand.vmem [shape: f32[1,128], index: 7, kind: input, shape index: {}]
  %s8 = inlined_call_operand.vmem [shape: f32[1,128], index: 8, kind: input, shape index: {}]
  %s9 = inlined_call_operand.hbm [shape: f32[2,128,128], index: 9, kind: output, shape index: {}]
  %s10 = sld [smem:[#allocation0]]
  $region89: #{tpu_custom_call.1} parent=0
    _
  %s12 = ssub.s32 1, %s10
  %s13 = scalar_select 0, %s12, %s10
  $region1: #{tpu_custom_call.1} parent=0
    #allocation3 [shape = 'u8[131072]{0}', space=vmem, size = 0x20000, scoped, tag = 'input window, operand 0']
    #allocation4 [shape = 's32[2]{0}', space=sflag, size = 0x8, scoped, tag = 'scoped memory for tpu_custom_call.1']
    #allocation5 [shape = 's32[2]{0}', space=sflag, size = 0x8, scoped, tag = 'scoped memory for tpu_custom_call.1']
    #allocation6 [shape = 'u8[65536]{0}', space=vmem, size = 0x10000, scoped, tag = 'input window, operand 1, single buffered']
    #allocation7 [shape = 's32[1]{0}', space=sflag, size = 0x4, scoped, tag = 'scoped memory for tpu_custom_call.1']
    #allocation8 [shape = 'u8[65536]{0}', space=vmem, size = 0x10000, scoped, tag = 'input window, operand 2, single buffered']
    #allocation9 [shape = 'u8[98304]{0}', space=vmem, size = 0x18000, scoped, tag = 'input window, operand 5, single buffered']
    #allocation10 [shape = 's32[1]{0}', space=sflag, size = 0x4, scoped, tag = 'scoped memory for tpu_custom_call.1']
    #allocation11 [shape = 'u8[32768]{0}', space=vmem, size = 0x8000, scoped, tag = 'input window, operand 6, single buffered']
    #allocation12 [shape = 'u8[131072]{0}', space=vmem, size = 0x20000, scoped, tag = 'output window, operand 0']
    %14 = vsyncpa [#allocation4], 0
    %s15 = scalar_lea.sflag [#allocation4], 1
    %16 = vsyncpa %s15, 0
    %17 = vsyncpa [#allocation7], 0
    %18 = vsyncpa [#allocation10], 0
    %19 = vsyncpa [#allocation5], 0
    %s20 = scalar_lea.sflag [#allocation5], 1
    %21 = vsyncpa %s20, 0
    loop: start=0, step=1, limit=4
    $region2: #{tpu_custom_call.1} parent=1 // loop_pre_header
      _
    $region3: #{tpu_custom_call.1} parent=1 // loop_header
      %s23 = sphi 0, %s27
      %p24 = scmp.ge.s32.totalorder %s23, 4
      %s33 = sphi 0, %s35
      %s36 = sphi 0, %s33
      %s37 = sphi 0, %s36
      %s53 = sphi 0, %s37
      %s57 = sphi 0, %s57
      %s59 = sphi 0, %s57
      %s60 = sphi 0, %s59
      %s74 = sphi 0, %s60
      %s78 = sphi 0, %s78
      %s80 = sphi 0, %s78
      %s81 = sphi 0, %s80
      %s95 = sphi 0, %s81
      %s99 = sphi 0, %s99
      %s101 = sphi 0, %s99
      %s102 = sphi 0, %s101
      %s116 = sphi 0, %s102
      %s120 = sphi 0, %s120
      %s122 = sphi 0, %s120
      %s123 = sphi 0, %s122
      %s137 = sphi 0, %s123
      %s141 = sphi 0, %s141
      %s143 = sphi 0, %s141
      %s144 = sphi 0, %s143
      %s158 = sphi 0, %s144
      %s162 = sphi 0, %s162
      %s164 = sphi 0, %s162
      %s165 = sphi 0, %s164
      %s179 = sphi 0, %s165
      %s183 = sphi 0, %s183
      %s185 = sphi 0, %s183
      %s186 = sphi 0, %s185
      %s200 = sphi 0, %s186
      %s204 = sphi 0, %s204
      %s206 = sphi 0, %s204
      %s207 = sphi 0, %s206
      %s221 = sphi 0, %s207
      %s227 = sphi 0, %s229
      %s230 = sphi 0, %s227
      %s231 = sphi 0, %s230
      %s247 = sphi 0, %s231
    $region4: #{tpu_custom_call.1} parent=1 // loop_header_branch
      %26 = sbr.rel (%p24) target = $region8
    $region5: #{tpu_custom_call.1} parent=1 // loop_body
      %s28 = ssub.s32 %s23, 1
      %s29 = ssub.s32 %s23, 2
      %s30 = sadd.s32 %s23, 1
      %s31 = ssub.s32 %s23, %s30
      %p32 = scmp.eq.s32.totalorder %s31, 0
      %s34 = sadd.s32 %s33, 1
      %s35 = scalar_select %p32, %s33, %s34
      %p38 = pneg %p32
      %p39 = scmp.eq.s32.totalorder %s23, 1
      %p40 = por %p38, %p39
      %p41 = scmp.ne.s32.totalorder %s33, %s36
      %p42 = scmp.eq.s32.totalorder %s23, 0
      %p43 = por %p41, %p42
      %p44 = scmp.ne.s32.totalorder %s33, %s36
      %p45 = scmp.eq.s32.totalorder %s28, 1
      %p46 = por %p44, %p45
      %p47 = scmp.ne.s32.totalorder %s36, %s37
      %p48 = scmp.eq.s32.totalorder %s28, 0
      %p49 = por %p47, %p48
      %p50 = scmp.ne.s32.totalorder %s36, %s37
      %p51 = scmp.eq.s32.totalorder %s29, 1
      %p52 = por %p50, %p51
      %p54 = scmp.ne.s32.totalorder %s37, %s53
      %p55 = scmp.eq.s32.totalorder %s29, 0
      %p56 = por %p54, %p55
      %s58 = sadd.s32 %s57, 1
      %p61 = scmp.eq.s32.totalorder %s23, 1
      %p62 = scmp.ne.s32.totalorder %s57, %s59
      %p63 = scmp.eq.s32.totalorder %s23, 0
      %p64 = por %p62, %p63
      %p65 = scmp.ne.s32.totalorder %s57, %s59
      %p66 = scmp.eq.s32.totalorder %s28, 1
      %p67 = por %p65, %p66
      %p68 = scmp.ne.s32.totalorder %s59, %s60
      %p69 = scmp.eq.s32.totalorder %s28, 0
      %p70 = por %p68, %p69
      %p71 = scmp.ne.s32.totalorder %s59, %s60
      %p72 = scmp.eq.s32.totalorder %s29, 1
      %p73 = por %p71, %p72
      %p75 = scmp.ne.s32.totalorder %s60, %s74
      %p76 = scmp.eq.s32.totalorder %s29, 0
      %p77 = por %p75, %p76
      %s79 = sadd.s32 %s78, 1
      %p82 = scmp.eq.s32.totalorder %s23, 1
      %p83 = scmp.ne.s32.totalorder %s78, %s80
      %p84 = scmp.eq.s32.totalorder %s23, 0
      %p85 = por %p83, %p84
      %p86 = scmp.ne.s32.totalorder %s78, %s80
      %p87 = scmp.eq.s32.totalorder %s28, 1
      %p88 = por %p86, %p87
      %p89 = scmp.ne.s32.totalorder %s80, %s81
      %p90 = scmp.eq.s32.totalorder %s28, 0
      %p91 = por %p89, %p90
      %p92 = scmp.ne.s32.totalorder %s80, %s81
      %p93 = scmp.eq.s32.totalorder %s29, 1
      %p94 = por %p92, %p93
      %p96 = scmp.ne.s32.totalorder %s81, %s95
      %p97 = scmp.eq.s32.totalorder %s29, 0
      %p98 = por %p96, %p97
      %s100 = sadd.s32 %s99, 1
      %p103 = scmp.eq.s32.totalorder %s23, 1
      %p104 = scmp.ne.s32.totalorder %s99, %s101
      %p105 = scmp.eq.s32.totalorder %s23, 0
      %p106 = por %p104, %p105
      %p107 = scmp.ne.s32.totalorder %s99, %s101
      %p108 = scmp.eq.s32.totalorder %s28, 1
      %p109 = por %p107, %p108
      %p110 = scmp.ne.s32.totalorder %s101, %s102
      %p111 = scmp.eq.s32.totalorder %s28, 0
      %p112 = por %p110, %p111
      %p113 = scmp.ne.s32.totalorder %s101, %s102
      %p114 = scmp.eq.s32.totalorder %s29, 1
      %p115 = por %p113, %p114
      %p117 = scmp.ne.s32.totalorder %s102, %s116
      %p118 = scmp.eq.s32.totalorder %s29, 0
      %p119 = por %p117, %p118
      %s121 = sadd.s32 %s120, 1
      %p124 = scmp.eq.s32.totalorder %s23, 1
      %p125 = scmp.ne.s32.totalorder %s120, %s122
      %p126 = scmp.eq.s32.totalorder %s23, 0
      %p127 = por %p125, %p126
      %p128 = scmp.ne.s32.totalorder %s120, %s122
      %p129 = scmp.eq.s32.totalorder %s28, 1
      %p130 = por %p128, %p129
      %p131 = scmp.ne.s32.totalorder %s122, %s123
      %p132 = scmp.eq.s32.totalorder %s28, 0
      %p133 = por %p131, %p132
      %p134 = scmp.ne.s32.totalorder %s122, %s123
      %p135 = scmp.eq.s32.totalorder %s29, 1
      %p136 = por %p134, %p135
      %p138 = scmp.ne.s32.totalorder %s123, %s137
      %p139 = scmp.eq.s32.totalorder %s29, 0
      %p140 = por %p138, %p139
      %s142 = sadd.s32 %s141, 1
      %p145 = scmp.eq.s32.totalorder %s23, 1
      %p146 = scmp.ne.s32.totalorder %s141, %s143
      %p147 = scmp.eq.s32.totalorder %s23, 0
      %p148 = por %p146, %p147
      %p149 = scmp.ne.s32.totalorder %s141, %s143
      %p150 = scmp.eq.s32.totalorder %s28, 1
      %p151 = por %p149, %p150
      %p152 = scmp.ne.s32.totalorder %s143, %s144
      %p153 = scmp.eq.s32.totalorder %s28, 0
      %p154 = por %p152, %p153
      %p155 = scmp.ne.s32.totalorder %s143, %s144
      %p156 = scmp.eq.s32.totalorder %s29, 1
      %p157 = por %p155, %p156
      %p159 = scmp.ne.s32.totalorder %s144, %s158
      %p160 = scmp.eq.s32.totalorder %s29, 0
      %p161 = por %p159, %p160
      %s163 = sadd.s32 %s162, 1
      %p166 = scmp.eq.s32.totalorder %s23, 1
      %p167 = scmp.ne.s32.totalorder %s162, %s164
      %p168 = scmp.eq.s32.totalorder %s23, 0
      %p169 = por %p167, %p168
      %p170 = scmp.ne.s32.totalorder %s162, %s164
      %p171 = scmp.eq.s32.totalorder %s28, 1
      %p172 = por %p170, %p171
      %p173 = scmp.ne.s32.totalorder %s164, %s165
      %p174 = scmp.eq.s32.totalorder %s28, 0
      %p175 = por %p173, %p174
      %p176 = scmp.ne.s32.totalorder %s164, %s165
      %p177 = scmp.eq.s32.totalorder %s29, 1
      %p178 = por %p176, %p177
      %p180 = scmp.ne.s32.totalorder %s165, %s179
      %p181 = scmp.eq.s32.totalorder %s29, 0
      %p182 = por %p180, %p181
      %s184 = sadd.s32 %s183, 1
      %p187 = scmp.eq.s32.totalorder %s23, 1
      %p188 = scmp.ne.s32.totalorder %s183, %s185
      %p189 = scmp.eq.s32.totalorder %s23, 0
      %p190 = por %p188, %p189
      %p191 = scmp.ne.s32.totalorder %s183, %s185
      %p192 = scmp.eq.s32.totalorder %s28, 1
      %p193 = por %p191, %p192
      %p194 = scmp.ne.s32.totalorder %s185, %s186
      %p195 = scmp.eq.s32.totalorder %s28, 0
      %p196 = por %p194, %p195
      %p197 = scmp.ne.s32.totalorder %s185, %s186
      %p198 = scmp.eq.s32.totalorder %s29, 1
      %p199 = por %p197, %p198
      %p201 = scmp.ne.s32.totalorder %s186, %s200
      %p202 = scmp.eq.s32.totalorder %s29, 0
      %p203 = por %p201, %p202
      %s205 = sadd.s32 %s204, 1
      %p208 = scmp.eq.s32.totalorder %s23, 1
      %p209 = scmp.ne.s32.totalorder %s204, %s206
      %p210 = scmp.eq.s32.totalorder %s23, 0
      %p211 = por %p209, %p210
      %p212 = scmp.ne.s32.totalorder %s204, %s206
      %p213 = scmp.eq.s32.totalorder %s28, 1
      %p214 = por %p212, %p213
      %p215 = scmp.ne.s32.totalorder %s206, %s207
      %p216 = scmp.eq.s32.totalorder %s28, 0
      %p217 = por %p215, %p216
      %p218 = scmp.ne.s32.totalorder %s206, %s207
      %p219 = scmp.eq.s32.totalorder %s29, 1
      %p220 = por %p218, %p219
      %p222 = scmp.ne.s32.totalorder %s207, %s221
      %p223 = scmp.eq.s32.totalorder %s29, 0
      %p224 = por %p222, %p223
      %s225 = ssub.s32 %s23, %s30
      %p226 = scmp.eq.s32.totalorder %s225, 0
      %s228 = sadd.s32 %s227, 1
      %s229 = scalar_select %p226, %s227, %s228
      %p232 = pneg %p226
      %p233 = scmp.eq.s32.totalorder %s23, 1
      %p234 = por %p232, %p233
      %p235 = scmp.ne.s32.totalorder %s227, %s230
      %p236 = scmp.eq.s32.totalorder %s23, 0
      %p237 = por %p235, %p236
      %p238 = scmp.ne.s32.totalorder %s227, %s230
      %p239 = scmp.eq.s32.totalorder %s28, 1
      %p240 = por %p238, %p239
      %p241 = scmp.ne.s32.totalorder %s230, %s231
      %p242 = scmp.eq.s32.totalorder %s28, 0
      %p243 = por %p241, %p242
      %p244 = scmp.ne.s32.totalorder %s230, %s231
      %p245 = scmp.eq.s32.totalorder %s29, 1
      %p246 = por %p244, %p245
      %p248 = scmp.ne.s32.totalorder %s231, %s247
      %p249 = scmp.eq.s32.totalorder %s29, 0
      %p250 = por %p248, %p249
      %p251 = scmp.le.s32.totalorder 1, %s23
      %p252 = scmp.lt.s32.totalorder %s23, 3
      %p253 = pnand %p251, %p252
      %p254 = pneg %p253
      // Predicated region
      $region9: #{tpu_custom_call.1} parent=5 // pred_check
        _
      $region10: #{tpu_custom_call.1} parent=5 // pred_check_branch
        %256 = sbr.rel (%p253) target = $region12
      $region11: #{tpu_custom_call.1} parent=5 // pred_region
        %s257 = ssub.s32 %s23, 1
        // Predicated region
        $region13: #{tpu_custom_call.1} parent=11 // pred_check
          %p258 = pneg %p70
        $region14: #{tpu_custom_call.1} parent=11 // pred_check_branch
          %260 = sbr.rel (%p258) target = $region16
        $region15: #{tpu_custom_call.1} parent=11 // pred_region
          %262 = vsyncadd [#allocation7], 0
          %s263 = sshll.u32 %s1, 4
          %s264 = int_to_ptr.hbm [resolvable:$true] %s263
          %s265 = sshll.u32 [#allocation6], 4
          %s266 = int_to_ptr.vmem [resolvable:$true] %s265
          %271 = dma.hbm_to_vmem [thread:$0]  %s264, 2048, %s266, [#allocation7], 128, 128, 8
        $region16: #{tpu_custom_call.1} parent=11 // pred_fallthru
          _
        // Predicated region
        $region17: #{tpu_custom_call.1} parent=11 // pred_check
          %p272 = pneg %p91
        $region18: #{tpu_custom_call.1} parent=11 // pred_check_branch
          %274 = sbr.rel (%p272) target = $region20
        $region19: #{tpu_custom_call.1} parent=11 // pred_region
          %276 = vsyncadd [#allocation7], 0
          %s277 = sshll.u32 %s2, 4
          %s278 = int_to_ptr.hbm [resolvable:$true] %s277
          %s279 = sshll.u32 [#allocation8], 4
          %s280 = int_to_ptr.vmem [resolvable:$true] %s279
          %285 = dma.hbm_to_vmem [thread:$0]  %s278, 2048, %s280, [#allocation7], 128, 128, 8
        $region20: #{tpu_custom_call.1} parent=11 // pred_fallthru
          _
        // Predicated region
        $region21: #{tpu_custom_call.1} parent=11 // pred_check
          %p286 = pneg %p112
        $region22: #{tpu_custom_call.1} parent=11 // pred_check_branch
          %288 = sbr.rel (%p286) target = $region24
        $region23: #{tpu_custom_call.1} parent=11 // pred_region
          _
        $region24: #{tpu_custom_call.1} parent=11 // pred_fallthru
          _
        // Predicated region
        $region25: #{tpu_custom_call.1} parent=11 // pred_check
          %p289 = pneg %p133
        $region26: #{tpu_custom_call.1} parent=11 // pred_check_branch
          %291 = sbr.rel (%p289) target = $region28
        $region27: #{tpu_custom_call.1} parent=11 // pred_region
          _
        $region28: #{tpu_custom_call.1} parent=11 // pred_fallthru
          _
        // Predicated region
        $region29: #{tpu_custom_call.1} parent=11 // pred_check
          %p292 = pneg %p154
        $region30: #{tpu_custom_call.1} parent=11 // pred_check_branch
          %294 = sbr.rel (%p292) target = $region32
        $region31: #{tpu_custom_call.1} parent=11 // pred_region
          %296 = vsyncadd [#allocation10], 0
          %s297 = sshll.u32 %s5, 4
          %s298 = int_to_ptr.hbm [resolvable:$true] %s297
          %s299 = sshll.u32 [#allocation9], 4
          %s300 = int_to_ptr.vmem [resolvable:$true] %s299
          %305 = dma.hbm_to_vmem [thread:$0]  %s298, 3072, %s300, [#allocation10], 192, 192, 12
        $region32: #{tpu_custom_call.1} parent=11 // pred_fallthru
          _
        // Predicated region
        $region33: #{tpu_custom_call.1} parent=11 // pred_check
          %p306 = pneg %p175
        $region34: #{tpu_custom_call.1} parent=11 // pred_check_branch
          %308 = sbr.rel (%p306) target = $region36
        $region35: #{tpu_custom_call.1} parent=11 // pred_region
          %310 = vsyncadd [#allocation10], 0
          %s311 = sshll.u32 %s6, 4
          %s312 = int_to_ptr.hbm [resolvable:$true] %s311
          %s313 = sshll.u32 [#allocation11], 4
          %s314 = int_to_ptr.vmem [resolvable:$true] %s313
          %319 = dma.hbm_to_vmem [thread:$0]  %s312, 1024, %s314, [#allocation10], 64, 64, 4
        $region36: #{tpu_custom_call.1} parent=11 // pred_fallthru
          _
        // Predicated region
        $region37: #{tpu_custom_call.1} parent=11 // pred_check
          %p320 = pneg %p196
        $region38: #{tpu_custom_call.1} parent=11 // pred_check_branch
          %322 = sbr.rel (%p320) target = $region40
        $region39: #{tpu_custom_call.1} parent=11 // pred_region
          _
        $region40: #{tpu_custom_call.1} parent=11 // pred_fallthru
          _
        // Predicated region
        $region41: #{tpu_custom_call.1} parent=11 // pred_check
          %p323 = pneg %p217
        $region42: #{tpu_custom_call.1} parent=11 // pred_check_branch
          %325 = sbr.rel (%p323) target = $region44
        $region43: #{tpu_custom_call.1} parent=11 // pred_region
          _
        $region44: #{tpu_custom_call.1} parent=11 // pred_fallthru
          _
      $region12: #{tpu_custom_call.1} parent=5 // pred_fallthru
        _
      %p326 = scmp.lt.s32.totalorder %s23, 2
      // Predicated region
      $region45: #{tpu_custom_call.1} parent=5 // pred_check
        %p327 = pneg %p326
      $region46: #{tpu_custom_call.1} parent=5 // pred_check_branch
        %329 = sbr.rel (%p327) target = $region48
      $region47: #{tpu_custom_call.1} parent=5 // pred_region
        // Predicated region
        $region49: #{tpu_custom_call.1} parent=47 // pred_check
          %p330 = pneg %p43
        $region50: #{tpu_custom_call.1} parent=47 // pred_check_branch
          %332 = sbr.rel (%p330) target = $region52
        $region51: #{tpu_custom_call.1} parent=47 // pred_region
          %s333 = sand.u32 %s33, 1
          %s334 = scalar_lea.sflag [#allocation4], %s333
          %s335 = sand.u32 %s33, 1
          %s336 = smul.addr %s335, 128
          %s337 = scalar_lea.vmem [#allocation3], %s336
          %339 = vsyncadd %s334, 0
          %s340 = smul.addr %s23, 16
          %s341 = smul.addr %s340, 8
          %s342 = scalar_lea.hbm %s0, %s341
          %s343 = sshll.u32 %s342, 4
          %s344 = int_to_ptr.hbm [resolvable:$true] %s343
          %s345 = sshll.u32 %s337, 4
          %s346 = int_to_ptr.vmem [resolvable:$true] %s345
          %351 = dma.hbm_to_vmem [thread:$0]  %s344, 2048, %s346, %s334, 128, 128, 8
        $region52: #{tpu_custom_call.1} parent=47 // pred_fallthru
          _
      $region48: #{tpu_custom_call.1} parent=5 // pred_fallthru
        _
      %p352 = scmp.le.s32.totalorder 1, %s23
      %p353 = scmp.lt.s32.totalorder %s23, 3
      %p354 = pnand %p352, %p353
      %p355 = pneg %p354
      // Predicated region
      $region53: #{tpu_custom_call.1} parent=5 // pred_check
        _
      $region54: #{tpu_custom_call.1} parent=5 // pred_check_branch
        %357 = sbr.rel (%p354) target = $region56
      $region55: #{tpu_custom_call.1} parent=5 // pred_region
        %s358 = ssub.s32 %s23, 1
        %s359 = sand.u32 %s36, 1
        %s360 = scalar_lea.sflag [#allocation4], %s359
        %s361 = sand.u32 %s36, 1
        %s362 = smul.addr %s361, 128
        %s363 = scalar_lea.vmem [#allocation3], %s362
        // Predicated region
        $region57: #{tpu_custom_call.1} parent=55 // pred_check
          %p364 = pneg %p49
        $region58: #{tpu_custom_call.1} parent=55 // pred_check_branch
          %366 = sbr.rel (%p364) target = $region60
        $region59: #{tpu_custom_call.1} parent=55 // pred_region
          %368 = dma.done %s360, 2048
        $region60: #{tpu_custom_call.1} parent=55 // pred_fallthru
          _
        // Predicated region
        $region61: #{tpu_custom_call.1} parent=55 // pred_check
          %p369 = pneg %p70
        $region62: #{tpu_custom_call.1} parent=55 // pred_check_branch
          %371 = sbr.rel (%p369) target = $region64
        $region63: #{tpu_custom_call.1} parent=55 // pred_region
          %373 = dma.done [#allocation7], 2048
        $region64: #{tpu_custom_call.1} parent=55 // pred_fallthru
          _
        // Predicated region
        $region65: #{tpu_custom_call.1} parent=55 // pred_check
          %p374 = pneg %p91
        $region66: #{tpu_custom_call.1} parent=55 // pred_check_branch
          %376 = sbr.rel (%p374) target = $region68
        $region67: #{tpu_custom_call.1} parent=55 // pred_region
          %378 = dma.done [#allocation7], 2048
        $region68: #{tpu_custom_call.1} parent=55 // pred_fallthru
          _
        // Predicated region
        $region69: #{tpu_custom_call.1} parent=55 // pred_check
          %p379 = pneg %p154
        $region70: #{tpu_custom_call.1} parent=55 // pred_check_branch
          %381 = sbr.rel (%p379) target = $region72
        $region71: #{tpu_custom_call.1} parent=55 // pred_region
          %383 = dma.done [#allocation10], 3072
        $region72: #{tpu_custom_call.1} parent=55 // pred_fallthru
          _
        // Predicated region
        $region73: #{tpu_custom_call.1} parent=55 // pred_check
          %p384 = pneg %p175
        $region74: #{tpu_custom_call.1} parent=55 // pred_check_branch
          %386 = sbr.rel (%p384) target = $region76
        $region75: #{tpu_custom_call.1} parent=55 // pred_region
          %388 = dma.done [#allocation10], 1024
        $region76: #{tpu_custom_call.1} parent=55 // pred_fallthru
          _
        %s389 = sand.u32 %s36, 1
        %s390 = scalar_lea.sflag [#allocation4], %s389
        %s391 = sand.u32 %s36, 1
        %s392 = smul.addr %s391, 128
        %s393 = scalar_lea.vmem [#allocation3], %s392
        %p394 = pneg %p49
        %p395 = pneg %p46
        %p396 = pneg %p70
        %p397 = pneg %p67
        %p398 = pneg %p91
        %p399 = pneg %p88
        %p400 = pneg %p112
        %p401 = pneg %p109
        %p402 = pneg %p133
        %p403 = pneg %p130
        %p404 = pneg %p154
        %p405 = pneg %p151
        %p406 = pneg %p175
        %p407 = pneg %p172
        %p408 = pneg %p196
        %p409 = pneg %p193
        %p410 = pneg %p217
        %p411 = pneg %p214
        %p412 = pneg %p243
        %p413 = pneg %p240
        %s414 = sand.u32 %s230, 1
        %s415 = scalar_lea.sflag [#allocation5], %s414
        %s416 = sand.u32 %s230, 1
        %s417 = smul.addr %s416, 128
        %s418 = scalar_lea.vmem [#allocation12], %s417
        %v419 = vld [vmem:[%s363] sm:$0xff]
        %v420 = vld [vmem:[%s363 + $0x8] sm:$0xff]
        %v421 = vld [vmem:[%s363 + $0x10] sm:$0xff]
        %v422 = vld [vmem:[%s363 + $0x18] sm:$0xff]
        %v423 = vld [vmem:[%s363 + $0x20] sm:$0xff]
        %v424 = vld [vmem:[%s363 + $0x28] sm:$0xff]
        %v425 = vld [vmem:[%s363 + $0x30] sm:$0xff]
        %v426 = vld [vmem:[%s363 + $0x38] sm:$0xff]
        %v427 = vld [vmem:[%s363 + $0x40] sm:$0xff]
        %v428 = vld [vmem:[%s363 + $0x48] sm:$0xff]
        %v429 = vld [vmem:[%s363 + $0x50] sm:$0xff]
        %v430 = vld [vmem:[%s363 + $0x58] sm:$0xff]
        %v431 = vld [vmem:[%s363 + $0x60] sm:$0xff]
        %v432 = vld [vmem:[%s363 + $0x68] sm:$0xff]
        %v433 = vld [vmem:[%s363 + $0x70] sm:$0xff]
        %v434 = vld [vmem:[%s363 + $0x78] sm:$0xff]
        %v435 = vadd.f32 %v419, %v420
        %v436 = vadd.f32 %v435, %v421
        %v437 = vadd.f32 %v436, %v422
        %v438 = vadd.f32 %v437, %v423
        %v439 = vadd.f32 %v438, %v424
        %v440 = vadd.f32 %v439, %v425
        %v441 = vadd.f32 %v440, %v426
        %v442 = vadd.f32 %v441, %v427
        %v443 = vadd.f32 %v442, %v428
        %v444 = vadd.f32 %v443, %v429
        %v445 = vadd.f32 %v444, %v430
        %v446 = vadd.f32 %v445, %v431
        %v447 = vadd.f32 %v446, %v432
        %v448 = vadd.f32 %v447, %v433
        %v449 = vadd.f32 %v448, %v434
        %v450 = vrot.slane %v449, 4
        %v451 = vadd.f32 %v449, %v450
        %v452 = vrot.slane %v451, 2
        %v453 = vadd.f32 %v451, %v452
        %v454 = vrot.slane %v453, 1
        %v455 = vadd.f32 %v453, %v454
        %v456 = vmul.f32 %v419, %v419
        %v457 = vmul.f32 %v420, %v420
        %v458 = vmul.f32 %v421, %v421
        %v459 = vmul.f32 %v422, %v422
        %v460 = vmul.f32 %v423, %v423
        %v461 = vmul.f32 %v424, %v424
        %v462 = vmul.f32 %v425, %v425
        %v463 = vmul.f32 %v426, %v426
        %v464 = vmul.f32 %v427, %v427
        %v465 = vmul.f32 %v428, %v428
        %v466 = vmul.f32 %v429, %v429
        %v467 = vmul.f32 %v430, %v430
        %v468 = vmul.f32 %v431, %v431
        %v469 = vmul.f32 %v432, %v432
        %v470 = vmul.f32 %v433, %v433
        %v471 = vmul.f32 %v434, %v434
        %v472 = vadd.f32 %v456, %v457
        %v473 = vadd.f32 %v472, %v458
        %v474 = vadd.f32 %v473, %v459
        %v475 = vadd.f32 %v474, %v460
        %v476 = vadd.f32 %v475, %v461
        %v477 = vadd.f32 %v476, %v462
        %v478 = vadd.f32 %v477, %v463
        %v479 = vadd.f32 %v478, %v464
        %v480 = vadd.f32 %v479, %v465
        %v481 = vadd.f32 %v480, %v466
        %v482 = vadd.f32 %v481, %v467
        %v483 = vadd.f32 %v482, %v468
        %v484 = vadd.f32 %v483, %v469
        %v485 = vadd.f32 %v484, %v470
        %v486 = vadd.f32 %v485, %v471
        %v487 = vrot.slane %v486, 4
        %v488 = vadd.f32 %v486, %v487
        %v489 = vrot.slane %v488, 2
        %v490 = vadd.f32 %v488, %v489
        %v491 = vrot.slane %v490, 1
        %v492 = vadd.f32 %v490, %v491
        %vm493 = vcmask 1040384
        %v494 = vsel %vm493, %v455, %v492
        %v495 = vld [vmem:[#allocation6] sm:$0xff]
        %v496 = vld [vmem:[#allocation6 + $0x8] sm:$0xff]
        %v497 = vld [vmem:[#allocation6 + $0x10] sm:$0xff]
        %v498 = vld [vmem:[#allocation6 + $0x18] sm:$0xff]
        %v499 = vld [vmem:[#allocation6 + $0x20] sm:$0xff]
        %v500 = vld [vmem:[#allocation6 + $0x28] sm:$0xff]
        %v501 = vld [vmem:[#allocation6 + $0x30] sm:$0xff]
        %v502 = vld [vmem:[#allocation6 + $0x38] sm:$0xff]
        %v503 = vld [vmem:[#allocation6 + $0x40] sm:$0xff]
        %v504 = vld [vmem:[#allocation6 + $0x48] sm:$0xff]
        %v505 = vld [vmem:[#allocation6 + $0x50] sm:$0xff]
        %v506 = vld [vmem:[#allocation6 + $0x58] sm:$0xff]
        %v507 = vld [vmem:[#allocation6 + $0x60] sm:$0xff]
        %v508 = vld [vmem:[#allocation6 + $0x68] sm:$0xff]
        %v509 = vld [vmem:[#allocation6 + $0x70] sm:$0xff]
        %v510 = vld [vmem:[#allocation6 + $0x78] sm:$0xff]
        %511 = vmatpush.msra.mxu0 %v510
        %512 = vmatpush.msra.mxu0 %v509
        %513 = vmatpush.msra.mxu0 %v508
        %514 = vmatpush.msra.mxu0 %v507
        %515 = vmatpush.msra.mxu0 %v506
        %516 = vmatpush.msra.mxu0 %v505
        %517 = vmatpush.msra.mxu0 %v504
        %518 = vmatpush.msra.mxu0 %v503
        %519 = vmatpush.msra.mxu0 %v502
        %520 = vmatpush.msra.mxu0 %v501
        %521 = vmatpush.msra.mxu0 %v500
        %522 = vmatpush.msra.mxu0 %v499
        %523 = vmatpush.msra.mxu0 %v498
        %524 = vmatpush.msra.mxu0 %v497
        %525 = vmatpush.msra.mxu0 %v496
        %526 = vmatpush.msra.mxu0 %v495
        %527 = vmatmul.f32.gmra.mxu0 %v494
        %v528 = vpop.f32.mrf.mxu0
        %v529 = vadd.f32 0.0, %v528
        %530 = vdwg.mxu0
        %v531 = vmul.f32 %v529, 0.001953125
        %v532 = vld [vmem:[#allocation8] sm:$0xff]
        %v533 = vld [vmem:[#allocation8 + $0x8] sm:$0xff]
        %v534 = vld [vmem:[#allocation8 + $0x10] sm:$0xff]
        %v535 = vld [vmem:[#allocation8 + $0x18] sm:$0xff]
        %v536 = vld [vmem:[#allocation8 + $0x20] sm:$0xff]
        %v537 = vld [vmem:[#allocation8 + $0x28] sm:$0xff]
        %v538 = vld [vmem:[#allocation8 + $0x30] sm:$0xff]
        %v539 = vld [vmem:[#allocation8 + $0x38] sm:$0xff]
        %v540 = vld [vmem:[#allocation8 + $0x40] sm:$0xff]
        %v541 = vld [vmem:[#allocation8 + $0x48] sm:$0xff]
        %v542 = vld [vmem:[#allocation8 + $0x50] sm:$0xff]
        %v543 = vld [vmem:[#allocation8 + $0x58] sm:$0xff]
        %v544 = vld [vmem:[#allocation8 + $0x60] sm:$0xff]
        %v545 = vld [vmem:[#allocation8 + $0x68] sm:$0xff]
        %v546 = vld [vmem:[#allocation8 + $0x70] sm:$0xff]
        %v547 = vld [vmem:[#allocation8 + $0x78] sm:$0xff]
        %548 = vmatpush.msra.mxu0 %v547
        %549 = vmatpush.msra.mxu0 %v546
        %550 = vmatpush.msra.mxu0 %v545
        %551 = vmatpush.msra.mxu0 %v544
        %552 = vmatpush.msra.mxu0 %v543
        %553 = vmatpush.msra.mxu0 %v542
        %554 = vmatpush.msra.mxu0 %v541
        %555 = vmatpush.msra.mxu0 %v540
        %556 = vmatpush.msra.mxu0 %v539
        %557 = vmatpush.msra.mxu0 %v538
        %558 = vmatpush.msra.mxu0 %v537
        %559 = vmatpush.msra.mxu0 %v536
        %560 = vmatpush.msra.mxu0 %v535
        %561 = vmatpush.msra.mxu0 %v534
        %562 = vmatpush.msra.mxu0 %v533
        %563 = vmatpush.msra.mxu0 %v532
        %564 = vmatmul.f32.gmra.mxu0 %v531
        %v565 = vpop.f32.mrf.mxu0
        %v566 = vadd.f32 0.0, %v565
        %567 = vdwg.mxu0
        %v568 = vmul.f32 %v566, %v566
        %v570 = vrot.slane %v568, 7
        %v572 = vsub.f32 %v566, %v570
        %v573 = vmax.f32 %v572, 0.0
        %v574 = vadd.f32 %v573, 1e-05
        %v575 = vrsqrt.pop %v574
        %v576 = vmul.f32 %v575, %v574
        %v577 = vmul.f32 %v576, %v575
        %v578 = vmul.f32 0.5, %v577
        %v579 = vsub.f32 1.5, %v578
        %v580 = vmul.f32 %v575, %v579
        %vm581 = vweird.f32 %v574
        %vm582 = vweird.f32 %v575
        %vm583 = vmor %vm581, %vm582
        %v584 = vsel %vm583, %v575, %v580
        %v585 = vperm.slane %v566, 0
        %v586 = vsub.f32 %v419, %v585
        %v587 = vsub.f32 %v420, %v585
        %v588 = vsub.f32 %v421, %v585
        %v589 = vsub.f32 %v422, %v585
        %v590 = vsub.f32 %v423, %v585
        %v591 = vsub.f32 %v424, %v585
        %v592 = vsub.f32 %v425, %v585
        %v593 = vsub.f32 %v426, %v585
        %v594 = vsub.f32 %v427, %v585
        %v595 = vsub.f32 %v428, %v585
        %v596 = vsub.f32 %v429, %v585
        %v597 = vsub.f32 %v430, %v585
        %v598 = vsub.f32 %v431, %v585
        %v599 = vsub.f32 %v432, %v585
        %v600 = vsub.f32 %v433, %v585
        %v601 = vsub.f32 %v434, %v585
        %v602 = vperm.slane %v584, 1
        %v603 = vmul.f32 %v586, %v602
        %v604 = vmul.f32 %v587, %v602
        %v605 = vmul.f32 %v588, %v602
        %v606 = vmul.f32 %v589, %v602
        %v607 = vmul.f32 %v590, %v602
        %v608 = vmul.f32 %v591, %v602
        %v609 = vmul.f32 %v592, %v602
        %v610 = vmul.f32 %v593, %v602
        %v611 = vmul.f32 %v594, %v602
        %v612 = vmul.f32 %v595, %v602
        %v613 = vmul.f32 %v596, %v602
        %v614 = vmul.f32 %v597, %v602
        %v615 = vmul.f32 %v598, %v602
        %v616 = vmul.f32 %v599, %v602
        %v617 = vmul.f32 %v600, %v602
        %v618 = vmul.f32 %v601, %v602
        %v619 = vld [vmem:[%s3] sm:$0x1]
        %v621 = vperm.slane %v619, 0
        %v623 = vmul.f32 %v603, %v621
        %v624 = vmul.f32 %v604, %v621
        %v625 = vmul.f32 %v605, %v621
        %v626 = vmul.f32 %v606, %v621
        %v627 = vmul.f32 %v607, %v621
        %v628 = vmul.f32 %v608, %v621
        %v629 = vmul.f32 %v609, %v621
        %v630 = vmul.f32 %v610, %v621
        %v631 = vmul.f32 %v611, %v621
        %v632 = vmul.f32 %v612, %v621
        %v633 = vmul.f32 %v613, %v621
        %v634 = vmul.f32 %v614, %v621
        %v635 = vmul.f32 %v615, %v621
        %v636 = vmul.f32 %v616, %v621
        %v637 = vmul.f32 %v617, %v621
        %v638 = vmul.f32 %v618, %v621
        %v639 = vld [vmem:[%s4] sm:$0x1]
        %v641 = vperm.slane %v639, 0
        %v643 = vadd.f32 %v623, %v641
        %v644 = vadd.f32 %v624, %v641
        %v645 = vadd.f32 %v625, %v641
        %v646 = vadd.f32 %v626, %v641
        %v647 = vadd.f32 %v627, %v641
        %v648 = vadd.f32 %v628, %v641
        %v649 = vadd.f32 %v629, %v641
        %v650 = vadd.f32 %v630, %v641
        %v651 = vadd.f32 %v631, %v641
        %v652 = vadd.f32 %v632, %v641
        %v653 = vadd.f32 %v633, %v641
        %v654 = vadd.f32 %v634, %v641
        %v655 = vadd.f32 %v635, %v641
        %v656 = vadd.f32 %v636, %v641
        %v657 = vadd.f32 %v637, %v641
        %v658 = vadd.f32 %v638, %v641
        %v659 = vpack.c.bf16 %v643, %v643
        %v660 = vpack.c.bf16 %v644, %v644
        %v661 = vpack.c.bf16 %v645, %v645
        %v662 = vpack.c.bf16 %v646, %v646
        %v663 = vpack.c.bf16 %v647, %v647
        %v664 = vpack.c.bf16 %v648, %v648
        %v665 = vpack.c.bf16 %v649, %v649
        %v666 = vpack.c.bf16 %v650, %v650
        %v667 = vpack.c.bf16 %v651, %v651
        %v668 = vpack.c.bf16 %v652, %v652
        %v669 = vpack.c.bf16 %v653, %v653
        %v670 = vpack.c.bf16 %v654, %v654
        %v671 = vpack.c.bf16 %v655, %v655
        %v672 = vpack.c.bf16 %v656, %v656
        %v673 = vpack.c.bf16 %v657, %v657
        %v674 = vpack.c.bf16 %v658, %v658
        %v675 = vld [vmem:[#allocation9] sm:$0xff]
        %v676 = vld [vmem:[#allocation9 + $0x8] sm:$0xf]
        %v677 = vld [vmem:[#allocation9 + $0xc] sm:$0xff]
        %v678 = vld [vmem:[#allocation9 + $0x14] sm:$0xf]
        %v679 = vld [vmem:[#allocation9 + $0x18] sm:$0xff]
        %v680 = vld [vmem:[#allocation9 + $0x20] sm:$0xf]
        %v681 = vld [vmem:[#allocation9 + $0x24] sm:$0xff]
        %v682 = vld [vmem:[#allocation9 + $0x2c] sm:$0xf]
        %v683 = vld [vmem:[#allocation9 + $0x30] sm:$0xff]
        %v684 = vld [vmem:[#allocation9 + $0x38] sm:$0xf]
        %v685 = vld [vmem:[#allocation9 + $0x3c] sm:$0xff]
        %v686 = vld [vmem:[#allocation9 + $0x44] sm:$0xf]
        %v687 = vld [vmem:[#allocation9 + $0x48] sm:$0xff]
        %v688 = vld [vmem:[#allocation9 + $0x50] sm:$0xf]
        %v689 = vld [vmem:[#allocation9 + $0x54] sm:$0xff]
        %v690 = vld [vmem:[#allocation9 + $0x5c] sm:$0xf]
        %v691 = vld [vmem:[#allocation9 + $0x60] sm:$0xff]
        %v692 = vld [vmem:[#allocation9 + $0x68] sm:$0xf]
        %v693 = vld [vmem:[#allocation9 + $0x6c] sm:$0xff]
        %v694 = vld [vmem:[#allocation9 + $0x74] sm:$0xf]
        %v695 = vld [vmem:[#allocation9 + $0x78] sm:$0xff]
        %v696 = vld [vmem:[#allocation9 + $0x80] sm:$0xf]
        %v697 = vld [vmem:[#allocation9 + $0x84] sm:$0xff]
        %v698 = vld [vmem:[#allocation9 + $0x8c] sm:$0xf]
        %v699 = vld [vmem:[#allocation9 + $0x90] sm:$0xff]
        %v700 = vld [vmem:[#allocation9 + $0x98] sm:$0xf]
        %v701 = vld [vmem:[#allocation9 + $0x9c] sm:$0xff]
        %v702 = vld [vmem:[#allocation9 + $0xa4] sm:$0xf]
        %v703 = vld [vmem:[#allocation9 + $0xa8] sm:$0xff]
        %v704 = vld [vmem:[#allocation9 + $0xb0] sm:$0xf]
        %v705 = vld [vmem:[#allocation9 + $0xb4] sm:$0xff]
        %v706 = vld [vmem:[#allocation9 + $0xbc] sm:$0xf]
        %v723 = vunpack.c.l.b16 %v659
        %v724 = vunpack.c.l.b16 %v660
        %v725 = vunpack.c.l.b16 %v661
        %v726 = vunpack.c.l.b16 %v662
        %v727 = vunpack.c.l.b16 %v663
        %v728 = vunpack.c.l.b16 %v664
        %v729 = vunpack.c.l.b16 %v665
        %v730 = vunpack.c.l.b16 %v666
        %v731 = vunpack.c.l.b16 %v667
        %v732 = vunpack.c.l.b16 %v668
        %v733 = vunpack.c.l.b16 %v669
        %v734 = vunpack.c.l.b16 %v670
        %v735 = vunpack.c.l.b16 %v671
        %v736 = vunpack.c.l.b16 %v672
        %v737 = vunpack.c.l.b16 %v673
        %v738 = vunpack.c.l.b16 %v674
        %v739 = vpack.c.b16 %v724, %v723
        %v740 = vpack.c.b16 %v726, %v725
        %v741 = vpack.c.b16 %v728, %v727
        %v742 = vpack.c.b16 %v730, %v729
        %v743 = vpack.c.b16 %v732, %v731
        %v744 = vpack.c.b16 %v734, %v733
        %v745 = vpack.c.b16 %v736, %v735
        %v746 = vpack.c.b16 %v738, %v737
        %v787 = vunpack.c.l.b16 %v675
        %v788 = vunpack.c.h.b16 %v675
        %v789 = vunpack.c.l.b16 %v676
        %v790 = vunpack.c.l.b16 %v677
        %v791 = vunpack.c.h.b16 %v677
        %v792 = vunpack.c.l.b16 %v678
        %v793 = vunpack.c.l.b16 %v679
        %v794 = vunpack.c.h.b16 %v679
        %v795 = vunpack.c.l.b16 %v680
        %v796 = vunpack.c.l.b16 %v681
        %v797 = vunpack.c.h.b16 %v681
        %v798 = vunpack.c.l.b16 %v682
        %v799 = vunpack.c.l.b16 %v683
        %v800 = vunpack.c.h.b16 %v683
        %v801 = vunpack.c.l.b16 %v684
        %v802 = vunpack.c.l.b16 %v685
        %v803 = vunpack.c.h.b16 %v685
        %v804 = vunpack.c.l.b16 %v686
        %v805 = vunpack.c.l.b16 %v687
        %v806 = vunpack.c.h.b16 %v687
        %v807 = vunpack.c.l.b16 %v688
        %v808 = vunpack.c.l.b16 %v689
        %v809 = vunpack.c.h.b16 %v689
        %v810 = vunpack.c.l.b16 %v690
        %v811 = vunpack.c.l.b16 %v691
        %v812 = vunpack.c.h.b16 %v691
        %v813 = vunpack.c.l.b16 %v692
        %v814 = vunpack.c.l.b16 %v693
        %v815 = vunpack.c.h.b16 %v693
        %v816 = vunpack.c.l.b16 %v694
        %v817 = vunpack.c.l.b16 %v695
        %v818 = vunpack.c.h.b16 %v695
        %v819 = vunpack.c.l.b16 %v696
        %v820 = vunpack.c.l.b16 %v697
        %v821 = vunpack.c.h.b16 %v697
        %v822 = vunpack.c.l.b16 %v698
        %v823 = vunpack.c.l.b16 %v699
        %v824 = vunpack.c.h.b16 %v699
        %v825 = vunpack.c.l.b16 %v700
        %v826 = vunpack.c.l.b16 %v701
        %v827 = vunpack.c.h.b16 %v701
        %v828 = vunpack.c.l.b16 %v702
        %v829 = vunpack.c.l.b16 %v703
        %v830 = vunpack.c.h.b16 %v703
        %v831 = vunpack.c.l.b16 %v704
        %v832 = vunpack.c.l.b16 %v705
        %v833 = vunpack.c.h.b16 %v705
        %v834 = vunpack.c.l.b16 %v706
        %v835 = vpack.c.b16 %v790, %v787
        %v836 = vpack.c.b16 %v791, %v788
        %v837 = vpack.c.b16 %v792, %v789
        %v838 = vpack.c.b16 %v796, %v793
        %v839 = vpack.c.b16 %v797, %v794
        %v840 = vpack.c.b16 %v798, %v795
        %v841 = vpack.c.b16 %v802, %v799
        %v842 = vpack.c.b16 %v803, %v800
        %v843 = vpack.c.b16 %v804, %v801
        %v844 = vpack.c.b16 %v808, %v805
        %v845 = vpack.c.b16 %v809, %v806
        %v846 = vpack.c.b16 %v810, %v807
        %v847 = vpack.c.b16 %v814, %v811
        %v848 = vpack.c.b16 %v815, %v812
        %v849 = vpack.c.b16 %v816, %v813
        %v850 = vpack.c.b16 %v820, %v817
        %v851 = vpack.c.b16 %v821, %v818
        %v852 = vpack.c.b16 %v822, %v819
        %v853 = vpack.c.b16 %v826, %v823
        %v854 = vpack.c.b16 %v827, %v824
        %v855 = vpack.c.b16 %v828, %v825
        %v856 = vpack.c.b16 %v832, %v829
        %v857 = vpack.c.b16 %v833, %v830
        %v858 = vpack.c.b16 %v834, %v831
        %883 = vmatpush.bf16.msra.mxu0 %v856
        %884 = vmatpush.bf16.msra.mxu0 %v853
        %885 = vmatpush.bf16.msra.mxu0 %v850
        %886 = vmatpush.bf16.msra.mxu0 %v847
        %887 = vmatpush.bf16.msra.mxu0 %v844
        %888 = vmatpush.bf16.msra.mxu0 %v841
        %889 = vmatpush.bf16.msra.mxu0 %v838
        %890 = vmatpush.bf16.msra.mxu0 %v835
        %891 = vmatmul.bf16.gmra.mxu0 %v739
        %v892 = vpop.f32.mrf.mxu0
        %v893 = vadd.f32 0.0, %v892
        %v894 = vpop.f32.mrf.mxu0
        %v895 = vadd.f32 0.0, %v894
        %896 = vmatmul.bf16.gmra.mxu0 %v740
        %v897 = vpop.f32.mrf.mxu0
        %v898 = vadd.f32 0.0, %v897
        %v899 = vpop.f32.mrf.mxu0
        %v900 = vadd.f32 0.0, %v899
        %901 = vmatmul.bf16.gmra.mxu0 %v741
        %v902 = vpop.f32.mrf.mxu0
        %v903 = vadd.f32 0.0, %v902
        %v904 = vpop.f32.mrf.mxu0
        %v905 = vadd.f32 0.0, %v904
        %906 = vmatmul.bf16.gmra.mxu0 %v742
        %v907 = vpop.f32.mrf.mxu0
        %v908 = vadd.f32 0.0, %v907
        %v909 = vpop.f32.mrf.mxu0
        %v910 = vadd.f32 0.0, %v909
        %911 = vmatmul.bf16.gmra.mxu0 %v743
        %v912 = vpop.f32.mrf.mxu0
        %v913 = vadd.f32 0.0, %v912
        %v914 = vpop.f32.mrf.mxu0
        %v915 = vadd.f32 0.0, %v914
        %916 = vmatmul.bf16.gmra.mxu0 %v744
        %v917 = vpop.f32.mrf.mxu0
        %v918 = vadd.f32 0.0, %v917
        %v919 = vpop.f32.mrf.mxu0
        %v920 = vadd.f32 0.0, %v919
        %921 = vmatmul.bf16.gmra.mxu0 %v745
        %v922 = vpop.f32.mrf.mxu0
        %v923 = vadd.f32 0.0, %v922
        %v924 = vpop.f32.mrf.mxu0
        %v925 = vadd.f32 0.0, %v924
        %926 = vmatmul.bf16.gmra.mxu0 %v746
        %v927 = vpop.f32.mrf.mxu0
        %v928 = vadd.f32 0.0, %v927
        %v929 = vpop.f32.mrf.mxu0
        %v930 = vadd.f32 0.0, %v929
        %931 = vdwg.mxu0
        %932 = vmatpush.bf16.msra.mxu0 %v857
        %933 = vmatpush.bf16.msra.mxu0 %v854
        %934 = vmatpush.bf16.msra.mxu0 %v851
        %935 = vmatpush.bf16.msra.mxu0 %v848
        %936 = vmatpush.bf16.msra.mxu0 %v845
        %937 = vmatpush.bf16.msra.mxu0 %v842
        %938 = vmatpush.bf16.msra.mxu0 %v839
        %939 = vmatpush.bf16.msra.mxu0 %v836
        %940 = vmatmul.bf16.gmra.mxu0 %v739
        %v941 = vpop.f32.mrf.mxu0
        %v942 = vadd.f32 0.0, %v941
        %v943 = vpop.f32.mrf.mxu0
        %v944 = vadd.f32 0.0, %v943
        %945 = vmatmul.bf16.gmra.mxu0 %v740
        %v946 = vpop.f32.mrf.mxu0
        %v947 = vadd.f32 0.0, %v946
        %v948 = vpop.f32.mrf.mxu0
        %v949 = vadd.f32 0.0, %v948
        %950 = vmatmul.bf16.gmra.mxu0 %v741
        %v951 = vpop.f32.mrf.mxu0
        %v952 = vadd.f32 0.0, %v951
        %v953 = vpop.f32.mrf.mxu0
        %v954 = vadd.f32 0.0, %v953
        %955 = vmatmul.bf16.gmra.mxu0 %v742
        %v956 = vpop.f32.mrf.mxu0
        %v957 = vadd.f32 0.0, %v956
        %v958 = vpop.f32.mrf.mxu0
        %v959 = vadd.f32 0.0, %v958
        %960 = vmatmul.bf16.gmra.mxu0 %v743
        %v961 = vpop.f32.mrf.mxu0
        %v962 = vadd.f32 0.0, %v961
        %v963 = vpop.f32.mrf.mxu0
        %v964 = vadd.f32 0.0, %v963
        %965 = vmatmul.bf16.gmra.mxu0 %v744
        %v966 = vpop.f32.mrf.mxu0
        %v967 = vadd.f32 0.0, %v966
        %v968 = vpop.f32.mrf.mxu0
        %v969 = vadd.f32 0.0, %v968
        %970 = vmatmul.bf16.gmra.mxu0 %v745
        %v971 = vpop.f32.mrf.mxu0
        %v972 = vadd.f32 0.0, %v971
        %v973 = vpop.f32.mrf.mxu0
        %v974 = vadd.f32 0.0, %v973
        %975 = vmatmul.bf16.gmra.mxu0 %v746
        %v976 = vpop.f32.mrf.mxu0
        %v977 = vadd.f32 0.0, %v976
        %v978 = vpop.f32.mrf.mxu0
        %v979 = vadd.f32 0.0, %v978
        %980 = vdwg.mxu0
        %981 = vmatpush.bf16.msra.mxu0 %v858
        %982 = vmatpush.bf16.msra.mxu0 %v855
        %983 = vmatpush.bf16.msra.mxu0 %v852
        %984 = vmatpush.bf16.msra.mxu0 %v849
        %985 = vmatpush.bf16.msra.mxu0 %v846
        %986 = vmatpush.bf16.msra.mxu0 %v843
        %987 = vmatpush.bf16.msra.mxu0 %v840
        %988 = vmatpush.bf16.msra.mxu0 %v837
        %989 = vmatmul.bf16.gmra.mxu0 %v739
        %v990 = vpop.f32.mrf.mxu0
        %v991 = vadd.f32 0.0, %v990
        %v992 = vpop.f32.mrf.mxu0
        %v993 = vadd.f32 0.0, %v992
        %994 = vmatmul.bf16.gmra.mxu0 %v740
        %v995 = vpop.f32.mrf.mxu0
        %v996 = vadd.f32 0.0, %v995
        %v997 = vpop.f32.mrf.mxu0
        %v998 = vadd.f32 0.0, %v997
        %999 = vmatmul.bf16.gmra.mxu0 %v741
        %v1000 = vpop.f32.mrf.mxu0
        %v1001 = vadd.f32 0.0, %v1000
        %v1002 = vpop.f32.mrf.mxu0
        %v1003 = vadd.f32 0.0, %v1002
        %1004 = vmatmul.bf16.gmra.mxu0 %v742
        %v1005 = vpop.f32.mrf.mxu0
        %v1006 = vadd.f32 0.0, %v1005
        %v1007 = vpop.f32.mrf.mxu0
        %v1008 = vadd.f32 0.0, %v1007
        %1009 = vmatmul.bf16.gmra.mxu0 %v743
        %v1010 = vpop.f32.mrf.mxu0
        %v1011 = vadd.f32 0.0, %v1010
        %v1012 = vpop.f32.mrf.mxu0
        %v1013 = vadd.f32 0.0, %v1012
        %1014 = vmatmul.bf16.gmra.mxu0 %v744
        %v1015 = vpop.f32.mrf.mxu0
        %v1016 = vadd.f32 0.0, %v1015
        %v1017 = vpop.f32.mrf.mxu0
        %v1018 = vadd.f32 0.0, %v1017
        %1019 = vmatmul.bf16.gmra.mxu0 %v745
        %v1020 = vpop.f32.mrf.mxu0
        %v1021 = vadd.f32 0.0, %v1020
        %v1022 = vpop.f32.mrf.mxu0
        %v1023 = vadd.f32 0.0, %v1022
        %1024 = vmatmul.bf16.gmra.mxu0 %v746
        %v1025 = vpop.f32.mrf.mxu0
        %v1026 = vadd.f32 0.0, %v1025
        %v1027 = vpop.f32.mrf.mxu0
        %v1028 = vadd.f32 0.0, %v1027
        %1029 = vdwg.mxu0
        %v1030 = vpack.c.bf16 %v942, %v893
        %v1031 = vpack.c.bf16 %v991, %v991
        %v1032 = vpack.c.bf16 %v944, %v895
        %v1033 = vpack.c.bf16 %v993, %v993
        %v1034 = vpack.c.bf16 %v947, %v898
        %v1035 = vpack.c.bf16 %v996, %v996
        %v1036 = vpack.c.bf16 %v949, %v900
        %v1037 = vpack.c.bf16 %v998, %v998
        %v1038 = vpack.c.bf16 %v952, %v903
        %v1039 = vpack.c.bf16 %v1001, %v1001
        %v1040 = vpack.c.bf16 %v954, %v905
        %v1041 = vpack.c.bf16 %v1003, %v1003
        %v1042 = vpack.c.bf16 %v957, %v908
        %v1043 = vpack.c.bf16 %v1006, %v1006
        %v1044 = vpack.c.bf16 %v959, %v910
        %v1045 = vpack.c.bf16 %v1008, %v1008
        %v1046 = vpack.c.bf16 %v962, %v913
        %v1047 = vpack.c.bf16 %v1011, %v1011
        %v1048 = vpack.c.bf16 %v964, %v915
        %v1049 = vpack.c.bf16 %v1013, %v1013
        %v1050 = vpack.c.bf16 %v967, %v918
        %v1051 = vpack.c.bf16 %v1016, %v1016
        %v1052 = vpack.c.bf16 %v969, %v920
        %v1053 = vpack.c.bf16 %v1018, %v1018
        %v1054 = vpack.c.bf16 %v972, %v923
        %v1055 = vpack.c.bf16 %v1021, %v1021
        %v1056 = vpack.c.bf16 %v974, %v925
        %v1057 = vpack.c.bf16 %v1023, %v1023
        %v1058 = vpack.c.bf16 %v977, %v928
        %v1059 = vpack.c.bf16 %v1026, %v1026
        %v1060 = vpack.c.bf16 %v979, %v930
        %v1061 = vpack.c.bf16 %v1028, %v1028
        %1062 = vst [vmem:[#allocation2] sm:$0xf] %v1030
        %1063 = vst [vmem:[#allocation2 + $0x4] sm:$0xf] %v1032
        %1064 = vst [vmem:[#allocation2 + $0x8] sm:$0xf] %v1034
        %1065 = vst [vmem:[#allocation2 + $0xc] sm:$0xf] %v1036
        %1066 = vst [vmem:[#allocation2 + $0x10] sm:$0xf] %v1038
        %1067 = vst [vmem:[#allocation2 + $0x14] sm:$0xf] %v1040
        %1068 = vst [vmem:[#allocation2 + $0x18] sm:$0xf] %v1042
        %1069 = vst [vmem:[#allocation2 + $0x1c] sm:$0xf] %v1044
        %1070 = vst [vmem:[#allocation2 + $0x20] sm:$0xf] %v1046
        %1071 = vst [vmem:[#allocation2 + $0x24] sm:$0xf] %v1048
        %1072 = vst [vmem:[#allocation2 + $0x28] sm:$0xf] %v1050
        %1073 = vst [vmem:[#allocation2 + $0x2c] sm:$0xf] %v1052
        %1074 = vst [vmem:[#allocation2 + $0x30] sm:$0xf] %v1054
        %1075 = vst [vmem:[#allocation2 + $0x34] sm:$0xf] %v1056
        %1076 = vst [vmem:[#allocation2 + $0x38] sm:$0xf] %v1058
        %1077 = vst [vmem:[#allocation2 + $0x3c] sm:$0xf] %v1060
        %v1078 = vld [vmem:[#allocation11] sm:$0xf]
        %v1079 = vld [vmem:[#allocation11 + $0x4] sm:$0xf]
        %v1080 = vld [vmem:[#allocation11 + $0x8] sm:$0xf]
        %v1081 = vld [vmem:[#allocation11 + $0xc] sm:$0xf]
        %v1082 = vld [vmem:[#allocation11 + $0x10] sm:$0xf]
        %v1083 = vld [vmem:[#allocation11 + $0x14] sm:$0xf]
        %v1084 = vld [vmem:[#allocation11 + $0x18] sm:$0xf]
        %v1085 = vld [vmem:[#allocation11 + $0x1c] sm:$0xf]
        %v1086 = vld [vmem:[#allocation11 + $0x20] sm:$0xf]
        %v1087 = vld [vmem:[#allocation11 + $0x24] sm:$0xf]
        %v1088 = vld [vmem:[#allocation11 + $0x28] sm:$0xf]
        %v1089 = vld [vmem:[#allocation11 + $0x2c] sm:$0xf]
        %v1090 = vld [vmem:[#allocation11 + $0x30] sm:$0xf]
        %v1091 = vld [vmem:[#allocation11 + $0x34] sm:$0xf]
        %v1092 = vld [vmem:[#allocation11 + $0x38] sm:$0xf]
        %v1093 = vld [vmem:[#allocation11 + $0x3c] sm:$0xf]
        %v1094 = vld [vmem:[%s7] sm:$0x1]
        %v1096 = vperm.slane %v1094, 0
        %v1098 = vld [vmem:[%s8] sm:$0x1]
        %v1100 = vperm.slane %v1098, 0
        %v1102 = vld [vmem:[#allocation2] sm:$0xf]
        %v1103 = vld [vmem:[#allocation2 + $0x4] sm:$0xf]
        %v1104 = vld [vmem:[#allocation2 + $0x8] sm:$0xf]
        %v1105 = vld [vmem:[#allocation2 + $0xc] sm:$0xf]
        %v1106 = vld [vmem:[#allocation2 + $0x10] sm:$0xf]
        %v1107 = vld [vmem:[#allocation2 + $0x14] sm:$0xf]
        %v1108 = vld [vmem:[#allocation2 + $0x18] sm:$0xf]
        %v1109 = vld [vmem:[#allocation2 + $0x1c] sm:$0xf]
        %v1110 = vld [vmem:[#allocation2 + $0x20] sm:$0xf]
        %v1111 = vld [vmem:[#allocation2 + $0x24] sm:$0xf]
        %v1112 = vld [vmem:[#allocation2 + $0x28] sm:$0xf]
        %v1113 = vld [vmem:[#allocation2 + $0x2c] sm:$0xf]
        %v1114 = vld [vmem:[#allocation2 + $0x30] sm:$0xf]
        %v1115 = vld [vmem:[#allocation2 + $0x34] sm:$0xf]
        %v1116 = vld [vmem:[#allocation2 + $0x38] sm:$0xf]
        %v1117 = vld [vmem:[#allocation2 + $0x3c] sm:$0xf]
        %v1134 = vrot.slane %v1030, 4
        %v1135 = vrot.slane %v1032, 4
        %v1136 = vrot.slane %v1034, 4
        %v1137 = vrot.slane %v1036, 4
        %v1138 = vrot.slane %v1038, 4
        %v1139 = vrot.slane %v1040, 4
        %v1140 = vrot.slane %v1042, 4
        %v1141 = vrot.slane %v1044, 4
        %v1142 = vrot.slane %v1046, 4
        %v1143 = vrot.slane %v1048, 4
        %v1144 = vrot.slane %v1050, 4
        %v1145 = vrot.slane %v1052, 4
        %v1146 = vrot.slane %v1054, 4
        %v1147 = vrot.slane %v1056, 4
        %v1148 = vrot.slane %v1058, 4
        %v1149 = vrot.slane %v1060, 4
        %v1166 = vunpack.c.l.b16 %v1102
        %v1167 = vunpack.c.l.b16 %v1103
        %v1168 = vunpack.c.l.b16 %v1104
        %v1169 = vunpack.c.l.b16 %v1105
        %v1170 = vunpack.c.l.b16 %v1106
        %v1171 = vunpack.c.l.b16 %v1107
        %v1172 = vunpack.c.l.b16 %v1108
        %v1173 = vunpack.c.l.b16 %v1109
        %v1174 = vunpack.c.l.b16 %v1110
        %v1175 = vunpack.c.l.b16 %v1111
        %v1176 = vunpack.c.l.b16 %v1112
        %v1177 = vunpack.c.l.b16 %v1113
        %v1178 = vunpack.c.l.b16 %v1114
        %v1179 = vunpack.c.l.b16 %v1115
        %v1180 = vunpack.c.l.b16 %v1116
        %v1181 = vunpack.c.l.b16 %v1117
        %v1182 = vpack.c.b16 %v1167, %v1166
        %v1183 = vpack.c.b16 %v1169, %v1168
        %v1184 = vpack.c.b16 %v1171, %v1170
        %v1185 = vpack.c.b16 %v1173, %v1172
        %v1186 = vpack.c.b16 %v1175, %v1174
        %v1187 = vpack.c.b16 %v1177, %v1176
        %v1188 = vpack.c.b16 %v1179, %v1178
        %v1189 = vpack.c.b16 %v1181, %v1180
        %v1198 = vunpack.c.l.b16 %v1134
        %v1199 = vunpack.c.l.b16 %v1135
        %v1200 = vunpack.c.l.b16 %v1136
        %v1201 = vunpack.c.l.b16 %v1137
        %v1202 = vunpack.c.l.b16 %v1138
        %v1203 = vunpack.c.l.b16 %v1139
        %v1204 = vunpack.c.l.b16 %v1140
        %v1205 = vunpack.c.l.b16 %v1141
        %v1206 = vunpack.c.l.b16 %v1142
        %v1207 = vunpack.c.l.b16 %v1143
        %v1208 = vunpack.c.l.b16 %v1144
        %v1209 = vunpack.c.l.b16 %v1145
        %v1210 = vunpack.c.l.b16 %v1146
        %v1211 = vunpack.c.l.b16 %v1147
        %v1212 = vunpack.c.l.b16 %v1148
        %v1213 = vunpack.c.l.b16 %v1149
        %v1214 = vpack.c.b16 %v1199, %v1198
        %v1215 = vpack.c.b16 %v1201, %v1200
        %v1216 = vpack.c.b16 %v1203, %v1202
        %v1217 = vpack.c.b16 %v1205, %v1204
        %v1218 = vpack.c.b16 %v1207, %v1206
        %v1219 = vpack.c.b16 %v1209, %v1208
        %v1220 = vpack.c.b16 %v1211, %v1210
        %v1221 = vpack.c.b16 %v1213, %v1212
        %1230 = vmatpush.bf16.xpose.msra.mxu0 %v1221
        %1231 = vmatpush.bf16.xpose.msra.mxu0 %v1220
        %1232 = vmatpush.bf16.xpose.msra.mxu0 %v1219
        %1233 = vmatpush.bf16.xpose.msra.mxu0 %v1218
        %1234 = vmatpush.bf16.xpose.msra.mxu0 %v1217
        %1235 = vmatpush.bf16.xpose.msra.mxu0 %v1216
        %1236 = vmatpush.bf16.xpose.msra.mxu0 %v1215
        %1237 = vmatpush.bf16.xpose.msra.mxu0 %v1214
        %1238 = vmatmul.bf16.gmra.mxu0 %v1182
        %v1239 = vpop.f32.mrf.mxu0
        %v1240 = vadd.f32 %v1100, %v1239
        %v1241 = vpop.f32.mrf.mxu0
        %v1242 = vadd.f32 %v1100, %v1241
        %1243 = vmatmul.bf16.gmra.mxu0 %v1183
        %v1244 = vpop.f32.mrf.mxu0
        %v1245 = vadd.f32 %v1100, %v1244
        %v1246 = vpop.f32.mrf.mxu0
        %v1247 = vadd.f32 %v1100, %v1246
        %1248 = vmatmul.bf16.gmra.mxu0 %v1184
        %v1249 = vpop.f32.mrf.mxu0
        %v1250 = vadd.f32 %v1100, %v1249
        %v1251 = vpop.f32.mrf.mxu0
        %v1252 = vadd.f32 %v1100, %v1251
        %1253 = vmatmul.bf16.gmra.mxu0 %v1185
        %v1254 = vpop.f32.mrf.mxu0
        %v1255 = vadd.f32 %v1100, %v1254
        %v1256 = vpop.f32.mrf.mxu0
        %v1257 = vadd.f32 %v1100, %v1256
        %1258 = vmatmul.bf16.gmra.mxu0 %v1186
        %v1259 = vpop.f32.mrf.mxu0
        %v1260 = vadd.f32 %v1100, %v1259
        %v1261 = vpop.f32.mrf.mxu0
        %v1262 = vadd.f32 %v1100, %v1261
        %1263 = vmatmul.bf16.gmra.mxu0 %v1187
        %v1264 = vpop.f32.mrf.mxu0
        %v1265 = vadd.f32 %v1100, %v1264
        %v1266 = vpop.f32.mrf.mxu0
        %v1267 = vadd.f32 %v1100, %v1266
        %1268 = vmatmul.bf16.gmra.mxu0 %v1188
        %v1269 = vpop.f32.mrf.mxu0
        %v1270 = vadd.f32 %v1100, %v1269
        %v1271 = vpop.f32.mrf.mxu0
        %v1272 = vadd.f32 %v1100, %v1271
        %1273 = vmatmul.bf16.gmra.mxu0 %v1189
        %v1274 = vpop.f32.mrf.mxu0
        %v1275 = vadd.f32 %v1100, %v1274
        %v1276 = vpop.f32.mrf.mxu0
        %v1277 = vadd.f32 %v1100, %v1276
        %1278 = vdwg.mxu0
        %1279 = vmax.xlane.f32.xlu0 %v1240
        %v1280 = vpop.xlane.xlu0 %1279
        %1281 = vmax.xlane.f32.xlu0 %v1242
        %v1282 = vpop.xlane.xlu0 %1281
        %1283 = vmax.xlane.f32.xlu0 %v1245
        %v1284 = vpop.xlane.xlu0 %1283
        %1285 = vmax.xlane.f32.xlu0 %v1247
        %v1286 = vpop.xlane.xlu0 %1285
        %1287 = vmax.xlane.f32.xlu0 %v1250
        %v1288 = vpop.xlane.xlu0 %1287
        %1289 = vmax.xlane.f32.xlu0 %v1252
        %v1290 = vpop.xlane.xlu0 %1289
        %1291 = vmax.xlane.f32.xlu0 %v1255
        %v1292 = vpop.xlane.xlu0 %1291
        %1293 = vmax.xlane.f32.xlu0 %v1257
        %v1294 = vpop.xlane.xlu0 %1293
        %1295 = vmax.xlane.f32.xlu0 %v1260
        %v1296 = vpop.xlane.xlu0 %1295
        %1297 = vmax.xlane.f32.xlu0 %v1262
        %v1298 = vpop.xlane.xlu0 %1297
        %1299 = vmax.xlane.f32.xlu0 %v1265
        %v1300 = vpop.xlane.xlu0 %1299
        %1301 = vmax.xlane.f32.xlu0 %v1267
        %v1302 = vpop.xlane.xlu0 %1301
        %1303 = vmax.xlane.f32.xlu0 %v1270
        %v1304 = vpop.xlane.xlu0 %1303
        %1305 = vmax.xlane.f32.xlu0 %v1272
        %v1306 = vpop.xlane.xlu0 %1305
        %1307 = vmax.xlane.f32.xlu0 %v1275
        %v1308 = vpop.xlane.xlu0 %1307
        %1309 = vmax.xlane.f32.xlu0 %v1277
        %v1310 = vpop.xlane.xlu0 %1309
        %v1311 = vsub.f32 %v1240, %v1280
        %v1312 = vsub.f32 %v1242, %v1282
        %v1313 = vsub.f32 %v1245, %v1284
        %v1314 = vsub.f32 %v1247, %v1286
        %v1315 = vsub.f32 %v1250, %v1288
        %v1316 = vsub.f32 %v1252, %v1290
        %v1317 = vsub.f32 %v1255, %v1292
        %v1318 = vsub.f32 %v1257, %v1294
        %v1319 = vsub.f32 %v1260, %v1296
        %v1320 = vsub.f32 %v1262, %v1298
        %v1321 = vsub.f32 %v1265, %v1300
        %v1322 = vsub.f32 %v1267, %v1302
        %v1323 = vsub.f32 %v1270, %v1304
        %v1324 = vsub.f32 %v1272, %v1306
        %v1325 = vsub.f32 %v1275, %v1308
        %v1326 = vsub.f32 %v1277, %v1310
        %v1327 = vmul.f32 %v1311, 1.442695
        %v1328 = vpow.pop %v1327
        %v1329 = vmul.f32 %v1312, 1.442695
        %v1330 = vpow.pop %v1329
        %v1331 = vmul.f32 %v1313, 1.442695
        %v1332 = vpow.pop %v1331
        %v1333 = vmul.f32 %v1314, 1.442695
        %v1334 = vpow.pop %v1333
        %v1335 = vmul.f32 %v1315, 1.442695
        %v1336 = vpow.pop %v1335
        %v1337 = vmul.f32 %v1316, 1.442695
        %v1338 = vpow.pop %v1337
        %v1339 = vmul.f32 %v1317, 1.442695
        %v1340 = vpow.pop %v1339
        %v1341 = vmul.f32 %v1318, 1.442695
        %v1342 = vpow.pop %v1341
        %v1343 = vmul.f32 %v1319, 1.442695
        %v1344 = vpow.pop %v1343
        %v1345 = vmul.f32 %v1320, 1.442695
        %v1346 = vpow.pop %v1345
        %v1347 = vmul.f32 %v1321, 1.442695
        %v1348 = vpow.pop %v1347
        %v1349 = vmul.f32 %v1322, 1.442695
        %v1350 = vpow.pop %v1349
        %v1351 = vmul.f32 %v1323, 1.442695
        %v1352 = vpow.pop %v1351
        %v1353 = vmul.f32 %v1324, 1.442695
        %v1354 = vpow.pop %v1353
        %v1355 = vmul.f32 %v1325, 1.442695
        %v1356 = vpow.pop %v1355
        %v1357 = vmul.f32 %v1326, 1.442695
        %v1358 = vpow.pop %v1357
        %1359 = vadd.xlane.f32.xlu0 %v1328
        %v1360 = vpop.xlane.xlu0 %1359
        %1361 = vadd.xlane.f32.xlu0 %v1330
        %v1362 = vpop.xlane.xlu0 %1361
        %1363 = vadd.xlane.f32.xlu0 %v1332
        %v1364 = vpop.xlane.xlu0 %1363
        %1365 = vadd.xlane.f32.xlu0 %v1334
        %v1366 = vpop.xlane.xlu0 %1365
        %1367 = vadd.xlane.f32.xlu0 %v1336
        %v1368 = vpop.xlane.xlu0 %1367
        %1369 = vadd.xlane.f32.xlu0 %v1338
        %v1370 = vpop.xlane.xlu0 %1369
        %1371 = vadd.xlane.f32.xlu0 %v1340
        %v1372 = vpop.xlane.xlu0 %1371
        %1373 = vadd.xlane.f32.xlu0 %v1342
        %v1374 = vpop.xlane.xlu0 %1373
        %1375 = vadd.xlane.f32.xlu0 %v1344
        %v1376 = vpop.xlane.xlu0 %1375
        %1377 = vadd.xlane.f32.xlu0 %v1346
        %v1378 = vpop.xlane.xlu0 %1377
        %1379 = vadd.xlane.f32.xlu0 %v1348
        %v1380 = vpop.xlane.xlu0 %1379
        %1381 = vadd.xlane.f32.xlu0 %v1350
        %v1382 = vpop.xlane.xlu0 %1381
        %1383 = vadd.xlane.f32.xlu0 %v1352
        %v1384 = vpop.xlane.xlu0 %1383
        %1385 = vadd.xlane.f32.xlu0 %v1354
        %v1386 = vpop.xlane.xlu0 %1385
        %1387 = vadd.xlane.f32.xlu0 %v1356
        %v1388 = vpop.xlane.xlu0 %1387
        %1389 = vadd.xlane.f32.xlu0 %v1358
        %v1390 = vpop.xlane.xlu0 %1389
        %v1391 = vpack.c.bf16 %v1328, %v1328
        %v1392 = vpack.c.bf16 %v1330, %v1330
        %v1393 = vpack.c.bf16 %v1332, %v1332
        %v1394 = vpack.c.bf16 %v1334, %v1334
        %v1395 = vpack.c.bf16 %v1336, %v1336
        %v1396 = vpack.c.bf16 %v1338, %v1338
        %v1397 = vpack.c.bf16 %v1340, %v1340
        %v1398 = vpack.c.bf16 %v1342, %v1342
        %v1399 = vpack.c.bf16 %v1344, %v1344
        %v1400 = vpack.c.bf16 %v1346, %v1346
        %v1401 = vpack.c.bf16 %v1348, %v1348
        %v1402 = vpack.c.bf16 %v1350, %v1350
        %v1403 = vpack.c.bf16 %v1352, %v1352
        %v1404 = vpack.c.bf16 %v1354, %v1354
        %v1405 = vpack.c.bf16 %v1356, %v1356
        %v1406 = vpack.c.bf16 %v1358, %v1358
        %v1423 = vunpack.c.l.b16 %v1391
        %v1424 = vunpack.c.l.b16 %v1392
        %v1425 = vunpack.c.l.b16 %v1393
        %v1426 = vunpack.c.l.b16 %v1394
        %v1427 = vunpack.c.l.b16 %v1395
        %v1428 = vunpack.c.l.b16 %v1396
        %v1429 = vunpack.c.l.b16 %v1397
        %v1430 = vunpack.c.l.b16 %v1398
        %v1431 = vunpack.c.l.b16 %v1399
        %v1432 = vunpack.c.l.b16 %v1400
        %v1433 = vunpack.c.l.b16 %v1401
        %v1434 = vunpack.c.l.b16 %v1402
        %v1435 = vunpack.c.l.b16 %v1403
        %v1436 = vunpack.c.l.b16 %v1404
        %v1437 = vunpack.c.l.b16 %v1405
        %v1438 = vunpack.c.l.b16 %v1406
        %v1439 = vpack.c.b16 %v1424, %v1423
        %v1440 = vpack.c.b16 %v1426, %v1425
        %v1441 = vpack.c.b16 %v1428, %v1427
        %v1442 = vpack.c.b16 %v1430, %v1429
        %v1443 = vpack.c.b16 %v1432, %v1431
        %v1444 = vpack.c.b16 %v1434, %v1433
        %v1445 = vpack.c.b16 %v1436, %v1435
        %v1446 = vpack.c.b16 %v1438, %v1437
        %v1471 = vunpack.c.l.b16 %v1031
        %v1472 = vunpack.c.l.b16 %v1033
        %v1473 = vunpack.c.l.b16 %v1035
        %v1474 = vunpack.c.l.b16 %v1037
        %v1475 = vunpack.c.l.b16 %v1039
        %v1476 = vunpack.c.l.b16 %v1041
        %v1477 = vunpack.c.l.b16 %v1043
        %v1478 = vunpack.c.l.b16 %v1045
        %v1479 = vunpack.c.l.b16 %v1047
        %v1480 = vunpack.c.l.b16 %v1049
        %v1481 = vunpack.c.l.b16 %v1051
        %v1482 = vunpack.c.l.b16 %v1053
        %v1483 = vunpack.c.l.b16 %v1055
        %v1484 = vunpack.c.l.b16 %v1057
        %v1485 = vunpack.c.l.b16 %v1059
        %v1486 = vunpack.c.l.b16 %v1061
        %v1487 = vpack.c.b16 %v1472, %v1471
        %v1488 = vpack.c.b16 %v1474, %v1473
        %v1489 = vpack.c.b16 %v1476, %v1475
        %v1490 = vpack.c.b16 %v1478, %v1477
        %v1491 = vpack.c.b16 %v1480, %v1479
        %v1492 = vpack.c.b16 %v1482, %v1481
        %v1493 = vpack.c.b16 %v1484, %v1483
        %v1494 = vpack.c.b16 %v1486, %v1485
        %1503 = vmatpush.bf16.msra.mxu0 %v1494
        %1504 = vmatpush.bf16.msra.mxu0 %v1493
        %1505 = vmatpush.bf16.msra.mxu0 %v1492
        %1506 = vmatpush.bf16.msra.mxu0 %v1491
        %1507 = vmatpush.bf16.msra.mxu0 %v1490
        %1508 = vmatpush.bf16.msra.mxu0 %v1489
        %1509 = vmatpush.bf16.msra.mxu0 %v1488
        %1510 = vmatpush.bf16.msra.mxu0 %v1487
        %1511 = vmatmul.bf16.gmra.mxu0 %v1439
        %v1512 = vpop.f32.mrf.mxu0
        %v1513 = vadd.f32 0.0, %v1512
        %v1514 = vpop.f32.mrf.mxu0
        %v1515 = vadd.f32 0.0, %v1514
        %1516 = vmatmul.bf16.gmra.mxu0 %v1440
        %v1517 = vpop.f32.mrf.mxu0
        %v1518 = vadd.f32 0.0, %v1517
        %v1519 = vpop.f32.mrf.mxu0
        %v1520 = vadd.f32 0.0, %v1519
        %1521 = vmatmul.bf16.gmra.mxu0 %v1441
        %v1522 = vpop.f32.mrf.mxu0
        %v1523 = vadd.f32 0.0, %v1522
        %v1524 = vpop.f32.mrf.mxu0
        %v1525 = vadd.f32 0.0, %v1524
        %1526 = vmatmul.bf16.gmra.mxu0 %v1442
        %v1527 = vpop.f32.mrf.mxu0
        %v1528 = vadd.f32 0.0, %v1527
        %v1529 = vpop.f32.mrf.mxu0
        %v1530 = vadd.f32 0.0, %v1529
        %1531 = vmatmul.bf16.gmra.mxu0 %v1443
        %v1532 = vpop.f32.mrf.mxu0
        %v1533 = vadd.f32 0.0, %v1532
        %v1534 = vpop.f32.mrf.mxu0
        %v1535 = vadd.f32 0.0, %v1534
        %1536 = vmatmul.bf16.gmra.mxu0 %v1444
        %v1537 = vpop.f32.mrf.mxu0
        %v1538 = vadd.f32 0.0, %v1537
        %v1539 = vpop.f32.mrf.mxu0
        %v1540 = vadd.f32 0.0, %v1539
        %1541 = vmatmul.bf16.gmra.mxu0 %v1445
        %v1542 = vpop.f32.mrf.mxu0
        %v1543 = vadd.f32 0.0, %v1542
        %v1544 = vpop.f32.mrf.mxu0
        %v1545 = vadd.f32 0.0, %v1544
        %1546 = vmatmul.bf16.gmra.mxu0 %v1446
        %v1547 = vpop.f32.mrf.mxu0
        %v1548 = vadd.f32 0.0, %v1547
        %v1549 = vpop.f32.mrf.mxu0
        %v1550 = vadd.f32 0.0, %v1549
        %1551 = vdwg.mxu0
        %v1552 = vrcp.pop %v1360
        %v1553 = vrcp.pop %v1362
        %v1554 = vrcp.pop %v1364
        %v1555 = vrcp.pop %v1366
        %v1556 = vrcp.pop %v1368
        %v1557 = vrcp.pop %v1370
        %v1558 = vrcp.pop %v1372
        %v1559 = vrcp.pop %v1374
        %v1560 = vrcp.pop %v1376
        %v1561 = vrcp.pop %v1378
        %v1562 = vrcp.pop %v1380
        %v1563 = vrcp.pop %v1382
        %v1564 = vrcp.pop %v1384
        %v1565 = vrcp.pop %v1386
        %v1566 = vrcp.pop %v1388
        %v1567 = vrcp.pop %v1390
        %v1568 = vmul.f32 %v1513, %v1552
        %v1569 = vmul.f32 %v1515, %v1553
        %v1570 = vmul.f32 %v1518, %v1554
        %v1571 = vmul.f32 %v1520, %v1555
        %v1572 = vmul.f32 %v1523, %v1556
        %v1573 = vmul.f32 %v1525, %v1557
        %v1574 = vmul.f32 %v1528, %v1558
        %v1575 = vmul.f32 %v1530, %v1559
        %v1576 = vmul.f32 %v1533, %v1560
        %v1577 = vmul.f32 %v1535, %v1561
        %v1578 = vmul.f32 %v1538, %v1562
        %v1579 = vmul.f32 %v1540, %v1563
        %v1580 = vmul.f32 %v1543, %v1564
        %v1581 = vmul.f32 %v1545, %v1565
        %v1582 = vmul.f32 %v1548, %v1566
        %v1583 = vmul.f32 %v1550, %v1567
        %v1584 = vpack.c.bf16 %v1569, %v1568
        %v1585 = vpack.c.bf16 %v1571, %v1570
        %v1586 = vpack.c.bf16 %v1573, %v1572
        %v1587 = vpack.c.bf16 %v1575, %v1574
        %v1588 = vpack.c.bf16 %v1577, %v1576
        %v1589 = vpack.c.bf16 %v1579, %v1578
        %v1590 = vpack.c.bf16 %v1581, %v1580
        %v1591 = vpack.c.bf16 %v1583, %v1582
        %v1608 = vunpack.c.l.b16 %v1078
        %v1609 = vunpack.c.l.b16 %v1079
        %v1610 = vunpack.c.l.b16 %v1080
        %v1611 = vunpack.c.l.b16 %v1081
        %v1612 = vunpack.c.l.b16 %v1082
        %v1613 = vunpack.c.l.b16 %v1083
        %v1614 = vunpack.c.l.b16 %v1084
        %v1615 = vunpack.c.l.b16 %v1085
        %v1616 = vunpack.c.l.b16 %v1086
        %v1617 = vunpack.c.l.b16 %v1087
        %v1618 = vunpack.c.l.b16 %v1088
        %v1619 = vunpack.c.l.b16 %v1089
        %v1620 = vunpack.c.l.b16 %v1090
        %v1621 = vunpack.c.l.b16 %v1091
        %v1622 = vunpack.c.l.b16 %v1092
        %v1623 = vunpack.c.l.b16 %v1093
        %v1624 = vpack.c.b16 %v1609, %v1608
        %v1625 = vpack.c.b16 %v1611, %v1610
        %v1626 = vpack.c.b16 %v1613, %v1612
        %v1627 = vpack.c.b16 %v1615, %v1614
        %v1628 = vpack.c.b16 %v1617, %v1616
        %v1629 = vpack.c.b16 %v1619, %v1618
        %v1630 = vpack.c.b16 %v1621, %v1620
        %v1631 = vpack.c.b16 %v1623, %v1622
        %1640 = vmatpush.bf16.msra.mxu0 %v1631
        %1641 = vmatpush.bf16.msra.mxu0 %v1630
        %1642 = vmatpush.bf16.msra.mxu0 %v1629
        %1643 = vmatpush.bf16.msra.mxu0 %v1628
        %1644 = vmatpush.bf16.msra.mxu0 %v1627
        %1645 = vmatpush.bf16.msra.mxu0 %v1626
        %1646 = vmatpush.bf16.msra.mxu0 %v1625
        %1647 = vmatpush.bf16.msra.mxu0 %v1624
        %1648 = vmatmul.bf16.gmra.mxu0 %v1584
        %v1649 = vpop.f32.mrf.mxu0
        %v1650 = vadd.f32 0.0, %v1649
        %v1651 = vpop.f32.mrf.mxu0
        %v1652 = vadd.f32 0.0, %v1651
        %1653 = vmatmul.bf16.gmra.mxu0 %v1585
        %v1654 = vpop.f32.mrf.mxu0
        %v1655 = vadd.f32 0.0, %v1654
        %v1656 = vpop.f32.mrf.mxu0
        %v1657 = vadd.f32 0.0, %v1656
        %1658 = vmatmul.bf16.gmra.mxu0 %v1586
        %v1659 = vpop.f32.mrf.mxu0
        %v1660 = vadd.f32 0.0, %v1659
        %v1661 = vpop.f32.mrf.mxu0
        %v1662 = vadd.f32 0.0, %v1661
        %1663 = vmatmul.bf16.gmra.mxu0 %v1587
        %v1664 = vpop.f32.mrf.mxu0
        %v1665 = vadd.f32 0.0, %v1664
        %v1666 = vpop.f32.mrf.mxu0
        %v1667 = vadd.f32 0.0, %v1666
        %1668 = vmatmul.bf16.gmra.mxu0 %v1588
        %v1669 = vpop.f32.mrf.mxu0
        %v1670 = vadd.f32 0.0, %v1669
        %v1671 = vpop.f32.mrf.mxu0
        %v1672 = vadd.f32 0.0, %v1671
        %1673 = vmatmul.bf16.gmra.mxu0 %v1589
        %v1674 = vpop.f32.mrf.mxu0
        %v1675 = vadd.f32 0.0, %v1674
        %v1676 = vpop.f32.mrf.mxu0
        %v1677 = vadd.f32 0.0, %v1676
        %1678 = vmatmul.bf16.gmra.mxu0 %v1590
        %v1679 = vpop.f32.mrf.mxu0
        %v1680 = vadd.f32 0.0, %v1679
        %v1681 = vpop.f32.mrf.mxu0
        %v1682 = vadd.f32 0.0, %v1681
        %1683 = vmatmul.bf16.gmra.mxu0 %v1591
        %v1684 = vpop.f32.mrf.mxu0
        %v1685 = vadd.f32 0.0, %v1684
        %v1686 = vpop.f32.mrf.mxu0
        %v1687 = vadd.f32 0.0, %v1686
        %1688 = vdwg.mxu0
        %v1689 = vld [vmem:[%s363] sm:$0xff]
        %v1690 = vld [vmem:[%s363 + $0x8] sm:$0xff]
        %v1691 = vld [vmem:[%s363 + $0x10] sm:$0xff]
        %v1692 = vld [vmem:[%s363 + $0x18] sm:$0xff]
        %v1693 = vld [vmem:[%s363 + $0x20] sm:$0xff]
        %v1694 = vld [vmem:[%s363 + $0x28] sm:$0xff]
        %v1695 = vld [vmem:[%s363 + $0x30] sm:$0xff]
        %v1696 = vld [vmem:[%s363 + $0x38] sm:$0xff]
        %v1697 = vld [vmem:[%s363 + $0x40] sm:$0xff]
        %v1698 = vld [vmem:[%s363 + $0x48] sm:$0xff]
        %v1699 = vld [vmem:[%s363 + $0x50] sm:$0xff]
        %v1700 = vld [vmem:[%s363 + $0x58] sm:$0xff]
        %v1701 = vld [vmem:[%s363 + $0x60] sm:$0xff]
        %v1702 = vld [vmem:[%s363 + $0x68] sm:$0xff]
        %v1703 = vld [vmem:[%s363 + $0x70] sm:$0xff]
        %v1704 = vld [vmem:[%s363 + $0x78] sm:$0xff]
        %v1705 = vadd.f32 %v1650, %v1096
        %v1706 = vadd.f32 %v1652, %v1096
        %v1707 = vadd.f32 %v1655, %v1096
        %v1708 = vadd.f32 %v1657, %v1096
        %v1709 = vadd.f32 %v1660, %v1096
        %v1710 = vadd.f32 %v1662, %v1096
        %v1711 = vadd.f32 %v1665, %v1096
        %v1712 = vadd.f32 %v1667, %v1096
        %v1713 = vadd.f32 %v1670, %v1096
        %v1714 = vadd.f32 %v1672, %v1096
        %v1715 = vadd.f32 %v1675, %v1096
        %v1716 = vadd.f32 %v1677, %v1096
        %v1717 = vadd.f32 %v1680, %v1096
        %v1718 = vadd.f32 %v1682, %v1096
        %v1719 = vadd.f32 %v1685, %v1096
        %v1720 = vadd.f32 %v1687, %v1096
        %v1721 = vadd.f32 %v1705, %v1689
        %v1722 = vadd.f32 %v1706, %v1690
        %v1723 = vadd.f32 %v1707, %v1691
        %v1724 = vadd.f32 %v1708, %v1692
        %v1725 = vadd.f32 %v1709, %v1693
        %v1726 = vadd.f32 %v1710, %v1694
        %v1727 = vadd.f32 %v1711, %v1695
        %v1728 = vadd.f32 %v1712, %v1696
        %v1729 = vadd.f32 %v1713, %v1697
        %v1730 = vadd.f32 %v1714, %v1698
        %v1731 = vadd.f32 %v1715, %v1699
        %v1732 = vadd.f32 %v1716, %v1700
        %v1733 = vadd.f32 %v1717, %v1701
        %v1734 = vadd.f32 %v1718, %v1702
        %v1735 = vadd.f32 %v1719, %v1703
        %v1736 = vadd.f32 %v1720, %v1704
        %1737 = vst [vmem:[%s418] sm:$0xff] %v1721
        %1738 = vst [vmem:[%s418 + $0x8] sm:$0xff] %v1722
        %1739 = vst [vmem:[%s418 + $0x10] sm:$0xff] %v1723
        %1740 = vst [vmem:[%s418 + $0x18] sm:$0xff] %v1724
        %1741 = vst [vmem:[%s418 + $0x20] sm:$0xff] %v1725
        %1742 = vst [vmem:[%s418 + $0x28] sm:$0xff] %v1726
        %1743 = vst [vmem:[%s418 + $0x30] sm:$0xff] %v1727
        %1744 = vst [vmem:[%s418 + $0x38] sm:$0xff] %v1728
        %1745 = vst [vmem:[%s418 + $0x40] sm:$0xff] %v1729
        %1746 = vst [vmem:[%s418 + $0x48] sm:$0xff] %v1730
        %1747 = vst [vmem:[%s418 + $0x50] sm:$0xff] %v1731
        %1748 = vst [vmem:[%s418 + $0x58] sm:$0xff] %v1732
        %1749 = vst [vmem:[%s418 + $0x60] sm:$0xff] %v1733
        %1750 = vst [vmem:[%s418 + $0x68] sm:$0xff] %v1734
        %1751 = vst [vmem:[%s418 + $0x70] sm:$0xff] %v1735
        %1752 = vst [vmem:[%s418 + $0x78] sm:$0xff] %v1736
        %s1753 = sand.u32 %s230, 1
        %s1754 = scalar_lea.sflag [#allocation5], %s1753
        %s1755 = sand.u32 %s230, 1
        %s1756 = smul.addr %s1755, 128
        %s1757 = scalar_lea.vmem [#allocation12], %s1756
        // Predicated region
        $region77: #{tpu_custom_call.1} parent=55 // pred_check
          %p1758 = pneg %p240
        $region78: #{tpu_custom_call.1} parent=55 // pred_check_branch
          %1760 = sbr.rel (%p1758) target = $region80
        $region79: #{tpu_custom_call.1} parent=55 // pred_region
          %1762 = vsyncadd %s1754, 0
          %s1763 = smul.addr %s28, 16
          %s1764 = smul.addr %s1763, 8
          %s1765 = scalar_lea.hbm %s9, %s1764
          %s1766 = sshll.u32 %s1757, 4
          %s1767 = int_to_ptr.vmem [resolvable:$true] %s1766
          %s1768 = sshll.u32 %s1765, 4
          %s1769 = int_to_ptr.hbm [resolvable:$true] %s1768
          %1774 = dma.vmem_to_hbm [thread:$0]  %s1767, 2048, %s1769, %s1754, 128, 128, 8
        $region80: #{tpu_custom_call.1} parent=55 // pred_fallthru
          _
      $region56: #{tpu_custom_call.1} parent=5 // pred_fallthru
        _
      %p1775 = scmp.le.s32.totalorder 2, %s23
      // Predicated region
      $region81: #{tpu_custom_call.1} parent=5 // pred_check
        %p1776 = pneg %p1775
      $region82: #{tpu_custom_call.1} parent=5 // pred_check_branch
        %1778 = sbr.rel (%p1776) target = $region84
      $region83: #{tpu_custom_call.1} parent=5 // pred_region
        %s1779 = ssub.s32 %s23, 2
        // Predicated region
        $region85: #{tpu_custom_call.1} parent=83 // pred_check
          %p1780 = pneg %p246
        $region86: #{tpu_custom_call.1} parent=83 // pred_check_branch
          %1782 = sbr.rel (%p1780) target = $region88
        $region87: #{tpu_custom_call.1} parent=83 // pred_region
          %s1783 = sand.u32 %s231, 1
          %s1784 = scalar_lea.sflag [#allocation5], %s1783
          %s1785 = sand.u32 %s231, 1
          %s1786 = smul.addr %s1785, 128
          %s1787 = scalar_lea.vmem [#allocation12], %s1786
          %1789 = dma.done %s1784, 2048
        $region88: #{tpu_custom_call.1} parent=83 // pred_fallthru
          _
      $region84: #{tpu_custom_call.1} parent=5 // pred_fallthru
        _
    $region6: #{tpu_custom_call.1} parent=1 // loop_footer
      %s27 = sadd.s32 1, %s23
    $region7: #{tpu_custom_call.1} parent=1 // loop_footer_branch
      %22 = sbr.rel target = $region3
    $region8: #{tpu_custom_call.1} parent=1 // loop_exit
      _
    %1790 = vsyncpa [#allocation4], 1
    %s1791 = scalar_lea.sflag [#allocation4], 1
    %1792 = vsyncpa %s1791, 1
    %1793 = vsyncpa [#allocation7], 1
    %1794 = vsyncpa [#allocation10], 1
    %1795 = vsyncpa [#allocation5], 1
    %s1796 = scalar_lea.sflag [#allocation5], 1
    %1797 = vsyncpa %s1796, 1

</llo_original>
